<compile_context>
chip_gen: v7x
topology: tpu7x:2x2x1
jax: 0.10.0
libtpu: 0.0.40
codegen_flags: <defaults>
</compile_context>

<pallas_src>
import jax
import jax.numpy as jnp
from jax.experimental import pallas as pl
from jax.experimental.pallas import tpu as pltpu


def decoder_kernel(x_ref, r_ref, h0_ref, c0_ref,
                   wih0x_ref, wih0r_ref, whh0_ref, b0_ref,
                   wih1_ref, whh1_ref, b1_ref,
                   wfc_ref, bfc_ref,
                   pred_ref, hn_ref, cn_ref):
    TB = x_ref.shape[0]
    B = h0_ref.shape[1]
    H = h0_ref.shape[2]
    T = TB // B

    # ---- hoisted layer-0 input projection for the whole sequence, kept in vregs ----
    # (T*B, 4H) = (16, 128) f32 -> 2 vregs; never touches VMEM scratch.
    g0_all = (jnp.dot(x_ref[...], wih0x_ref[...], preferred_element_type=jnp.float32)
              + jnp.dot(r_ref[...], wih0r_ref[...], preferred_element_type=jnp.float32)
              + b0_ref[...])

    whh0 = whh0_ref[...]                                   # (H, 4H)
    wih1 = wih1_ref[...]                                   # (H, 4H)
    whh1 = whh1_ref[...]                                   # (H, 4H)
    b1 = jnp.broadcast_to(b1_ref[...], (B, 4 * H))         # hoisted broadcast (once)

    h1 = h0_ref[0]
    c1 = c0_ref[0]
    h2 = h0_ref[1]
    c2 = c0_ref[1]

    h2_hist = []
    # T is static -> fully unrolled recurrence (scheduler sees across steps).
    for t in range(T):
        # ----- layer 1, h2_prev half: depends only on step t-1, issued off layer-0's chain -----
        g1 = jnp.dot(h2, whh1, preferred_element_type=jnp.float32) + b1

        # ----- layer 0: only the recurrent matmul is on the critical path -----
        g0 = g0_all[t * B:(t + 1) * B, :] + jnp.dot(h1, whh0,
                                                    preferred_element_type=jnp.float32)
        sg0 = jax.nn.sigmoid(g0)        # full (B, 4H) EUP pass
        th0 = jnp.tanh(g0)              # full (B, 4H) EUP pass
        c1 = sg0[:, H:2 * H] * c1 + sg0[:, 0:H] * th0[:, 2 * H:3 * H]
        h1 = sg0[:, 3 * H:4 * H] * jnp.tanh(c1)

        # ----- layer 1, h1-dependent half (no lane concat) -----
        g1 = g1 + jnp.dot(h1, wih1, preferred_element_type=jnp.float32)
        sg1 = jax.nn.sigmoid(g1)
        th1 = jnp.tanh(g1)
        c2 = sg1[:, H:2 * H] * c2 + sg1[:, 0:H] * th1[:, 2 * H:3 * H]
        h2 = sg1[:, 3 * H:4 * H] * jnp.tanh(c2)

        # stash h2 (register-resident) for the deferred FC projection
        h2_hist.append(h2)

    # ---- deferred FC: one concat (off critical path), one matmul, one store ----
    h2_all = jnp.concatenate(h2_hist, axis=0)              # (T*B, H), time-major
    pred_ref[...] = (jnp.dot(h2_all, wfc_ref[...], preferred_element_type=jnp.float32)
                     + bfc_ref[...]).astype(pred_ref.dtype)

    hn_ref[0] = h1
    hn_ref[1] = h2
    cn_ref[0] = c1
    cn_ref[1] = c2


def decoder_forward(x, rain_forecast, hidden, cell, params):
    """x: (B, T, O_sz), rain_forecast: (B, T, R_sz), hidden/cell: (2, B, H)."""
    B, T, _ = x.shape
    H = hidden.shape[-1]
    O = params["wfc"].shape[-1]

    # glue: no concat — each input is time-major flattened separately (half the materialized bytes)
    x_tm = jnp.transpose(x, (1, 0, 2)).reshape(T * B, -1)             # (T*B, O_sz)
    r_tm = jnp.transpose(rain_forecast, (1, 0, 2)).reshape(T * B, -1)  # (T*B, R_sz)

    vmem = pl.BlockSpec(memory_space=pltpu.MemorySpace.VMEM)

    pred2d, hn, cn = pl.pallas_call(
        decoder_kernel,
        out_shape=(
            jax.ShapeDtypeStruct((T * B, O), jnp.float32),
            jax.ShapeDtypeStruct((2, B, H), jnp.float32),
            jax.ShapeDtypeStruct((2, B, H), jnp.float32),
        ),
        in_specs=[vmem] * 13,
        out_specs=(vmem, vmem, vmem),
    )(x_tm, r_tm, hidden, cell,
      params["wih0x"], params["wih0r"], params["whh0"], params["b0"],
      params["wih1"], params["whh1"], params["b1"],
      params["wfc"], params["bfc"])

    prediction = jnp.transpose(pred2d.reshape(T, B, O), (1, 0, 2))    # (B, T, O)
    return prediction, hn, cn


def init_torch_params(key, output_size, hidden_size, rain_forecast_size):
    """PyTorch-shaped parameters (uniform +/- 1/sqrt(H)), gate order i,f,g,o."""
    I = output_size + rain_forecast_size
    H = hidden_size
    k = 1.0 / jnp.sqrt(jnp.float32(H))
    keys = jax.random.split(key, 10)

    def u(kk, shape):
        return jax.random.uniform(kk, shape, jnp.float32, -k, k)

    return {
        "w_ih0": u(keys[0], (4 * H, I)),
        "w_hh0": u(keys[1], (4 * H, H)),
        "b_ih0": u(keys[2], (4 * H,)),
        "b_hh0": u(keys[3], (4 * H,)),
        "w_ih1": u(keys[4], (4 * H, H)),
        "w_hh1": u(keys[5], (4 * H, H)),
        "b_ih1": u(keys[6], (4 * H,)),
        "b_hh1": u(keys[7], (4 * H,)),
        "w_fc":  u(keys[8], (output_size, H)),
        "b_fc":  u(keys[9], (output_size,)),
    }


def pack_params(tp, output_size):
    """Kernel layout: pre-transposed weights, W_ih0 split by input source, combined biases."""
    wih0 = tp["w_ih0"].T                                      # (I, 4H)
    return {
        "wih0x": wih0[:output_size, :],                       # (O_sz, 4H)
        "wih0r": wih0[output_size:, :],                       # (R_sz, 4H)
        "whh0":  tp["w_hh0"].T,                               # (H, 4H)
        "b0":    (tp["b_ih0"] + tp["b_hh0"])[None, :],        # (1, 4H)
        "wih1":  tp["w_ih1"].T,                               # (H, 4H)
        "whh1":  tp["w_hh1"].T,                               # (H, 4H)
        "b1":    (tp["b_ih1"] + tp["b_hh1"])[None, :],        # (1, 4H)
        "wfc":   tp["w_fc"].T,                                # (H, O)
        "bfc":   tp["b_fc"][None, :],                         # (1, O)
    }


def reference_decoder(x, rain_forecast, hidden, cell, tp):
    """Pure-JAX reference of the PyTorch forward (eval mode), PyTorch weight layout."""
    H = hidden.shape[-1]
    hp = jax.lax.Precision.HIGHEST
    inp = jnp.concatenate([x, rain_forecast], axis=2)   # (B, T, I)
    B, T, _ = inp.shape
    h1, c1 = hidden[0], cell[0]
    h2, c2 = hidden[1], cell[1]

    def cell_fn(xt, h, c, w_ih, w_hh, b_ih, b_hh):
        gates = (jnp.dot(xt, w_ih.T, precision=hp)
                 + jnp.dot(h, w_hh.T, precision=hp) + b_ih + b_hh)
        i = jax.nn.sigmoid(gates[:, 0:H])
        f = jax.nn.sigmoid(gates[:, H:2 * H])
        g = jnp.tanh(gates[:, 2 * H:3 * H])
        o = jax.nn.sigmoid(gates[:, 3 * H:4 * H])
        c_new = f * c + i * g
        return o * jnp.tanh(c_new), c_new

    preds = []
    for t in range(T):
        xt = inp[:, t, :]
        h1, c1 = cell_fn(xt, h1, c1, tp["w_ih0"], tp["w_hh0"], tp["b_ih0"], tp["b_hh0"])
        h2, c2 = cell_fn(h1, h2, c2, tp["w_ih1"], tp["w_hh1"], tp["b_ih1"], tp["b_hh1"])
        preds.append(jnp.dot(h2, tp["w_fc"].T, precision=hp) + tp["b_fc"])
    prediction = jnp.stack(preds, axis=1)               # (B, T, O)
    hn = jnp.stack([h1, h2], axis=0)
    cn = jnp.stack([c1, c2], axis=0)
    return prediction, hn, cn


if __name__ == "__main__":
    output_size = 8
    rain_forecast_size = 8
    hidden_size = 32
    num_layers = 2
    batch = 2
    seq = 8

    root = jax.random.PRNGKey(0)
    k_p, k_x, k_r, k_h, k_c = jax.random.split(root, 5)

    torch_params = init_torch_params(k_p, output_size, hidden_size, rain_forecast_size)
    params = pack_params(torch_params, output_size)

    x = jax.random.normal(k_x, (batch, seq, output_size), jnp.float32)
    rain = jax.random.normal(k_r, (batch, seq, rain_forecast_size), jnp.float32)
    hidden = jax.random.normal(k_h, (num_layers, batch, hidden_size), jnp.float32)
    cell = jax.random.normal(k_c, (num_layers, batch, hidden_size), jnp.float32)

    fwd = jax.jit(decoder_forward)
    pred, hn, cn = jax.block_until_ready(fwd(x, rain, hidden, cell, params))

    pred_ref, hn_ref, cn_ref = reference_decoder(x, rain, hidden, cell, torch_params)

    assert pred.shape == (batch, seq, output_size)
    assert hn.shape == (num_layers, batch, hidden_size)
    assert cn.shape == (num_layers, batch, hidden_size)
    assert jnp.allclose(pred, pred_ref, atol=1e-5, rtol=1e-5)
    assert jnp.allclose(hn, hn_ref, atol=1e-5, rtol=1e-5)
    assert jnp.allclose(cn, cn_ref, atol=1e-5, rtol=1e-5)

    print("KERNEL_OK")
</pallas_src>

<mosaic_0001>
module attributes {stable_mosaic.version = 11 : i64} {
  func.func @decoder_kernel(%arg0: memref<16x8xf32, #tpu.memory_space<vmem>>, %arg1: memref<16x8xf32, #tpu.memory_space<vmem>>, %arg2: memref<2x2x32xf32, #tpu.memory_space<vmem>>, %arg3: memref<2x2x32xf32, #tpu.memory_space<vmem>>, %arg4: memref<8x128xf32, #tpu.memory_space<vmem>>, %arg5: memref<8x128xf32, #tpu.memory_space<vmem>>, %arg6: memref<32x128xf32, #tpu.memory_space<vmem>>, %arg7: memref<1x128xf32, #tpu.memory_space<vmem>>, %arg8: memref<32x128xf32, #tpu.memory_space<vmem>>, %arg9: memref<32x128xf32, #tpu.memory_space<vmem>>, %arg10: memref<1x128xf32, #tpu.memory_space<vmem>>, %arg11: memref<32x8xf32, #tpu.memory_space<vmem>>, %arg12: memref<1x8xf32, #tpu.memory_space<vmem>>, %arg13: memref<16x8xf32, #tpu.memory_space<vmem>>, %arg14: memref<2x2x32xf32, #tpu.memory_space<vmem>>, %arg15: memref<2x2x32xf32, #tpu.memory_space<vmem>>) attributes {dimension_semantics = [], scalar_prefetch = 0 : i64, scratch_operands = 0 : i64, tpu.core_type = #tpu.core_type<tc>} {
    %c0 = arith.constant 0 : index
    %c0_0 = arith.constant 0 : index
    %0 = vector.load %arg0[%c0, %c0_0] : memref<16x8xf32, #tpu.memory_space<vmem>>, vector<16x8xf32>
    %c0_1 = arith.constant 0 : index
    %c0_2 = arith.constant 0 : index
    %1 = vector.load %arg4[%c0_1, %c0_2] : memref<8x128xf32, #tpu.memory_space<vmem>>, vector<8x128xf32>
    %cst = arith.constant dense<0.000000e+00> : vector<16x128xf32>
    %2 = tpu.matmul %0, %1, %cst {dimension_numbers = #tpu.dot_dimension_numbers<[1], [0], [0], [1], [0, 0, 1, 1], [], []>} : vector<16x8xf32>, vector<8x128xf32>, vector<16x128xf32> -> vector<16x128xf32>
    %c0_3 = arith.constant 0 : index
    %c0_4 = arith.constant 0 : index
    %3 = vector.load %arg1[%c0_3, %c0_4] : memref<16x8xf32, #tpu.memory_space<vmem>>, vector<16x8xf32>
    %c0_5 = arith.constant 0 : index
    %c0_6 = arith.constant 0 : index
    %4 = vector.load %arg5[%c0_5, %c0_6] : memref<8x128xf32, #tpu.memory_space<vmem>>, vector<8x128xf32>
    %cst_7 = arith.constant dense<0.000000e+00> : vector<16x128xf32>
    %5 = tpu.matmul %3, %4, %cst_7 {dimension_numbers = #tpu.dot_dimension_numbers<[1], [0], [0], [1], [0, 0, 1, 1], [], []>} : vector<16x8xf32>, vector<8x128xf32>, vector<16x128xf32> -> vector<16x128xf32>
    %6 = arith.addf %2, %5 : vector<16x128xf32>
    %c0_8 = arith.constant 0 : index
    %c0_9 = arith.constant 0 : index
    %7 = vector.load %arg7[%c0_8, %c0_9] : memref<1x128xf32, #tpu.memory_space<vmem>>, vector<1x128xf32>
    %8 = vector.broadcast %7 : vector<1x128xf32> to vector<16x128xf32>
    %9 = arith.addf %6, %8 : vector<16x128xf32>
    %c0_10 = arith.constant 0 : index
    %c0_11 = arith.constant 0 : index
    %10 = vector.load %arg6[%c0_10, %c0_11] : memref<32x128xf32, #tpu.memory_space<vmem>>, vector<32x128xf32>
    %c0_12 = arith.constant 0 : index
    %c0_13 = arith.constant 0 : index
    %11 = vector.load %arg8[%c0_12, %c0_13] : memref<32x128xf32, #tpu.memory_space<vmem>>, vector<32x128xf32>
    %c0_14 = arith.constant 0 : index
    %c0_15 = arith.constant 0 : index
    %12 = vector.load %arg9[%c0_14, %c0_15] : memref<32x128xf32, #tpu.memory_space<vmem>>, vector<32x128xf32>
    %c0_16 = arith.constant 0 : index
    %c0_17 = arith.constant 0 : index
    %13 = vector.load %arg10[%c0_16, %c0_17] : memref<1x128xf32, #tpu.memory_space<vmem>>, vector<1x128xf32>
    %14 = vector.shape_cast %13 : vector<1x128xf32> to vector<1x128xf32>
    %15 = vector.broadcast %14 : vector<1x128xf32> to vector<2x128xf32>
    %c0_18 = arith.constant 0 : index
    %c0_19 = arith.constant 0 : index
    %c0_20 = arith.constant 0 : index
    %16 = vector.load %arg2[%c0_18, %c0_19, %c0_20] : memref<2x2x32xf32, #tpu.memory_space<vmem>>, vector<1x2x32xf32>
    %17 = vector.shape_cast %16 : vector<1x2x32xf32> to vector<2x32xf32>
    %c0_21 = arith.constant 0 : index
    %c0_22 = arith.constant 0 : index
    %c0_23 = arith.constant 0 : index
    %18 = vector.load %arg3[%c0_21, %c0_22, %c0_23] : memref<2x2x32xf32, #tpu.memory_space<vmem>>, vector<1x2x32xf32>
    %19 = vector.shape_cast %18 : vector<1x2x32xf32> to vector<2x32xf32>
    %c1 = arith.constant 1 : index
    %c0_24 = arith.constant 0 : index
    %c0_25 = arith.constant 0 : index
    %20 = vector.load %arg2[%c1, %c0_24, %c0_25] : memref<2x2x32xf32, #tpu.memory_space<vmem>>, vector<1x2x32xf32>
    %21 = vector.shape_cast %20 : vector<1x2x32xf32> to vector<2x32xf32>
    %c1_26 = arith.constant 1 : index
    %c0_27 = arith.constant 0 : index
    %c0_28 = arith.constant 0 : index
    %22 = vector.load %arg3[%c1_26, %c0_27, %c0_28] : memref<2x2x32xf32, #tpu.memory_space<vmem>>, vector<1x2x32xf32>
    %23 = vector.shape_cast %22 : vector<1x2x32xf32> to vector<2x32xf32>
    %cst_29 = arith.constant dense<0.000000e+00> : vector<2x128xf32>
    %24 = tpu.matmul %21, %12, %cst_29 {dimension_numbers = #tpu.dot_dimension_numbers<[1], [0], [0], [1], [0, 0, 1, 1], [], []>} : vector<2x32xf32>, vector<32x128xf32>, vector<2x128xf32> -> vector<2x128xf32>
    %25 = arith.addf %24, %15 : vector<2x128xf32>
    %26 = vector.extract_strided_slice %9 {offsets = [0, 0], sizes = [2, 128], strides = [1, 1]} : vector<16x128xf32> to vector<2x128xf32>
    %cst_30 = arith.constant dense<0.000000e+00> : vector<2x128xf32>
    %27 = tpu.matmul %17, %10, %cst_30 {dimension_numbers = #tpu.dot_dimension_numbers<[1], [0], [0], [1], [0, 0, 1, 1], [], []>} : vector<2x32xf32>, vector<32x128xf32>, vector<2x128xf32> -> vector<2x128xf32>
    %28 = arith.addf %26, %27 : vector<2x128xf32>
    %29 = arith.negf %28 : vector<2x128xf32>
    %30 = math.exp %29 : vector<2x128xf32>
    %cst_31 = arith.constant 1.000000e+00 : f32
    %31 = vector.broadcast %cst_31 : f32 to vector<2x128xf32>
    %32 = arith.addf %31, %30 : vector<2x128xf32>
    %33 = arith.divf %31, %32 : vector<2x128xf32>
    %34 = math.tanh %28 : vector<2x128xf32>
    %35 = vector.extract_strided_slice %33 {offsets = [0, 32], sizes = [2, 32], strides = [1, 1]} : vector<2x128xf32> to vector<2x32xf32>
    %36 = arith.mulf %35, %19 : vector<2x32xf32>
    %37 = vector.extract_strided_slice %33 {offsets = [0, 0], sizes = [2, 32], strides = [1, 1]} : vector<2x128xf32> to vector<2x32xf32>
    %38 = vector.extract_strided_slice %34 {offsets = [0, 64], sizes = [2, 32], strides = [1, 1]} : vector<2x128xf32> to vector<2x32xf32>
    %39 = arith.mulf %37, %38 : vector<2x32xf32>
    %40 = arith.addf %36, %39 : vector<2x32xf32>
    %41 = vector.extract_strided_slice %33 {offsets = [0, 96], sizes = [2, 32], strides = [1, 1]} : vector<2x128xf32> to vector<2x32xf32>
    %42 = math.tanh %40 : vector<2x32xf32>
    %43 = arith.mulf %41, %42 : vector<2x32xf32>
    %cst_32 = arith.constant dense<0.000000e+00> : vector<2x128xf32>
    %44 = tpu.matmul %43, %11, %cst_32 {dimension_numbers = #tpu.dot_dimension_numbers<[1], [0], [0], [1], [0, 0, 1, 1], [], []>} : vector<2x32xf32>, vector<32x128xf32>, vector<2x128xf32> -> vector<2x128xf32>
    %45 = arith.addf %25, %44 : vector<2x128xf32>
    %46 = arith.negf %45 : vector<2x128xf32>
    %47 = math.exp %46 : vector<2x128xf32>
    %cst_33 = arith.constant 1.000000e+00 : f32
    %48 = vector.broadcast %cst_33 : f32 to vector<2x128xf32>
    %49 = arith.addf %48, %47 : vector<2x128xf32>
    %50 = arith.divf %48, %49 : vector<2x128xf32>
    %51 = math.tanh %45 : vector<2x128xf32>
    %52 = vector.extract_strided_slice %50 {offsets = [0, 32], sizes = [2, 32], strides = [1, 1]} : vector<2x128xf32> to vector<2x32xf32>
    %53 = arith.mulf %52, %23 : vector<2x32xf32>
    %54 = vector.extract_strided_slice %50 {offsets = [0, 0], sizes = [2, 32], strides = [1, 1]} : vector<2x128xf32> to vector<2x32xf32>
    %55 = vector.extract_strided_slice %51 {offsets = [0, 64], sizes = [2, 32], strides = [1, 1]} : vector<2x128xf32> to vector<2x32xf32>
    %56 = arith.mulf %54, %55 : vector<2x32xf32>
    %57 = arith.addf %53, %56 : vector<2x32xf32>
    %58 = vector.extract_strided_slice %50 {offsets = [0, 96], sizes = [2, 32], strides = [1, 1]} : vector<2x128xf32> to vector<2x32xf32>
    %59 = math.tanh %57 : vector<2x32xf32>
    %60 = arith.mulf %58, %59 : vector<2x32xf32>
    %cst_34 = arith.constant dense<0.000000e+00> : vector<2x128xf32>
    %61 = tpu.matmul %60, %12, %cst_34 {dimension_numbers = #tpu.dot_dimension_numbers<[1], [0], [0], [1], [0, 0, 1, 1], [], []>} : vector<2x32xf32>, vector<32x128xf32>, vector<2x128xf32> -> vector<2x128xf32>
    %62 = arith.addf %61, %15 : vector<2x128xf32>
    %63 = vector.extract_strided_slice %9 {offsets = [2, 0], sizes = [2, 128], strides = [1, 1]} : vector<16x128xf32> to vector<2x128xf32>
    %cst_35 = arith.constant dense<0.000000e+00> : vector<2x128xf32>
    %64 = tpu.matmul %43, %10, %cst_35 {dimension_numbers = #tpu.dot_dimension_numbers<[1], [0], [0], [1], [0, 0, 1, 1], [], []>} : vector<2x32xf32>, vector<32x128xf32>, vector<2x128xf32> -> vector<2x128xf32>
    %65 = arith.addf %63, %64 : vector<2x128xf32>
    %66 = arith.negf %65 : vector<2x128xf32>
    %67 = math.exp %66 : vector<2x128xf32>
    %cst_36 = arith.constant 1.000000e+00 : f32
    %68 = vector.broadcast %cst_36 : f32 to vector<2x128xf32>
    %69 = arith.addf %68, %67 : vector<2x128xf32>
    %70 = arith.divf %68, %69 : vector<2x128xf32>
    %71 = math.tanh %65 : vector<2x128xf32>
    %72 = vector.extract_strided_slice %70 {offsets = [0, 32], sizes = [2, 32], strides = [1, 1]} : vector<2x128xf32> to vector<2x32xf32>
    %73 = arith.mulf %72, %40 : vector<2x32xf32>
    %74 = vector.extract_strided_slice %70 {offsets = [0, 0], sizes = [2, 32], strides = [1, 1]} : vector<2x128xf32> to vector<2x32xf32>
    %75 = vector.extract_strided_slice %71 {offsets = [0, 64], sizes = [2, 32], strides = [1, 1]} : vector<2x128xf32> to vector<2x32xf32>
    %76 = arith.mulf %74, %75 : vector<2x32xf32>
    %77 = arith.addf %73, %76 : vector<2x32xf32>
    %78 = vector.extract_strided_slice %70 {offsets = [0, 96], sizes = [2, 32], strides = [1, 1]} : vector<2x128xf32> to vector<2x32xf32>
    %79 = math.tanh %77 : vector<2x32xf32>
    %80 = arith.mulf %78, %79 : vector<2x32xf32>
    %cst_37 = arith.constant dense<0.000000e+00> : vector<2x128xf32>
    %81 = tpu.matmul %80, %11, %cst_37 {dimension_numbers = #tpu.dot_dimension_numbers<[1], [0], [0], [1], [0, 0, 1, 1], [], []>} : vector<2x32xf32>, vector<32x128xf32>, vector<2x128xf32> -> vector<2x128xf32>
    %82 = arith.addf %62, %81 : vector<2x128xf32>
    %83 = arith.negf %82 : vector<2x128xf32>
    %84 = math.exp %83 : vector<2x128xf32>
    %cst_38 = arith.constant 1.000000e+00 : f32
    %85 = vector.broadcast %cst_38 : f32 to vector<2x128xf32>
    %86 = arith.addf %85, %84 : vector<2x128xf32>
    %87 = arith.divf %85, %86 : vector<2x128xf32>
    %88 = math.tanh %82 : vector<2x128xf32>
    %89 = vector.extract_strided_slice %87 {offsets = [0, 32], sizes = [2, 32], strides = [1, 1]} : vector<2x128xf32> to vector<2x32xf32>
    %90 = arith.mulf %89, %57 : vector<2x32xf32>
    %91 = vector.extract_strided_slice %87 {offsets = [0, 0], sizes = [2, 32], strides = [1, 1]} : vector<2x128xf32> to vector<2x32xf32>
    %92 = vector.extract_strided_slice %88 {offsets = [0, 64], sizes = [2, 32], strides = [1, 1]} : vector<2x128xf32> to vector<2x32xf32>
    %93 = arith.mulf %91, %92 : vector<2x32xf32>
    %94 = arith.addf %90, %93 : vector<2x32xf32>
    %95 = vector.extract_strided_slice %87 {offsets = [0, 96], sizes = [2, 32], strides = [1, 1]} : vector<2x128xf32> to vector<2x32xf32>
    %96 = math.tanh %94 : vector<2x32xf32>
    %97 = arith.mulf %95, %96 : vector<2x32xf32>
    %cst_39 = arith.constant dense<0.000000e+00> : vector<2x128xf32>
    %98 = tpu.matmul %97, %12, %cst_39 {dimension_numbers = #tpu.dot_dimension_numbers<[1], [0], [0], [1], [0, 0, 1, 1], [], []>} : vector<2x32xf32>, vector<32x128xf32>, vector<2x128xf32> -> vector<2x128xf32>
    %99 = arith.addf %98, %15 : vector<2x128xf32>
    %100 = vector.extract_strided_slice %9 {offsets = [4, 0], sizes = [2, 128], strides = [1, 1]} : vector<16x128xf32> to vector<2x128xf32>
    %cst_40 = arith.constant dense<0.000000e+00> : vector<2x128xf32>
    %101 = tpu.matmul %80, %10, %cst_40 {dimension_numbers = #tpu.dot_dimension_numbers<[1], [0], [0], [1], [0, 0, 1, 1], [], []>} : vector<2x32xf32>, vector<32x128xf32>, vector<2x128xf32> -> vector<2x128xf32>
    %102 = arith.addf %100, %101 : vector<2x128xf32>
    %103 = arith.negf %102 : vector<2x128xf32>
    %104 = math.exp %103 : vector<2x128xf32>
    %cst_41 = arith.constant 1.000000e+00 : f32
    %105 = vector.broadcast %cst_41 : f32 to vector<2x128xf32>
    %106 = arith.addf %105, %104 : vector<2x128xf32>
    %107 = arith.divf %105, %106 : vector<2x128xf32>
    %108 = math.tanh %102 : vector<2x128xf32>
    %109 = vector.extract_strided_slice %107 {offsets = [0, 32], sizes = [2, 32], strides = [1, 1]} : vector<2x128xf32> to vector<2x32xf32>
    %110 = arith.mulf %109, %77 : vector<2x32xf32>
    %111 = vector.extract_strided_slice %107 {offsets = [0, 0], sizes = [2, 32], strides = [1, 1]} : vector<2x128xf32> to vector<2x32xf32>
    %112 = vector.extract_strided_slice %108 {offsets = [0, 64], sizes = [2, 32], strides = [1, 1]} : vector<2x128xf32> to vector<2x32xf32>
    %113 = arith.mulf %111, %112 : vector<2x32xf32>
    %114 = arith.addf %110, %113 : vector<2x32xf32>
    %115 = vector.extract_strided_slice %107 {offsets = [0, 96], sizes = [2, 32], strides = [1, 1]} : vector<2x128xf32> to vector<2x32xf32>
    %116 = math.tanh %114 : vector<2x32xf32>
    %117 = arith.mulf %115, %116 : vector<2x32xf32>
    %cst_42 = arith.constant dense<0.000000e+00> : vector<2x128xf32>
    %118 = tpu.matmul %117, %11, %cst_42 {dimension_numbers = #tpu.dot_dimension_numbers<[1], [0], [0], [1], [0, 0, 1, 1], [], []>} : vector<2x32xf32>, vector<32x128xf32>, vector<2x128xf32> -> vector<2x128xf32>
    %119 = arith.addf %99, %118 : vector<2x128xf32>
    %120 = arith.negf %119 : vector<2x128xf32>
    %121 = math.exp %120 : vector<2x128xf32>
    %cst_43 = arith.constant 1.000000e+00 : f32
    %122 = vector.broadcast %cst_43 : f32 to vector<2x128xf32>
    %123 = arith.addf %122, %121 : vector<2x128xf32>
    %124 = arith.divf %122, %123 : vector<2x128xf32>
    %125 = math.tanh %119 : vector<2x128xf32>
    %126 = vector.extract_strided_slice %124 {offsets = [0, 32], sizes = [2, 32], strides = [1, 1]} : vector<2x128xf32> to vector<2x32xf32>
    %127 = arith.mulf %126, %94 : vector<2x32xf32>
    %128 = vector.extract_strided_slice %124 {offsets = [0, 0], sizes = [2, 32], strides = [1, 1]} : vector<2x128xf32> to vector<2x32xf32>
    %129 = vector.extract_strided_slice %125 {offsets = [0, 64], sizes = [2, 32], strides = [1, 1]} : vector<2x128xf32> to vector<2x32xf32>
    %130 = arith.mulf %128, %129 : vector<2x32xf32>
    %131 = arith.addf %127, %130 : vector<2x32xf32>
    %132 = vector.extract_strided_slice %124 {offsets = [0, 96], sizes = [2, 32], strides = [1, 1]} : vector<2x128xf32> to vector<2x32xf32>
    %133 = math.tanh %131 : vector<2x32xf32>
    %134 = arith.mulf %132, %133 : vector<2x32xf32>
    %cst_44 = arith.constant dense<0.000000e+00> : vector<2x128xf32>
    %135 = tpu.matmul %134, %12, %cst_44 {dimension_numbers = #tpu.dot_dimension_numbers<[1], [0], [0], [1], [0, 0, 1, 1], [], []>} : vector<2x32xf32>, vector<32x128xf32>, vector<2x128xf32> -> vector<2x128xf32>
    %136 = arith.addf %135, %15 : vector<2x128xf32>
    %137 = vector.extract_strided_slice %9 {offsets = [6, 0], sizes = [2, 128], strides = [1, 1]} : vector<16x128xf32> to vector<2x128xf32>
    %cst_45 = arith.constant dense<0.000000e+00> : vector<2x128xf32>
    %138 = tpu.matmul %117, %10, %cst_45 {dimension_numbers = #tpu.dot_dimension_numbers<[1], [0], [0], [1], [0, 0, 1, 1], [], []>} : vector<2x32xf32>, vector<32x128xf32>, vector<2x128xf32> -> vector<2x128xf32>
    %139 = arith.addf %137, %138 : vector<2x128xf32>
    %140 = arith.negf %139 : vector<2x128xf32>
    %141 = math.exp %140 : vector<2x128xf32>
    %cst_46 = arith.constant 1.000000e+00 : f32
    %142 = vector.broadcast %cst_46 : f32 to vector<2x128xf32>
    %143 = arith.addf %142, %141 : vector<2x128xf32>
    %144 = arith.divf %142, %143 : vector<2x128xf32>
    %145 = math.tanh %139 : vector<2x128xf32>
    %146 = vector.extract_strided_slice %144 {offsets = [0, 32], sizes = [2, 32], strides = [1, 1]} : vector<2x128xf32> to vector<2x32xf32>
    %147 = arith.mulf %146, %114 : vector<2x32xf32>
    %148 = vector.extract_strided_slice %144 {offsets = [0, 0], sizes = [2, 32], strides = [1, 1]} : vector<2x128xf32> to vector<2x32xf32>
    %149 = vector.extract_strided_slice %145 {offsets = [0, 64], sizes = [2, 32], strides = [1, 1]} : vector<2x128xf32> to vector<2x32xf32>
    %150 = arith.mulf %148, %149 : vector<2x32xf32>
    %151 = arith.addf %147, %150 : vector<2x32xf32>
    %152 = vector.extract_strided_slice %144 {offsets = [0, 96], sizes = [2, 32], strides = [1, 1]} : vector<2x128xf32> to vector<2x32xf32>
    %153 = math.tanh %151 : vector<2x32xf32>
    %154 = arith.mulf %152, %153 : vector<2x32xf32>
    %cst_47 = arith.constant dense<0.000000e+00> : vector<2x128xf32>
    %155 = tpu.matmul %154, %11, %cst_47 {dimension_numbers = #tpu.dot_dimension_numbers<[1], [0], [0], [1], [0, 0, 1, 1], [], []>} : vector<2x32xf32>, vector<32x128xf32>, vector<2x128xf32> -> vector<2x128xf32>
    %156 = arith.addf %136, %155 : vector<2x128xf32>
    %157 = arith.negf %156 : vector<2x128xf32>
    %158 = math.exp %157 : vector<2x128xf32>
    %cst_48 = arith.constant 1.000000e+00 : f32
    %159 = vector.broadcast %cst_48 : f32 to vector<2x128xf32>
    %160 = arith.addf %159, %158 : vector<2x128xf32>
    %161 = arith.divf %159, %160 : vector<2x128xf32>
    %162 = math.tanh %156 : vector<2x128xf32>
    %163 = vector.extract_strided_slice %161 {offsets = [0, 32], sizes = [2, 32], strides = [1, 1]} : vector<2x128xf32> to vector<2x32xf32>
    %164 = arith.mulf %163, %131 : vector<2x32xf32>
    %165 = vector.extract_strided_slice %161 {offsets = [0, 0], sizes = [2, 32], strides = [1, 1]} : vector<2x128xf32> to vector<2x32xf32>
    %166 = vector.extract_strided_slice %162 {offsets = [0, 64], sizes = [2, 32], strides = [1, 1]} : vector<2x128xf32> to vector<2x32xf32>
    %167 = arith.mulf %165, %166 : vector<2x32xf32>
    %168 = arith.addf %164, %167 : vector<2x32xf32>
    %169 = vector.extract_strided_slice %161 {offsets = [0, 96], sizes = [2, 32], strides = [1, 1]} : vector<2x128xf32> to vector<2x32xf32>
    %170 = math.tanh %168 : vector<2x32xf32>
    %171 = arith.mulf %169, %170 : vector<2x32xf32>
    %cst_49 = arith.constant dense<0.000000e+00> : vector<2x128xf32>
    %172 = tpu.matmul %171, %12, %cst_49 {dimension_numbers = #tpu.dot_dimension_numbers<[1], [0], [0], [1], [0, 0, 1, 1], [], []>} : vector<2x32xf32>, vector<32x128xf32>, vector<2x128xf32> -> vector<2x128xf32>
    %173 = arith.addf %172, %15 : vector<2x128xf32>
    %174 = vector.extract_strided_slice %9 {offsets = [8, 0], sizes = [2, 128], strides = [1, 1]} : vector<16x128xf32> to vector<2x128xf32>
    %cst_50 = arith.constant dense<0.000000e+00> : vector<2x128xf32>
    %175 = tpu.matmul %154, %10, %cst_50 {dimension_numbers = #tpu.dot_dimension_numbers<[1], [0], [0], [1], [0, 0, 1, 1], [], []>} : vector<2x32xf32>, vector<32x128xf32>, vector<2x128xf32> -> vector<2x128xf32>
    %176 = arith.addf %174, %175 : vector<2x128xf32>
    %177 = arith.negf %176 : vector<2x128xf32>
    %178 = math.exp %177 : vector<2x128xf32>
    %cst_51 = arith.constant 1.000000e+00 : f32
    %179 = vector.broadcast %cst_51 : f32 to vector<2x128xf32>
    %180 = arith.addf %179, %178 : vector<2x128xf32>
    %181 = arith.divf %179, %180 : vector<2x128xf32>
    %182 = math.tanh %176 : vector<2x128xf32>
    %183 = vector.extract_strided_slice %181 {offsets = [0, 32], sizes = [2, 32], strides = [1, 1]} : vector<2x128xf32> to vector<2x32xf32>
    %184 = arith.mulf %183, %151 : vector<2x32xf32>
    %185 = vector.extract_strided_slice %181 {offsets = [0, 0], sizes = [2, 32], strides = [1, 1]} : vector<2x128xf32> to vector<2x32xf32>
    %186 = vector.extract_strided_slice %182 {offsets = [0, 64], sizes = [2, 32], strides = [1, 1]} : vector<2x128xf32> to vector<2x32xf32>
    %187 = arith.mulf %185, %186 : vector<2x32xf32>
    %188 = arith.addf %184, %187 : vector<2x32xf32>
    %189 = vector.extract_strided_slice %181 {offsets = [0, 96], sizes = [2, 32], strides = [1, 1]} : vector<2x128xf32> to vector<2x32xf32>
    %190 = math.tanh %188 : vector<2x32xf32>
    %191 = arith.mulf %189, %190 : vector<2x32xf32>
    %cst_52 = arith.constant dense<0.000000e+00> : vector<2x128xf32>
    %192 = tpu.matmul %191, %11, %cst_52 {dimension_numbers = #tpu.dot_dimension_numbers<[1], [0], [0], [1], [0, 0, 1, 1], [], []>} : vector<2x32xf32>, vector<32x128xf32>, vector<2x128xf32> -> vector<2x128xf32>
    %193 = arith.addf %173, %192 : vector<2x128xf32>
    %194 = arith.negf %193 : vector<2x128xf32>
    %195 = math.exp %194 : vector<2x128xf32>
    %cst_53 = arith.constant 1.000000e+00 : f32
    %196 = vector.broadcast %cst_53 : f32 to vector<2x128xf32>
    %197 = arith.addf %196, %195 : vector<2x128xf32>
    %198 = arith.divf %196, %197 : vector<2x128xf32>
    %199 = math.tanh %193 : vector<2x128xf32>
    %200 = vector.extract_strided_slice %198 {offsets = [0, 32], sizes = [2, 32], strides = [1, 1]} : vector<2x128xf32> to vector<2x32xf32>
    %201 = arith.mulf %200, %168 : vector<2x32xf32>
    %202 = vector.extract_strided_slice %198 {offsets = [0, 0], sizes = [2, 32], strides = [1, 1]} : vector<2x128xf32> to vector<2x32xf32>
    %203 = vector.extract_strided_slice %199 {offsets = [0, 64], sizes = [2, 32], strides = [1, 1]} : vector<2x128xf32> to vector<2x32xf32>
    %204 = arith.mulf %202, %203 : vector<2x32xf32>
    %205 = arith.addf %201, %204 : vector<2x32xf32>
    %206 = vector.extract_strided_slice %198 {offsets = [0, 96], sizes = [2, 32], strides = [1, 1]} : vector<2x128xf32> to vector<2x32xf32>
    %207 = math.tanh %205 : vector<2x32xf32>
    %208 = arith.mulf %206, %207 : vector<2x32xf32>
    %cst_54 = arith.constant dense<0.000000e+00> : vector<2x128xf32>
    %209 = tpu.matmul %208, %12, %cst_54 {dimension_numbers = #tpu.dot_dimension_numbers<[1], [0], [0], [1], [0, 0, 1, 1], [], []>} : vector<2x32xf32>, vector<32x128xf32>, vector<2x128xf32> -> vector<2x128xf32>
    %210 = arith.addf %209, %15 : vector<2x128xf32>
    %211 = vector.extract_strided_slice %9 {offsets = [10, 0], sizes = [2, 128], strides = [1, 1]} : vector<16x128xf32> to vector<2x128xf32>
    %cst_55 = arith.constant dense<0.000000e+00> : vector<2x128xf32>
    %212 = tpu.matmul %191, %10, %cst_55 {dimension_numbers = #tpu.dot_dimension_numbers<[1], [0], [0], [1], [0, 0, 1, 1], [], []>} : vector<2x32xf32>, vector<32x128xf32>, vector<2x128xf32> -> vector<2x128xf32>
    %213 = arith.addf %211, %212 : vector<2x128xf32>
    %214 = arith.negf %213 : vector<2x128xf32>
    %215 = math.exp %214 : vector<2x128xf32>
    %cst_56 = arith.constant 1.000000e+00 : f32
    %216 = vector.broadcast %cst_56 : f32 to vector<2x128xf32>
    %217 = arith.addf %216, %215 : vector<2x128xf32>
    %218 = arith.divf %216, %217 : vector<2x128xf32>
    %219 = math.tanh %213 : vector<2x128xf32>
    %220 = vector.extract_strided_slice %218 {offsets = [0, 32], sizes = [2, 32], strides = [1, 1]} : vector<2x128xf32> to vector<2x32xf32>
    %221 = arith.mulf %220, %188 : vector<2x32xf32>
    %222 = vector.extract_strided_slice %218 {offsets = [0, 0], sizes = [2, 32], strides = [1, 1]} : vector<2x128xf32> to vector<2x32xf32>
    %223 = vector.extract_strided_slice %219 {offsets = [0, 64], sizes = [2, 32], strides = [1, 1]} : vector<2x128xf32> to vector<2x32xf32>
    %224 = arith.mulf %222, %223 : vector<2x32xf32>
    %225 = arith.addf %221, %224 : vector<2x32xf32>
    %226 = vector.extract_strided_slice %218 {offsets = [0, 96], sizes = [2, 32], strides = [1, 1]} : vector<2x128xf32> to vector<2x32xf32>
    %227 = math.tanh %225 : vector<2x32xf32>
    %228 = arith.mulf %226, %227 : vector<2x32xf32>
    %cst_57 = arith.constant dense<0.000000e+00> : vector<2x128xf32>
    %229 = tpu.matmul %228, %11, %cst_57 {dimension_numbers = #tpu.dot_dimension_numbers<[1], [0], [0], [1], [0, 0, 1, 1], [], []>} : vector<2x32xf32>, vector<32x128xf32>, vector<2x128xf32> -> vector<2x128xf32>
    %230 = arith.addf %210, %229 : vector<2x128xf32>
    %231 = arith.negf %230 : vector<2x128xf32>
    %232 = math.exp %231 : vector<2x128xf32>
    %cst_58 = arith.constant 1.000000e+00 : f32
    %233 = vector.broadcast %cst_58 : f32 to vector<2x128xf32>
    %234 = arith.addf %233, %232 : vector<2x128xf32>
    %235 = arith.divf %233, %234 : vector<2x128xf32>
    %236 = math.tanh %230 : vector<2x128xf32>
    %237 = vector.extract_strided_slice %235 {offsets = [0, 32], sizes = [2, 32], strides = [1, 1]} : vector<2x128xf32> to vector<2x32xf32>
    %238 = arith.mulf %237, %205 : vector<2x32xf32>
    %239 = vector.extract_strided_slice %235 {offsets = [0, 0], sizes = [2, 32], strides = [1, 1]} : vector<2x128xf32> to vector<2x32xf32>
    %240 = vector.extract_strided_slice %236 {offsets = [0, 64], sizes = [2, 32], strides = [1, 1]} : vector<2x128xf32> to vector<2x32xf32>
    %241 = arith.mulf %239, %240 : vector<2x32xf32>
    %242 = arith.addf %238, %241 : vector<2x32xf32>
    %243 = vector.extract_strided_slice %235 {offsets = [0, 96], sizes = [2, 32], strides = [1, 1]} : vector<2x128xf32> to vector<2x32xf32>
    %244 = math.tanh %242 : vector<2x32xf32>
    %245 = arith.mulf %243, %244 : vector<2x32xf32>
    %cst_59 = arith.constant dense<0.000000e+00> : vector<2x128xf32>
    %246 = tpu.matmul %245, %12, %cst_59 {dimension_numbers = #tpu.dot_dimension_numbers<[1], [0], [0], [1], [0, 0, 1, 1], [], []>} : vector<2x32xf32>, vector<32x128xf32>, vector<2x128xf32> -> vector<2x128xf32>
    %247 = arith.addf %246, %15 : vector<2x128xf32>
    %248 = vector.extract_strided_slice %9 {offsets = [12, 0], sizes = [2, 128], strides = [1, 1]} : vector<16x128xf32> to vector<2x128xf32>
    %cst_60 = arith.constant dense<0.000000e+00> : vector<2x128xf32>
    %249 = tpu.matmul %228, %10, %cst_60 {dimension_numbers = #tpu.dot_dimension_numbers<[1], [0], [0], [1], [0, 0, 1, 1], [], []>} : vector<2x32xf32>, vector<32x128xf32>, vector<2x128xf32> -> vector<2x128xf32>
    %250 = arith.addf %248, %249 : vector<2x128xf32>
    %251 = arith.negf %250 : vector<2x128xf32>
    %252 = math.exp %251 : vector<2x128xf32>
    %cst_61 = arith.constant 1.000000e+00 : f32
    %253 = vector.broadcast %cst_61 : f32 to vector<2x128xf32>
    %254 = arith.addf %253, %252 : vector<2x128xf32>
    %255 = arith.divf %253, %254 : vector<2x128xf32>
    %256 = math.tanh %250 : vector<2x128xf32>
    %257 = vector.extract_strided_slice %255 {offsets = [0, 32], sizes = [2, 32], strides = [1, 1]} : vector<2x128xf32> to vector<2x32xf32>
    %258 = arith.mulf %257, %225 : vector<2x32xf32>
    %259 = vector.extract_strided_slice %255 {offsets = [0, 0], sizes = [2, 32], strides = [1, 1]} : vector<2x128xf32> to vector<2x32xf32>
    %260 = vector.extract_strided_slice %256 {offsets = [0, 64], sizes = [2, 32], strides = [1, 1]} : vector<2x128xf32> to vector<2x32xf32>
    %261 = arith.mulf %259, %260 : vector<2x32xf32>
    %262 = arith.addf %258, %261 : vector<2x32xf32>
    %263 = vector.extract_strided_slice %255 {offsets = [0, 96], sizes = [2, 32], strides = [1, 1]} : vector<2x128xf32> to vector<2x32xf32>
    %264 = math.tanh %262 : vector<2x32xf32>
    %265 = arith.mulf %263, %264 : vector<2x32xf32>
    %cst_62 = arith.constant dense<0.000000e+00> : vector<2x128xf32>
    %266 = tpu.matmul %265, %11, %cst_62 {dimension_numbers = #tpu.dot_dimension_numbers<[1], [0], [0], [1], [0, 0, 1, 1], [], []>} : vector<2x32xf32>, vector<32x128xf32>, vector<2x128xf32> -> vector<2x128xf32>
    %267 = arith.addf %247, %266 : vector<2x128xf32>
    %268 = arith.negf %267 : vector<2x128xf32>
    %269 = math.exp %268 : vector<2x128xf32>
    %cst_63 = arith.constant 1.000000e+00 : f32
    %270 = vector.broadcast %cst_63 : f32 to vector<2x128xf32>
    %271 = arith.addf %270, %269 : vector<2x128xf32>
    %272 = arith.divf %270, %271 : vector<2x128xf32>
    %273 = math.tanh %267 : vector<2x128xf32>
    %274 = vector.extract_strided_slice %272 {offsets = [0, 32], sizes = [2, 32], strides = [1, 1]} : vector<2x128xf32> to vector<2x32xf32>
    %275 = arith.mulf %274, %242 : vector<2x32xf32>
    %276 = vector.extract_strided_slice %272 {offsets = [0, 0], sizes = [2, 32], strides = [1, 1]} : vector<2x128xf32> to vector<2x32xf32>
    %277 = vector.extract_strided_slice %273 {offsets = [0, 64], sizes = [2, 32], strides = [1, 1]} : vector<2x128xf32> to vector<2x32xf32>
    %278 = arith.mulf %276, %277 : vector<2x32xf32>
    %279 = arith.addf %275, %278 : vector<2x32xf32>
    %280 = vector.extract_strided_slice %272 {offsets = [0, 96], sizes = [2, 32], strides = [1, 1]} : vector<2x128xf32> to vector<2x32xf32>
    %281 = math.tanh %279 : vector<2x32xf32>
    %282 = arith.mulf %280, %281 : vector<2x32xf32>
    %cst_64 = arith.constant dense<0.000000e+00> : vector<2x128xf32>
    %283 = tpu.matmul %282, %12, %cst_64 {dimension_numbers = #tpu.dot_dimension_numbers<[1], [0], [0], [1], [0, 0, 1, 1], [], []>} : vector<2x32xf32>, vector<32x128xf32>, vector<2x128xf32> -> vector<2x128xf32>
    %284 = arith.addf %283, %15 : vector<2x128xf32>
    %285 = vector.extract_strided_slice %9 {offsets = [14, 0], sizes = [2, 128], strides = [1, 1]} : vector<16x128xf32> to vector<2x128xf32>
    %cst_65 = arith.constant dense<0.000000e+00> : vector<2x128xf32>
    %286 = tpu.matmul %265, %10, %cst_65 {dimension_numbers = #tpu.dot_dimension_numbers<[1], [0], [0], [1], [0, 0, 1, 1], [], []>} : vector<2x32xf32>, vector<32x128xf32>, vector<2x128xf32> -> vector<2x128xf32>
    %287 = arith.addf %285, %286 : vector<2x128xf32>
    %288 = arith.negf %287 : vector<2x128xf32>
    %289 = math.exp %288 : vector<2x128xf32>
    %cst_66 = arith.constant 1.000000e+00 : f32
    %290 = vector.broadcast %cst_66 : f32 to vector<2x128xf32>
    %291 = arith.addf %290, %289 : vector<2x128xf32>
    %292 = arith.divf %290, %291 : vector<2x128xf32>
    %293 = math.tanh %287 : vector<2x128xf32>
    %294 = vector.extract_strided_slice %292 {offsets = [0, 32], sizes = [2, 32], strides = [1, 1]} : vector<2x128xf32> to vector<2x32xf32>
    %295 = arith.mulf %294, %262 : vector<2x32xf32>
    %296 = vector.extract_strided_slice %292 {offsets = [0, 0], sizes = [2, 32], strides = [1, 1]} : vector<2x128xf32> to vector<2x32xf32>
    %297 = vector.extract_strided_slice %293 {offsets = [0, 64], sizes = [2, 32], strides = [1, 1]} : vector<2x128xf32> to vector<2x32xf32>
    %298 = arith.mulf %296, %297 : vector<2x32xf32>
    %299 = arith.addf %295, %298 : vector<2x32xf32>
    %300 = vector.extract_strided_slice %292 {offsets = [0, 96], sizes = [2, 32], strides = [1, 1]} : vector<2x128xf32> to vector<2x32xf32>
    %301 = math.tanh %299 : vector<2x32xf32>
    %302 = arith.mulf %300, %301 : vector<2x32xf32>
    %cst_67 = arith.constant dense<0.000000e+00> : vector<2x128xf32>
    %303 = tpu.matmul %302, %11, %cst_67 {dimension_numbers = #tpu.dot_dimension_numbers<[1], [0], [0], [1], [0, 0, 1, 1], [], []>} : vector<2x32xf32>, vector<32x128xf32>, vector<2x128xf32> -> vector<2x128xf32>
    %304 = arith.addf %284, %303 : vector<2x128xf32>
    %305 = arith.negf %304 : vector<2x128xf32>
    %306 = math.exp %305 : vector<2x128xf32>
    %cst_68 = arith.constant 1.000000e+00 : f32
    %307 = vector.broadcast %cst_68 : f32 to vector<2x128xf32>
    %308 = arith.addf %307, %306 : vector<2x128xf32>
    %309 = arith.divf %307, %308 : vector<2x128xf32>
    %310 = math.tanh %304 : vector<2x128xf32>
    %311 = vector.extract_strided_slice %309 {offsets = [0, 32], sizes = [2, 32], strides = [1, 1]} : vector<2x128xf32> to vector<2x32xf32>
    %312 = arith.mulf %311, %279 : vector<2x32xf32>
    %313 = vector.extract_strided_slice %309 {offsets = [0, 0], sizes = [2, 32], strides = [1, 1]} : vector<2x128xf32> to vector<2x32xf32>
    %314 = vector.extract_strided_slice %310 {offsets = [0, 64], sizes = [2, 32], strides = [1, 1]} : vector<2x128xf32> to vector<2x32xf32>
    %315 = arith.mulf %313, %314 : vector<2x32xf32>
    %316 = arith.addf %312, %315 : vector<2x32xf32>
    %317 = vector.extract_strided_slice %309 {offsets = [0, 96], sizes = [2, 32], strides = [1, 1]} : vector<2x128xf32> to vector<2x32xf32>
    %318 = math.tanh %316 : vector<2x32xf32>
    %319 = arith.mulf %317, %318 : vector<2x32xf32>
    %320 = tpu.concatenate %60, %97, %134, %171, %208, %245, %282, %319 in 0 : vector<2x32xf32>, vector<2x32xf32>, vector<2x32xf32>, vector<2x32xf32>, vector<2x32xf32>, vector<2x32xf32>, vector<2x32xf32>, vector<2x32xf32> -> vector<16x32xf32>
    %c0_69 = arith.constant 0 : index
    %c0_70 = arith.constant 0 : index
    %321 = vector.load %arg11[%c0_69, %c0_70] : memref<32x8xf32, #tpu.memory_space<vmem>>, vector<32x8xf32>
    %cst_71 = arith.constant dense<0.000000e+00> : vector<16x8xf32>
    %322 = tpu.matmul %320, %321, %cst_71 {dimension_numbers = #tpu.dot_dimension_numbers<[1], [0], [0], [1], [0, 0, 1, 1], [], []>} : vector<16x32xf32>, vector<32x8xf32>, vector<16x8xf32> -> vector<16x8xf32>
    %c0_72 = arith.constant 0 : index
    %c0_73 = arith.constant 0 : index
    %323 = vector.load %arg12[%c0_72, %c0_73] : memref<1x8xf32, #tpu.memory_space<vmem>>, vector<1x8xf32>
    %324 = vector.broadcast %323 : vector<1x8xf32> to vector<16x8xf32>
    %325 = arith.addf %322, %324 : vector<16x8xf32>
    %c0_74 = arith.constant 0 : index
    %c0_75 = arith.constant 0 : index
    %326 = vector.load %arg13[%c0_74, %c0_75] : memref<16x8xf32, #tpu.memory_space<vmem>>, vector<16x8xf32>
    tpu.vector_store %arg13[%c0_74, %c0_75], %325 {strides = array<i32>} : memref<16x8xf32, #tpu.memory_space<vmem>>, vector<16x8xf32>,
    %c0_76 = arith.constant 0 : index
    %c0_77 = arith.constant 0 : index
    %c0_78 = arith.constant 0 : index
    %327 = vector.load %arg14[%c0_76, %c0_77, %c0_78] : memref<2x2x32xf32, #tpu.memory_space<vmem>>, vector<1x2x32xf32>
    %328 = vector.shape_cast %327 : vector<1x2x32xf32> to vector<2x32xf32>
    %329 = vector.shape_cast %302 : vector<2x32xf32> to vector<1x2x32xf32>
    tpu.vector_store %arg14[%c0_76, %c0_77, %c0_78], %329 {strides = array<i32>} : memref<2x2x32xf32, #tpu.memory_space<vmem>>, vector<1x2x32xf32>,
    %c1_79 = arith.constant 1 : index
    %c0_80 = arith.constant 0 : index
    %c0_81 = arith.constant 0 : index
    %330 = vector.load %arg14[%c1_79, %c0_80, %c0_81] : memref<2x2x32xf32, #tpu.memory_space<vmem>>, vector<1x2x32xf32>
    %331 = vector.shape_cast %330 : vector<1x2x32xf32> to vector<2x32xf32>
    %332 = vector.shape_cast %319 : vector<2x32xf32> to vector<1x2x32xf32>
    tpu.vector_store %arg14[%c1_79, %c0_80, %c0_81], %332 {strides = array<i32>} : memref<2x2x32xf32, #tpu.memory_space<vmem>>, vector<1x2x32xf32>,
    %c0_82 = arith.constant 0 : index
    %c0_83 = arith.constant 0 : index
    %c0_84 = arith.constant 0 : index
    %333 = vector.load %arg15[%c0_82, %c0_83, %c0_84] : memref<2x2x32xf32, #tpu.memory_space<vmem>>, vector<1x2x32xf32>
    %334 = vector.shape_cast %333 : vector<1x2x32xf32> to vector<2x32xf32>
    %335 = vector.shape_cast %299 : vector<2x32xf32> to vector<1x2x32xf32>
    tpu.vector_store %arg15[%c0_82, %c0_83, %c0_84], %335 {strides = array<i32>} : memref<2x2x32xf32, #tpu.memory_space<vmem>>, vector<1x2x32xf32>,
    %c1_85 = arith.constant 1 : index
    %c0_86 = arith.constant 0 : index
    %c0_87 = arith.constant 0 : index
    %336 = vector.load %arg15[%c1_85, %c0_86, %c0_87] : memref<2x2x32xf32, #tpu.memory_space<vmem>>, vector<1x2x32xf32>
    %337 = vector.shape_cast %336 : vector<1x2x32xf32> to vector<2x32xf32>
    %338 = vector.shape_cast %316 : vector<2x32xf32> to vector<1x2x32xf32>
    tpu.vector_store %arg15[%c1_85, %c0_86, %c0_87], %338 {strides = array<i32>} : memref<2x2x32xf32, #tpu.memory_space<vmem>>, vector<1x2x32xf32>,
    return
  }
}

</mosaic_0001>

<llo_original>
// kernel: decoder_forward.1
$region0: #{decoder_forward.1}
  #allocation0 [shape = 'u32[]', space=smem, size = 0x4, offset = 0x4, fixed_abs, tag = 'smem constant byte address 0x4 - core index']
  #allocation1 [shape = 'u32[144,128]{1,0:T(1,128)}', space=vmem, size = 0x12000, scoped, tag = 'internal scratch']
  %s0 = inlined_call_operand.vmem [shape: f32[16,8], index: 0, kind: input, shape index: {}]
  %s1 = inlined_call_operand.vmem [shape: f32[16,8], index: 1, kind: input, shape index: {}]
  %s2 = inlined_call_operand.hbm [shape: f32[2,2,32], index: 2, kind: input, shape index: {}]
  %s3 = inlined_call_operand.hbm [shape: f32[2,2,32], index: 3, kind: input, shape index: {}]
  %s4 = inlined_call_operand.vmem [shape: f32[8,128], index: 4, kind: input, shape index: {}]
  %s5 = inlined_call_operand.vmem [shape: f32[8,128], index: 5, kind: input, shape index: {}]
  %s6 = inlined_call_operand.vmem [shape: f32[32,128], index: 6, kind: input, shape index: {}]
  %s7 = inlined_call_operand.vmem [shape: f32[1,128], index: 7, kind: input, shape index: {}]
  %s8 = inlined_call_operand.vmem [shape: f32[32,128], index: 8, kind: input, shape index: {}]
  %s9 = inlined_call_operand.vmem [shape: f32[32,128], index: 9, kind: input, shape index: {}]
  %s10 = inlined_call_operand.vmem [shape: f32[1,128], index: 10, kind: input, shape index: {}]
  %s11 = inlined_call_operand.vmem [shape: f32[32,8], index: 11, kind: input, shape index: {}]
  %s12 = inlined_call_operand.vmem [shape: f32[1,8], index: 12, kind: input, shape index: {}]
  %s13 = inlined_call_operand.vmem [shape: f32[16,8], index: 13, kind: output, shape index: {0}]
  %s14 = inlined_call_operand.hbm [shape: f32[2,2,32], index: 14, kind: output, shape index: {1}]
  %s15 = inlined_call_operand.hbm [shape: f32[2,2,32], index: 15, kind: output, shape index: {2}]
  %16 = xla_tuple %s13, %s14, %s15
  %s17 = sld [smem:[#allocation0]]
  $region86: #{decoder_forward.1} parent=0
    _
  %s19 = ssub.s32 1, %s17
  %s20 = scalar_select 0, %s19, %s17
  $region1: #{decoder_forward.1} parent=0
    #allocation2 [shape = 'u8[2048]{0}', space=vmem, size = 0x800, scoped, tag = 'input window, operand 2, single buffered']
    #allocation3 [shape = 's32[1]{0}', space=sflag, size = 0x4, scoped, tag = 'scoped memory for decoder_forward.1']
    #allocation4 [shape = 's32[1]{0}', space=sflag, size = 0x4, scoped, tag = 'scoped memory for decoder_forward.1']
    #allocation5 [shape = 'u8[2048]{0}', space=vmem, size = 0x800, scoped, tag = 'input window, operand 3, single buffered']
    #allocation6 [shape = 's32[1]{0}', space=sflag, size = 0x4, scoped, tag = 'scoped memory for decoder_forward.1']
    #allocation7 [shape = 'u8[2048]{0}', space=vmem, size = 0x800, scoped, tag = 'output window, operand 1, single buffered']
    #allocation8 [shape = 'u8[2048]{0}', space=vmem, size = 0x800, scoped, tag = 'output window, operand 2, single buffered']
    #allocation9 [shape = 's32[1]{0}', space=sflag, size = 0x4, scoped, tag = 'scoped memory for decoder_forward.1']
    %21 = vsyncpa [#allocation3], 0
    %22 = vsyncpa [#allocation6], 0
    %23 = vsyncpa [#allocation4], 0
    %24 = vsyncpa [#allocation9], 0
    // Predicated region
    $region2: #{decoder_forward.1} parent=1 // pred_check
      _
    $region3: #{decoder_forward.1} parent=1 // pred_check_branch
      %26 = sbr.rel (0) target = $region5
    $region4: #{decoder_forward.1} parent=1 // pred_region
      _
    $region5: #{decoder_forward.1} parent=1 // pred_fallthru
      _
    // Predicated region
    $region6: #{decoder_forward.1} parent=1 // pred_check
      _
    $region7: #{decoder_forward.1} parent=1 // pred_check_branch
      %28 = sbr.rel (0) target = $region9
    $region8: #{decoder_forward.1} parent=1 // pred_region
      _
    $region9: #{decoder_forward.1} parent=1 // pred_fallthru
      _
    // Predicated region
    $region10: #{decoder_forward.1} parent=1 // pred_check
      _
    $region11: #{decoder_forward.1} parent=1 // pred_check_branch
      %30 = sbr.rel (0) target = $region13
    $region12: #{decoder_forward.1} parent=1 // pred_region
      %s32 = ssub.s32 64, 64
      %33 = vsyncadd [#allocation3], %s32
      %s34 = sshll.u32 [#allocation2], 4
      %s35 = int_to_ptr.vmem [resolvable:$true] %s34
      %40 = dma.hbm_to_vmem [thread:$0]  %s2, 64, %s35, [#allocation3], 32, 32, 2
    $region13: #{decoder_forward.1} parent=1 // pred_fallthru
      _
    // Predicated region
    $region14: #{decoder_forward.1} parent=1 // pred_check
      _
    $region15: #{decoder_forward.1} parent=1 // pred_check_branch
      %42 = sbr.rel (0) target = $region17
    $region16: #{decoder_forward.1} parent=1 // pred_region
      %s44 = ssub.s32 64, 64
      %45 = vsyncadd [#allocation6], %s44
      %s46 = sshll.u32 [#allocation5], 4
      %s47 = int_to_ptr.vmem [resolvable:$true] %s46
      %52 = dma.hbm_to_vmem [thread:$0]  %s3, 64, %s47, [#allocation6], 32, 32, 2
    $region17: #{decoder_forward.1} parent=1 // pred_fallthru
      _
    // Predicated region
    $region18: #{decoder_forward.1} parent=1 // pred_check
      _
    $region19: #{decoder_forward.1} parent=1 // pred_check_branch
      %54 = sbr.rel (0) target = $region21
    $region20: #{decoder_forward.1} parent=1 // pred_region
      _
    $region21: #{decoder_forward.1} parent=1 // pred_fallthru
      _
    // Predicated region
    $region22: #{decoder_forward.1} parent=1 // pred_check
      _
    $region23: #{decoder_forward.1} parent=1 // pred_check_branch
      %56 = sbr.rel (0) target = $region25
    $region24: #{decoder_forward.1} parent=1 // pred_region
      _
    $region25: #{decoder_forward.1} parent=1 // pred_fallthru
      _
    // Predicated region
    $region26: #{decoder_forward.1} parent=1 // pred_check
      _
    $region27: #{decoder_forward.1} parent=1 // pred_check_branch
      %58 = sbr.rel (0) target = $region29
    $region28: #{decoder_forward.1} parent=1 // pred_region
      _
    $region29: #{decoder_forward.1} parent=1 // pred_fallthru
      _
    // Predicated region
    $region30: #{decoder_forward.1} parent=1 // pred_check
      _
    $region31: #{decoder_forward.1} parent=1 // pred_check_branch
      %60 = sbr.rel (0) target = $region33
    $region32: #{decoder_forward.1} parent=1 // pred_region
      _
    $region33: #{decoder_forward.1} parent=1 // pred_fallthru
      _
    // Predicated region
    $region34: #{decoder_forward.1} parent=1 // pred_check
      _
    $region35: #{decoder_forward.1} parent=1 // pred_check_branch
      %62 = sbr.rel (0) target = $region37
    $region36: #{decoder_forward.1} parent=1 // pred_region
      _
    $region37: #{decoder_forward.1} parent=1 // pred_fallthru
      _
    // Predicated region
    $region38: #{decoder_forward.1} parent=1 // pred_check
      _
    $region39: #{decoder_forward.1} parent=1 // pred_check_branch
      %64 = sbr.rel (0) target = $region41
    $region40: #{decoder_forward.1} parent=1 // pred_region
      _
    $region41: #{decoder_forward.1} parent=1 // pred_fallthru
      _
    // Predicated region
    $region42: #{decoder_forward.1} parent=1 // pred_check
      _
    $region43: #{decoder_forward.1} parent=1 // pred_check_branch
      %66 = sbr.rel (0) target = $region45
    $region44: #{decoder_forward.1} parent=1 // pred_region
      _
    $region45: #{decoder_forward.1} parent=1 // pred_fallthru
      _
    // Predicated region
    $region46: #{decoder_forward.1} parent=1 // pred_check
      _
    $region47: #{decoder_forward.1} parent=1 // pred_check_branch
      %68 = sbr.rel (0) target = $region49
    $region48: #{decoder_forward.1} parent=1 // pred_region
      _
    $region49: #{decoder_forward.1} parent=1 // pred_fallthru
      _
    // Predicated region
    $region50: #{decoder_forward.1} parent=1 // pred_check
      _
    $region51: #{decoder_forward.1} parent=1 // pred_check_branch
      %70 = sbr.rel (0) target = $region53
    $region52: #{decoder_forward.1} parent=1 // pred_region
      _
    $region53: #{decoder_forward.1} parent=1 // pred_fallthru
      _
    // Predicated region
    $region54: #{decoder_forward.1} parent=1 // pred_check
      _
    $region55: #{decoder_forward.1} parent=1 // pred_check_branch
      %72 = sbr.rel (0) target = $region57
    $region56: #{decoder_forward.1} parent=1 // pred_region
      %73 = dma.done [#allocation3], 64
    $region57: #{decoder_forward.1} parent=1 // pred_fallthru
      _
    // Predicated region
    $region58: #{decoder_forward.1} parent=1 // pred_check
      _
    $region59: #{decoder_forward.1} parent=1 // pred_check_branch
      %75 = sbr.rel (0) target = $region61
    $region60: #{decoder_forward.1} parent=1 // pred_region
      %76 = dma.done [#allocation6], 64
    $region61: #{decoder_forward.1} parent=1 // pred_fallthru
      _
    %v77 = vld [vmem:[%s0] sm:$0xff]
    %v78 = vld [vmem:[%s0 + $0x8] sm:$0xff]
    %v79 = vld [vmem:[%s4] sm:$0xff]
    %v80 = vld [vmem:[%s1] sm:$0xff]
    %v81 = vld [vmem:[%s1 + $0x8] sm:$0xff]
    %v82 = vld [vmem:[%s5] sm:$0xff]
    %vm83 = vcmask 64512
    %v85 = vsel %vm83, %v80, 0
    %v88 = vsel %vm83, %v81, 0
    %90 = vmatprep.subr.mxu0 0.0
    %91 = vmatpush1.msra.mxu0 %v82
    %92 = vmatprep.subr.mxu0 0.0
    %93 = vmatpush1.msra.mxu0 0.0
    %94 = vmatprep.subr.mxu0 0.0
    %95 = vmatpush1.msra.mxu0 0.0
    %96 = vmatprep.subr.mxu0 0.0
    %97 = vmatpush1.msra.mxu0 0.0
    %98 = vmatprep.subr.mxu0 0.0
    %99 = vmatpush1.msra.mxu0 0.0
    %100 = vmatprep.subr.mxu0 0.0
    %101 = vmatpush1.msra.mxu0 0.0
    %102 = vmatprep.subr.mxu0 0.0
    %103 = vmatpush1.msra.mxu0 0.0
    %104 = vmatprep.subr.mxu0 0.0
    %105 = vmatpush1.msra.mxu0 0.0
    %106 = vmatprep.subr.mxu0 0.0
    %107 = vmatpush1.msra.mxu0 0.0
    %108 = vmatprep.subr.mxu0 0.0
    %109 = vmatpush1.msra.mxu0 0.0
    %110 = vmatprep.subr.mxu0 0.0
    %111 = vmatpush1.msra.mxu0 0.0
    %112 = vmatprep.subr.mxu0 0.0
    %113 = vmatpush1.msra.mxu0 0.0
    %114 = vmatprep.subr.mxu0 0.0
    %115 = vmatpush1.msra.mxu0 0.0
    %116 = vmatprep.subr.mxu0 0.0
    %117 = vmatpush1.msra.mxu0 0.0
    %118 = vmatprep.subr.mxu0 0.0
    %119 = vmatpush1.msra.mxu0 0.0
    %120 = vmatprep.subr.mxu0 0.0
    %121 = vmatpush1.msra.mxu0 0.0
    %122 = vmatprep.subr.mxu0 0.0
    %123 = vmatpush1.msra.mxu0 0.0
    %124 = vmatprep.subr.mxu0 0.0
    %125 = vmatpush1.msra.mxu0 0.0
    %126 = vmatprep.subr.mxu0 0.0
    %127 = vmatpush1.msra.mxu0 0.0
    %128 = vmatprep.subr.mxu0 0.0
    %129 = vmatpush1.msra.mxu0 0.0
    %130 = vmatprep.subr.mxu0 0.0
    %131 = vmatpush1.msra.mxu0 0.0
    %132 = vmatprep.subr.mxu0 0.0
    %133 = vmatpush1.msra.mxu0 0.0
    %134 = vmatprep.subr.mxu0 0.0
    %135 = vmatpush1.msra.mxu0 0.0
    %136 = vmatprep.subr.mxu0 0.0
    %137 = vmatpush1.msra.mxu0 0.0
    %138 = vmatprep.subr.mxu0 0.0
    %139 = vmatpush1.msra.mxu0 0.0
    %140 = vmatprep.subr.mxu0 0.0
    %141 = vmatpush1.msra.mxu0 0.0
    %142 = vmatprep.subr.mxu0 0.0
    %143 = vmatpush1.msra.mxu0 0.0
    %144 = vmatprep.subr.mxu0 0.0
    %145 = vmatpush1.msra.mxu0 0.0
    %146 = vmatprep.subr.mxu0 0.0
    %147 = vmatpush1.msra.mxu0 0.0
    %148 = vmatprep.subr.mxu0 0.0
    %149 = vmatpush1.msra.mxu0 0.0
    %150 = vmatprep.subr.mxu0 0.0
    %151 = vmatpush1.msra.mxu0 0.0
    %152 = vmatprep.subr.mxu0 0.0
    %153 = vmatpush1.msra.mxu0 0.0
    %154 = vmatprep.mubr.f32.mxu0 0.0
    %155 = vmatmul.mubr.f32.gmra.mrb[0].mxu0 %v85
    %v156 = vpop.f32.mrb[0].mxu0
    %v157 = vadd.f32 0.0, %v156
    %v158 = vpop.f32.mrb[0].mxu0
    %159 = vmatprep.mubr.f32.mxu0 0.0
    %160 = vmatmul.mubr.f32.gmra.mrb[0].mxu0 %v88
    %v161 = vpop.f32.mrb[0].mxu0
    %v162 = vadd.f32 0.0, %v161
    %v163 = vpop.f32.mrb[0].mxu0
    %164 = vdwg.mxu0
    %v166 = vsel %vm83, %v77, 0
    %v169 = vsel %vm83, %v78, 0
    %171 = vmatprep.subr.mxu0 0.0
    %172 = vmatpush1.msra.mxu0 %v79
    %173 = vmatprep.subr.mxu0 0.0
    %174 = vmatpush1.msra.mxu0 0.0
    %175 = vmatprep.subr.mxu0 0.0
    %176 = vmatpush1.msra.mxu0 0.0
    %177 = vmatprep.subr.mxu0 0.0
    %178 = vmatpush1.msra.mxu0 0.0
    %179 = vmatprep.subr.mxu0 0.0
    %180 = vmatpush1.msra.mxu0 0.0
    %181 = vmatprep.subr.mxu0 0.0
    %182 = vmatpush1.msra.mxu0 0.0
    %183 = vmatprep.subr.mxu0 0.0
    %184 = vmatpush1.msra.mxu0 0.0
    %185 = vmatprep.subr.mxu0 0.0
    %186 = vmatpush1.msra.mxu0 0.0
    %187 = vmatprep.subr.mxu0 0.0
    %188 = vmatpush1.msra.mxu0 0.0
    %189 = vmatprep.subr.mxu0 0.0
    %190 = vmatpush1.msra.mxu0 0.0
    %191 = vmatprep.subr.mxu0 0.0
    %192 = vmatpush1.msra.mxu0 0.0
    %193 = vmatprep.subr.mxu0 0.0
    %194 = vmatpush1.msra.mxu0 0.0
    %195 = vmatprep.subr.mxu0 0.0
    %196 = vmatpush1.msra.mxu0 0.0
    %197 = vmatprep.subr.mxu0 0.0
    %198 = vmatpush1.msra.mxu0 0.0
    %199 = vmatprep.subr.mxu0 0.0
    %200 = vmatpush1.msra.mxu0 0.0
    %201 = vmatprep.subr.mxu0 0.0
    %202 = vmatpush1.msra.mxu0 0.0
    %203 = vmatprep.subr.mxu0 0.0
    %204 = vmatpush1.msra.mxu0 0.0
    %205 = vmatprep.subr.mxu0 0.0
    %206 = vmatpush1.msra.mxu0 0.0
    %207 = vmatprep.subr.mxu0 0.0
    %208 = vmatpush1.msra.mxu0 0.0
    %209 = vmatprep.subr.mxu0 0.0
    %210 = vmatpush1.msra.mxu0 0.0
    %211 = vmatprep.subr.mxu0 0.0
    %212 = vmatpush1.msra.mxu0 0.0
    %213 = vmatprep.subr.mxu0 0.0
    %214 = vmatpush1.msra.mxu0 0.0
    %215 = vmatprep.subr.mxu0 0.0
    %216 = vmatpush1.msra.mxu0 0.0
    %217 = vmatprep.subr.mxu0 0.0
    %218 = vmatpush1.msra.mxu0 0.0
    %219 = vmatprep.subr.mxu0 0.0
    %220 = vmatpush1.msra.mxu0 0.0
    %221 = vmatprep.subr.mxu0 0.0
    %222 = vmatpush1.msra.mxu0 0.0
    %223 = vmatprep.subr.mxu0 0.0
    %224 = vmatpush1.msra.mxu0 0.0
    %225 = vmatprep.subr.mxu0 0.0
    %226 = vmatpush1.msra.mxu0 0.0
    %227 = vmatprep.subr.mxu0 0.0
    %228 = vmatpush1.msra.mxu0 0.0
    %229 = vmatprep.subr.mxu0 0.0
    %230 = vmatpush1.msra.mxu0 0.0
    %231 = vmatprep.subr.mxu0 0.0
    %232 = vmatpush1.msra.mxu0 0.0
    %233 = vmatprep.subr.mxu0 0.0
    %234 = vmatpush1.msra.mxu0 0.0
    %235 = vmatprep.mubr.f32.mxu0 0.0
    %236 = vmatmul.mubr.f32.gmra.mrb[0].mxu0 %v166
    %v237 = vpop.f32.mrb[0].mxu0
    %v238 = vadd.f32 %v157, %v237
    %v239 = vpop.f32.mrb[0].mxu0
    %240 = vmatprep.mubr.f32.mxu0 0.0
    %241 = vmatmul.mubr.f32.gmra.mrb[0].mxu0 %v169
    %v242 = vpop.f32.mrb[0].mxu0
    %v243 = vadd.f32 %v162, %v242
    %v244 = vpop.f32.mrb[0].mxu0
    %245 = vdwg.mxu0
    %v246 = vld [vmem:[%s7] sm:$0x1]
    %v248 = vlaneseq
    %v249 = vshrl.u32 %v248, 7
    %v250 = vsub.s32 0, %v249
    %v251 = vrot.slane %v246, %v250
    %v253 = vadd.f32 %v238, %v251
    %v254 = vadd.f32 %v243, %v251
    %v255 = vld [vmem:[%s6] sm:$0xff]
    %v256 = vld [vmem:[%s6 + $0x8] sm:$0xff]
    %v257 = vld [vmem:[%s6 + $0x10] sm:$0xff]
    %v258 = vld [vmem:[%s6 + $0x18] sm:$0xff]
    %v259 = vld [vmem:[%s8] sm:$0xff]
    %v260 = vld [vmem:[%s8 + $0x8] sm:$0xff]
    %v261 = vld [vmem:[%s8 + $0x10] sm:$0xff]
    %v262 = vld [vmem:[%s8 + $0x18] sm:$0xff]
    %v263 = vld [vmem:[%s9] sm:$0xff]
    %v264 = vld [vmem:[%s9 + $0x8] sm:$0xff]
    %v265 = vld [vmem:[%s9 + $0x10] sm:$0xff]
    %v266 = vld [vmem:[%s9 + $0x18] sm:$0xff]
    %v267 = vld [vmem:[%s10] sm:$0x1]
    %v269 = vlaneseq
    %v270 = vshrl.u32 %v269, 7
    %v271 = vsub.s32 0, %v270
    %v272 = vrot.slane %v267, %v271
    %v274 = vld [vmem:[#allocation2] sm:$0x3]
    %v275 = vld [vmem:[#allocation5] sm:$0x3]
    %s276 = scalar_lea.vmem [#allocation2], 2
    %v277 = vld [vmem:[%s276] sm:$0x3]
    %s278 = scalar_lea.vmem [#allocation5], 2
    %v279 = vld [vmem:[%s278] sm:$0x3]
    %vm280 = vcmask 261120
    %v282 = vsel %vm280, %v277, 0
    %284 = vmatprep.subr.mxu0 0.0
    %285 = vmatpush1.msra.mxu0 %v263
    %286 = vmatprep.subr.mxu0 0.0
    %287 = vmatpush1.msra.mxu0 %v264
    %288 = vmatprep.subr.mxu0 0.0
    %289 = vmatpush1.msra.mxu0 %v265
    %290 = vmatprep.subr.mxu0 0.0
    %291 = vmatpush1.msra.mxu0 %v266
    %292 = vmatprep.subr.mxu0 0.0
    %293 = vmatpush1.msra.mxu0 0.0
    %294 = vmatprep.subr.mxu0 0.0
    %295 = vmatpush1.msra.mxu0 0.0
    %296 = vmatprep.subr.mxu0 0.0
    %297 = vmatpush1.msra.mxu0 0.0
    %298 = vmatprep.subr.mxu0 0.0
    %299 = vmatpush1.msra.mxu0 0.0
    %300 = vmatprep.subr.mxu0 0.0
    %301 = vmatpush1.msra.mxu0 0.0
    %302 = vmatprep.subr.mxu0 0.0
    %303 = vmatpush1.msra.mxu0 0.0
    %304 = vmatprep.subr.mxu0 0.0
    %305 = vmatpush1.msra.mxu0 0.0
    %306 = vmatprep.subr.mxu0 0.0
    %307 = vmatpush1.msra.mxu0 0.0
    %308 = vmatprep.subr.mxu0 0.0
    %309 = vmatpush1.msra.mxu0 0.0
    %310 = vmatprep.subr.mxu0 0.0
    %311 = vmatpush1.msra.mxu0 0.0
    %312 = vmatprep.subr.mxu0 0.0
    %313 = vmatpush1.msra.mxu0 0.0
    %314 = vmatprep.subr.mxu0 0.0
    %315 = vmatpush1.msra.mxu0 0.0
    %316 = vmatprep.subr.mxu0 0.0
    %317 = vmatpush1.msra.mxu0 0.0
    %318 = vmatprep.subr.mxu0 0.0
    %319 = vmatpush1.msra.mxu0 0.0
    %320 = vmatprep.subr.mxu0 0.0
    %321 = vmatpush1.msra.mxu0 0.0
    %322 = vmatprep.subr.mxu0 0.0
    %323 = vmatpush1.msra.mxu0 0.0
    %324 = vmatprep.subr.mxu0 0.0
    %325 = vmatpush1.msra.mxu0 0.0
    %326 = vmatprep.subr.mxu0 0.0
    %327 = vmatpush1.msra.mxu0 0.0
    %328 = vmatprep.subr.mxu0 0.0
    %329 = vmatpush1.msra.mxu0 0.0
    %330 = vmatprep.subr.mxu0 0.0
    %331 = vmatpush1.msra.mxu0 0.0
    %332 = vmatprep.subr.mxu0 0.0
    %333 = vmatpush1.msra.mxu0 0.0
    %334 = vmatprep.subr.mxu0 0.0
    %335 = vmatpush1.msra.mxu0 0.0
    %336 = vmatprep.subr.mxu0 0.0
    %337 = vmatpush1.msra.mxu0 0.0
    %338 = vmatprep.subr.mxu0 0.0
    %339 = vmatpush1.msra.mxu0 0.0
    %340 = vmatprep.subr.mxu0 0.0
    %341 = vmatpush1.msra.mxu0 0.0
    %342 = vmatprep.subr.mxu0 0.0
    %343 = vmatpush1.msra.mxu0 0.0
    %344 = vmatprep.subr.mxu0 0.0
    %345 = vmatpush1.msra.mxu0 0.0
    %346 = vmatprep.subr.mxu0 0.0
    %347 = vmatpush1.msra.mxu0 0.0
    %348 = vmatprep.mubr.f32.mxu0 0.0
    %349 = vmatmul.mubr.f32.gmra.mrb[0].mxu0 %v282
    %v350 = vpop.f32.mrb[0].mxu0
    %v351 = vadd.f32 %v272, %v350
    %v352 = vpop.f32.mrb[0].mxu0
    %353 = vdwg.mxu0
    %v355 = vsel %vm280, %v274, 0
    %357 = vmatprep.subr.mxu0 0.0
    %358 = vmatpush1.msra.mxu0 %v255
    %359 = vmatprep.subr.mxu0 0.0
    %360 = vmatpush1.msra.mxu0 %v256
    %361 = vmatprep.subr.mxu0 0.0
    %362 = vmatpush1.msra.mxu0 %v257
    %363 = vmatprep.subr.mxu0 0.0
    %364 = vmatpush1.msra.mxu0 %v258
    %365 = vmatprep.subr.mxu0 0.0
    %366 = vmatpush1.msra.mxu0 0.0
    %367 = vmatprep.subr.mxu0 0.0
    %368 = vmatpush1.msra.mxu0 0.0
    %369 = vmatprep.subr.mxu0 0.0
    %370 = vmatpush1.msra.mxu0 0.0
    %371 = vmatprep.subr.mxu0 0.0
    %372 = vmatpush1.msra.mxu0 0.0
    %373 = vmatprep.subr.mxu0 0.0
    %374 = vmatpush1.msra.mxu0 0.0
    %375 = vmatprep.subr.mxu0 0.0
    %376 = vmatpush1.msra.mxu0 0.0
    %377 = vmatprep.subr.mxu0 0.0
    %378 = vmatpush1.msra.mxu0 0.0
    %379 = vmatprep.subr.mxu0 0.0
    %380 = vmatpush1.msra.mxu0 0.0
    %381 = vmatprep.subr.mxu0 0.0
    %382 = vmatpush1.msra.mxu0 0.0
    %383 = vmatprep.subr.mxu0 0.0
    %384 = vmatpush1.msra.mxu0 0.0
    %385 = vmatprep.subr.mxu0 0.0
    %386 = vmatpush1.msra.mxu0 0.0
    %387 = vmatprep.subr.mxu0 0.0
    %388 = vmatpush1.msra.mxu0 0.0
    %389 = vmatprep.subr.mxu0 0.0
    %390 = vmatpush1.msra.mxu0 0.0
    %391 = vmatprep.subr.mxu0 0.0
    %392 = vmatpush1.msra.mxu0 0.0
    %393 = vmatprep.subr.mxu0 0.0
    %394 = vmatpush1.msra.mxu0 0.0
    %395 = vmatprep.subr.mxu0 0.0
    %396 = vmatpush1.msra.mxu0 0.0
    %397 = vmatprep.subr.mxu0 0.0
    %398 = vmatpush1.msra.mxu0 0.0
    %399 = vmatprep.subr.mxu0 0.0
    %400 = vmatpush1.msra.mxu0 0.0
    %401 = vmatprep.subr.mxu0 0.0
    %402 = vmatpush1.msra.mxu0 0.0
    %403 = vmatprep.subr.mxu0 0.0
    %404 = vmatpush1.msra.mxu0 0.0
    %405 = vmatprep.subr.mxu0 0.0
    %406 = vmatpush1.msra.mxu0 0.0
    %407 = vmatprep.subr.mxu0 0.0
    %408 = vmatpush1.msra.mxu0 0.0
    %409 = vmatprep.subr.mxu0 0.0
    %410 = vmatpush1.msra.mxu0 0.0
    %411 = vmatprep.subr.mxu0 0.0
    %412 = vmatpush1.msra.mxu0 0.0
    %413 = vmatprep.subr.mxu0 0.0
    %414 = vmatpush1.msra.mxu0 0.0
    %415 = vmatprep.subr.mxu0 0.0
    %416 = vmatpush1.msra.mxu0 0.0
    %417 = vmatprep.subr.mxu0 0.0
    %418 = vmatpush1.msra.mxu0 0.0
    %419 = vmatprep.subr.mxu0 0.0
    %420 = vmatpush1.msra.mxu0 0.0
    %421 = vmatprep.mubr.f32.mxu0 0.0
    %422 = vmatmul.mubr.f32.gmra.mrb[0].mxu0 %v355
    %v423 = vpop.f32.mrb[0].mxu0
    %v424 = vadd.f32 0.0, %v423
    %v425 = vpop.f32.mrb[0].mxu0
    %426 = vdwg.mxu0
    %v427 = vadd.f32 %v253, %v424
    %v428 = vxor.u32 %v427, 2147483648
    %v429 = vmul.f32 %v428, 1.442695
    %v430 = vpow.pop %v429
    %v431 = vadd.f32 %v430, 1.0
    %v432 = vrcp.pop %v431
    %v433 = vmul.f32 1.0, %v432
    %v434 = vtanh.pop %v427
    %436 = vrot.lane.b32.xlu0 %v275, 32
    %v437 = vpop.permute.xlu0 %436
    %v439 = vmul.f32 %v433, %v437
    %441 = vrot.lane.b32.xlu0 %v434, 64
    %v442 = vpop.permute.xlu0 %441
    %v444 = vmul.f32 %v433, %v442
    %446 = vrot.lane.b32.xlu0 %v444, 32
    %v447 = vpop.permute.xlu0 %446
    %v449 = vadd.f32 %v439, %v447
    %v450 = vtanh.pop %v449
    %452 = vrot.lane.b32.xlu0 %v450, 64
    %v453 = vpop.permute.xlu0 %452
    %v455 = vmul.f32 %v433, %v453
    %457 = vrot.lane.b32.xlu0 %v455, 32
    %v458 = vpop.permute.xlu0 %457
    %v459 = vsel %vm280, %v458, 0
    %461 = vmatprep.subr.mxu0 0.0
    %462 = vmatpush1.msra.mxu0 %v259
    %463 = vmatprep.subr.mxu0 0.0
    %464 = vmatpush1.msra.mxu0 %v260
    %465 = vmatprep.subr.mxu0 0.0
    %466 = vmatpush1.msra.mxu0 %v261
    %467 = vmatprep.subr.mxu0 0.0
    %468 = vmatpush1.msra.mxu0 %v262
    %469 = vmatprep.subr.mxu0 0.0
    %470 = vmatpush1.msra.mxu0 0.0
    %471 = vmatprep.subr.mxu0 0.0
    %472 = vmatpush1.msra.mxu0 0.0
    %473 = vmatprep.subr.mxu0 0.0
    %474 = vmatpush1.msra.mxu0 0.0
    %475 = vmatprep.subr.mxu0 0.0
    %476 = vmatpush1.msra.mxu0 0.0
    %477 = vmatprep.subr.mxu0 0.0
    %478 = vmatpush1.msra.mxu0 0.0
    %479 = vmatprep.subr.mxu0 0.0
    %480 = vmatpush1.msra.mxu0 0.0
    %481 = vmatprep.subr.mxu0 0.0
    %482 = vmatpush1.msra.mxu0 0.0
    %483 = vmatprep.subr.mxu0 0.0
    %484 = vmatpush1.msra.mxu0 0.0
    %485 = vmatprep.subr.mxu0 0.0
    %486 = vmatpush1.msra.mxu0 0.0
    %487 = vmatprep.subr.mxu0 0.0
    %488 = vmatpush1.msra.mxu0 0.0
    %489 = vmatprep.subr.mxu0 0.0
    %490 = vmatpush1.msra.mxu0 0.0
    %491 = vmatprep.subr.mxu0 0.0
    %492 = vmatpush1.msra.mxu0 0.0
    %493 = vmatprep.subr.mxu0 0.0
    %494 = vmatpush1.msra.mxu0 0.0
    %495 = vmatprep.subr.mxu0 0.0
    %496 = vmatpush1.msra.mxu0 0.0
    %497 = vmatprep.subr.mxu0 0.0
    %498 = vmatpush1.msra.mxu0 0.0
    %499 = vmatprep.subr.mxu0 0.0
    %500 = vmatpush1.msra.mxu0 0.0
    %501 = vmatprep.subr.mxu0 0.0
    %502 = vmatpush1.msra.mxu0 0.0
    %503 = vmatprep.subr.mxu0 0.0
    %504 = vmatpush1.msra.mxu0 0.0
    %505 = vmatprep.subr.mxu0 0.0
    %506 = vmatpush1.msra.mxu0 0.0
    %507 = vmatprep.subr.mxu0 0.0
    %508 = vmatpush1.msra.mxu0 0.0
    %509 = vmatprep.subr.mxu0 0.0
    %510 = vmatpush1.msra.mxu0 0.0
    %511 = vmatprep.subr.mxu0 0.0
    %512 = vmatpush1.msra.mxu0 0.0
    %513 = vmatprep.subr.mxu0 0.0
    %514 = vmatpush1.msra.mxu0 0.0
    %515 = vmatprep.subr.mxu0 0.0
    %516 = vmatpush1.msra.mxu0 0.0
    %517 = vmatprep.subr.mxu0 0.0
    %518 = vmatpush1.msra.mxu0 0.0
    %519 = vmatprep.subr.mxu0 0.0
    %520 = vmatpush1.msra.mxu0 0.0
    %521 = vmatprep.subr.mxu0 0.0
    %522 = vmatpush1.msra.mxu0 0.0
    %523 = vmatprep.subr.mxu0 0.0
    %524 = vmatpush1.msra.mxu0 0.0
    %525 = vmatprep.mubr.f32.mxu0 0.0
    %526 = vmatmul.mubr.f32.gmra.mrb[0].mxu0 %v459
    %v527 = vpop.f32.mrb[0].mxu0
    %v528 = vadd.f32 0.0, %v527
    %v529 = vpop.f32.mrb[0].mxu0
    %530 = vdwg.mxu0
    %v531 = vadd.f32 %v351, %v528
    %v532 = vxor.u32 %v531, 2147483648
    %v533 = vmul.f32 %v532, 1.442695
    %v534 = vpow.pop %v533
    %v535 = vadd.f32 %v534, 1.0
    %v536 = vrcp.pop %v535
    %v537 = vmul.f32 1.0, %v536
    %v538 = vtanh.pop %v531
    %540 = vrot.lane.b32.xlu0 %v279, 32
    %v541 = vpop.permute.xlu0 %540
    %v543 = vmul.f32 %v537, %v541
    %545 = vrot.lane.b32.xlu0 %v538, 64
    %v546 = vpop.permute.xlu0 %545
    %v548 = vmul.f32 %v537, %v546
    %550 = vrot.lane.b32.xlu0 %v548, 32
    %v551 = vpop.permute.xlu0 %550
    %v553 = vadd.f32 %v543, %v551
    %v554 = vtanh.pop %v553
    %556 = vrot.lane.b32.xlu0 %v554, 64
    %v557 = vpop.permute.xlu0 %556
    %v559 = vmul.f32 %v537, %v557
    %561 = vrot.lane.b32.xlu0 %v559, 32
    %v562 = vpop.permute.xlu0 %561
    %v563 = vsel %vm280, %v562, 0
    %565 = vmatprep.subr.mxu0 0.0
    %566 = vmatpush1.msra.mxu0 %v263
    %567 = vmatprep.subr.mxu0 0.0
    %568 = vmatpush1.msra.mxu0 %v264
    %569 = vmatprep.subr.mxu0 0.0
    %570 = vmatpush1.msra.mxu0 %v265
    %571 = vmatprep.subr.mxu0 0.0
    %572 = vmatpush1.msra.mxu0 %v266
    %573 = vmatprep.subr.mxu0 0.0
    %574 = vmatpush1.msra.mxu0 0.0
    %575 = vmatprep.subr.mxu0 0.0
    %576 = vmatpush1.msra.mxu0 0.0
    %577 = vmatprep.subr.mxu0 0.0
    %578 = vmatpush1.msra.mxu0 0.0
    %579 = vmatprep.subr.mxu0 0.0
    %580 = vmatpush1.msra.mxu0 0.0
    %581 = vmatprep.subr.mxu0 0.0
    %582 = vmatpush1.msra.mxu0 0.0
    %583 = vmatprep.subr.mxu0 0.0
    %584 = vmatpush1.msra.mxu0 0.0
    %585 = vmatprep.subr.mxu0 0.0
    %586 = vmatpush1.msra.mxu0 0.0
    %587 = vmatprep.subr.mxu0 0.0
    %588 = vmatpush1.msra.mxu0 0.0
    %589 = vmatprep.subr.mxu0 0.0
    %590 = vmatpush1.msra.mxu0 0.0
    %591 = vmatprep.subr.mxu0 0.0
    %592 = vmatpush1.msra.mxu0 0.0
    %593 = vmatprep.subr.mxu0 0.0
    %594 = vmatpush1.msra.mxu0 0.0
    %595 = vmatprep.subr.mxu0 0.0
    %596 = vmatpush1.msra.mxu0 0.0
    %597 = vmatprep.subr.mxu0 0.0
    %598 = vmatpush1.msra.mxu0 0.0
    %599 = vmatprep.subr.mxu0 0.0
    %600 = vmatpush1.msra.mxu0 0.0
    %601 = vmatprep.subr.mxu0 0.0
    %602 = vmatpush1.msra.mxu0 0.0
    %603 = vmatprep.subr.mxu0 0.0
    %604 = vmatpush1.msra.mxu0 0.0
    %605 = vmatprep.subr.mxu0 0.0
    %606 = vmatpush1.msra.mxu0 0.0
    %607 = vmatprep.subr.mxu0 0.0
    %608 = vmatpush1.msra.mxu0 0.0
    %609 = vmatprep.subr.mxu0 0.0
    %610 = vmatpush1.msra.mxu0 0.0
    %611 = vmatprep.subr.mxu0 0.0
    %612 = vmatpush1.msra.mxu0 0.0
    %613 = vmatprep.subr.mxu0 0.0
    %614 = vmatpush1.msra.mxu0 0.0
    %615 = vmatprep.subr.mxu0 0.0
    %616 = vmatpush1.msra.mxu0 0.0
    %617 = vmatprep.subr.mxu0 0.0
    %618 = vmatpush1.msra.mxu0 0.0
    %619 = vmatprep.subr.mxu0 0.0
    %620 = vmatpush1.msra.mxu0 0.0
    %621 = vmatprep.subr.mxu0 0.0
    %622 = vmatpush1.msra.mxu0 0.0
    %623 = vmatprep.subr.mxu0 0.0
    %624 = vmatpush1.msra.mxu0 0.0
    %625 = vmatprep.subr.mxu0 0.0
    %626 = vmatpush1.msra.mxu0 0.0
    %627 = vmatprep.subr.mxu0 0.0
    %628 = vmatpush1.msra.mxu0 0.0
    %629 = vmatprep.mubr.f32.mxu0 0.0
    %630 = vmatmul.mubr.f32.gmra.mrb[0].mxu0 %v563
    %v631 = vpop.f32.mrb[0].mxu0
    %v632 = vadd.f32 %v272, %v631
    %v633 = vpop.f32.mrb[0].mxu0
    %634 = vdwg.mxu0
    %635 = vmatprep.subr.mxu0 0.0
    %636 = vmatpush1.msra.mxu0 %v255
    %637 = vmatprep.subr.mxu0 0.0
    %638 = vmatpush1.msra.mxu0 %v256
    %639 = vmatprep.subr.mxu0 0.0
    %640 = vmatpush1.msra.mxu0 %v257
    %641 = vmatprep.subr.mxu0 0.0
    %642 = vmatpush1.msra.mxu0 %v258
    %643 = vmatprep.subr.mxu0 0.0
    %644 = vmatpush1.msra.mxu0 0.0
    %645 = vmatprep.subr.mxu0 0.0
    %646 = vmatpush1.msra.mxu0 0.0
    %647 = vmatprep.subr.mxu0 0.0
    %648 = vmatpush1.msra.mxu0 0.0
    %649 = vmatprep.subr.mxu0 0.0
    %650 = vmatpush1.msra.mxu0 0.0
    %651 = vmatprep.subr.mxu0 0.0
    %652 = vmatpush1.msra.mxu0 0.0
    %653 = vmatprep.subr.mxu0 0.0
    %654 = vmatpush1.msra.mxu0 0.0
    %655 = vmatprep.subr.mxu0 0.0
    %656 = vmatpush1.msra.mxu0 0.0
    %657 = vmatprep.subr.mxu0 0.0
    %658 = vmatpush1.msra.mxu0 0.0
    %659 = vmatprep.subr.mxu0 0.0
    %660 = vmatpush1.msra.mxu0 0.0
    %661 = vmatprep.subr.mxu0 0.0
    %662 = vmatpush1.msra.mxu0 0.0
    %663 = vmatprep.subr.mxu0 0.0
    %664 = vmatpush1.msra.mxu0 0.0
    %665 = vmatprep.subr.mxu0 0.0
    %666 = vmatpush1.msra.mxu0 0.0
    %667 = vmatprep.subr.mxu0 0.0
    %668 = vmatpush1.msra.mxu0 0.0
    %669 = vmatprep.subr.mxu0 0.0
    %670 = vmatpush1.msra.mxu0 0.0
    %671 = vmatprep.subr.mxu0 0.0
    %672 = vmatpush1.msra.mxu0 0.0
    %673 = vmatprep.subr.mxu0 0.0
    %674 = vmatpush1.msra.mxu0 0.0
    %675 = vmatprep.subr.mxu0 0.0
    %676 = vmatpush1.msra.mxu0 0.0
    %677 = vmatprep.subr.mxu0 0.0
    %678 = vmatpush1.msra.mxu0 0.0
    %679 = vmatprep.subr.mxu0 0.0
    %680 = vmatpush1.msra.mxu0 0.0
    %681 = vmatprep.subr.mxu0 0.0
    %682 = vmatpush1.msra.mxu0 0.0
    %683 = vmatprep.subr.mxu0 0.0
    %684 = vmatpush1.msra.mxu0 0.0
    %685 = vmatprep.subr.mxu0 0.0
    %686 = vmatpush1.msra.mxu0 0.0
    %687 = vmatprep.subr.mxu0 0.0
    %688 = vmatpush1.msra.mxu0 0.0
    %689 = vmatprep.subr.mxu0 0.0
    %690 = vmatpush1.msra.mxu0 0.0
    %691 = vmatprep.subr.mxu0 0.0
    %692 = vmatpush1.msra.mxu0 0.0
    %693 = vmatprep.subr.mxu0 0.0
    %694 = vmatpush1.msra.mxu0 0.0
    %695 = vmatprep.subr.mxu0 0.0
    %696 = vmatpush1.msra.mxu0 0.0
    %697 = vmatprep.subr.mxu0 0.0
    %698 = vmatpush1.msra.mxu0 0.0
    %699 = vmatprep.mubr.f32.mxu0 0.0
    %700 = vmatmul.mubr.f32.gmra.mrb[0].mxu0 %v459
    %v701 = vpop.f32.mrb[0].mxu0
    %v702 = vadd.f32 0.0, %v701
    %v703 = vpop.f32.mrb[0].mxu0
    %704 = vdwg.mxu0
    %v706 = vrot.slane %v702, 6
    %v708 = vadd.f32 %v253, %v706
    %v709 = vxor.u32 %v708, 2147483648
    %v710 = vmul.f32 %v709, 1.442695
    %v711 = vpow.pop %v710
    %v712 = vadd.f32 %v711, 1.0
    %v713 = vrcp.pop %v712
    %v714 = vmul.f32 1.0, %v713
    %v715 = vtanh.pop %v708
    %v717 = vrot.slane %v449, 6
    %v719 = vmul.f32 %v714, %v717
    %721 = vrot.lane.b32.xlu0 %v715, 64
    %v722 = vpop.permute.xlu0 %721
    %v724 = vmul.f32 %v714, %v722
    %726 = vrot.lane.b32.xlu0 %v724, 32
    %v727 = vpop.permute.xlu0 %726
    %v729 = vadd.f32 %v719, %v727
    %v730 = vtanh.pop %v729
    %732 = vrot.lane.b32.xlu0 %v730, 64
    %v733 = vpop.permute.xlu0 %732
    %v735 = vmul.f32 %v714, %v733
    %v737 = vrot.slane %v735, 2
    %738 = vrot.lane.b32.xlu0 %v737, 32
    %v739 = vpop.permute.xlu0 %738
    %v740 = vsel %vm280, %v739, 0
    %742 = vmatprep.subr.mxu0 0.0
    %743 = vmatpush1.msra.mxu0 %v259
    %744 = vmatprep.subr.mxu0 0.0
    %745 = vmatpush1.msra.mxu0 %v260
    %746 = vmatprep.subr.mxu0 0.0
    %747 = vmatpush1.msra.mxu0 %v261
    %748 = vmatprep.subr.mxu0 0.0
    %749 = vmatpush1.msra.mxu0 %v262
    %750 = vmatprep.subr.mxu0 0.0
    %751 = vmatpush1.msra.mxu0 0.0
    %752 = vmatprep.subr.mxu0 0.0
    %753 = vmatpush1.msra.mxu0 0.0
    %754 = vmatprep.subr.mxu0 0.0
    %755 = vmatpush1.msra.mxu0 0.0
    %756 = vmatprep.subr.mxu0 0.0
    %757 = vmatpush1.msra.mxu0 0.0
    %758 = vmatprep.subr.mxu0 0.0
    %759 = vmatpush1.msra.mxu0 0.0
    %760 = vmatprep.subr.mxu0 0.0
    %761 = vmatpush1.msra.mxu0 0.0
    %762 = vmatprep.subr.mxu0 0.0
    %763 = vmatpush1.msra.mxu0 0.0
    %764 = vmatprep.subr.mxu0 0.0
    %765 = vmatpush1.msra.mxu0 0.0
    %766 = vmatprep.subr.mxu0 0.0
    %767 = vmatpush1.msra.mxu0 0.0
    %768 = vmatprep.subr.mxu0 0.0
    %769 = vmatpush1.msra.mxu0 0.0
    %770 = vmatprep.subr.mxu0 0.0
    %771 = vmatpush1.msra.mxu0 0.0
    %772 = vmatprep.subr.mxu0 0.0
    %773 = vmatpush1.msra.mxu0 0.0
    %774 = vmatprep.subr.mxu0 0.0
    %775 = vmatpush1.msra.mxu0 0.0
    %776 = vmatprep.subr.mxu0 0.0
    %777 = vmatpush1.msra.mxu0 0.0
    %778 = vmatprep.subr.mxu0 0.0
    %779 = vmatpush1.msra.mxu0 0.0
    %780 = vmatprep.subr.mxu0 0.0
    %781 = vmatpush1.msra.mxu0 0.0
    %782 = vmatprep.subr.mxu0 0.0
    %783 = vmatpush1.msra.mxu0 0.0
    %784 = vmatprep.subr.mxu0 0.0
    %785 = vmatpush1.msra.mxu0 0.0
    %786 = vmatprep.subr.mxu0 0.0
    %787 = vmatpush1.msra.mxu0 0.0
    %788 = vmatprep.subr.mxu0 0.0
    %789 = vmatpush1.msra.mxu0 0.0
    %790 = vmatprep.subr.mxu0 0.0
    %791 = vmatpush1.msra.mxu0 0.0
    %792 = vmatprep.subr.mxu0 0.0
    %793 = vmatpush1.msra.mxu0 0.0
    %794 = vmatprep.subr.mxu0 0.0
    %795 = vmatpush1.msra.mxu0 0.0
    %796 = vmatprep.subr.mxu0 0.0
    %797 = vmatpush1.msra.mxu0 0.0
    %798 = vmatprep.subr.mxu0 0.0
    %799 = vmatpush1.msra.mxu0 0.0
    %800 = vmatprep.subr.mxu0 0.0
    %801 = vmatpush1.msra.mxu0 0.0
    %802 = vmatprep.subr.mxu0 0.0
    %803 = vmatpush1.msra.mxu0 0.0
    %804 = vmatprep.subr.mxu0 0.0
    %805 = vmatpush1.msra.mxu0 0.0
    %806 = vmatprep.mubr.f32.mxu0 0.0
    %807 = vmatmul.mubr.f32.gmra.mrb[0].mxu0 %v740
    %v808 = vpop.f32.mrb[0].mxu0
    %v809 = vadd.f32 0.0, %v808
    %v810 = vpop.f32.mrb[0].mxu0
    %811 = vdwg.mxu0
    %v812 = vadd.f32 %v632, %v809
    %v813 = vxor.u32 %v812, 2147483648
    %v814 = vmul.f32 %v813, 1.442695
    %v815 = vpow.pop %v814
    %v816 = vadd.f32 %v815, 1.0
    %v817 = vrcp.pop %v816
    %v818 = vmul.f32 1.0, %v817
    %v819 = vtanh.pop %v812
    %v820 = vmul.f32 %v818, %v553
    %822 = vrot.lane.b32.xlu0 %v819, 64
    %v823 = vpop.permute.xlu0 %822
    %v825 = vmul.f32 %v818, %v823
    %827 = vrot.lane.b32.xlu0 %v825, 32
    %v828 = vpop.permute.xlu0 %827
    %v830 = vadd.f32 %v820, %v828
    %v831 = vtanh.pop %v830
    %833 = vrot.lane.b32.xlu0 %v831, 64
    %v834 = vpop.permute.xlu0 %833
    %v836 = vmul.f32 %v818, %v834
    %838 = vrot.lane.b32.xlu0 %v836, 32
    %v839 = vpop.permute.xlu0 %838
    %v840 = vsel %vm280, %v839, 0
    %842 = vmatprep.subr.mxu0 0.0
    %843 = vmatpush1.msra.mxu0 %v263
    %844 = vmatprep.subr.mxu0 0.0
    %845 = vmatpush1.msra.mxu0 %v264
    %846 = vmatprep.subr.mxu0 0.0
    %847 = vmatpush1.msra.mxu0 %v265
    %848 = vmatprep.subr.mxu0 0.0
    %849 = vmatpush1.msra.mxu0 %v266
    %850 = vmatprep.subr.mxu0 0.0
    %851 = vmatpush1.msra.mxu0 0.0
    %852 = vmatprep.subr.mxu0 0.0
    %853 = vmatpush1.msra.mxu0 0.0
    %854 = vmatprep.subr.mxu0 0.0
    %855 = vmatpush1.msra.mxu0 0.0
    %856 = vmatprep.subr.mxu0 0.0
    %857 = vmatpush1.msra.mxu0 0.0
    %858 = vmatprep.subr.mxu0 0.0
    %859 = vmatpush1.msra.mxu0 0.0
    %860 = vmatprep.subr.mxu0 0.0
    %861 = vmatpush1.msra.mxu0 0.0
    %862 = vmatprep.subr.mxu0 0.0
    %863 = vmatpush1.msra.mxu0 0.0
    %864 = vmatprep.subr.mxu0 0.0
    %865 = vmatpush1.msra.mxu0 0.0
    %866 = vmatprep.subr.mxu0 0.0
    %867 = vmatpush1.msra.mxu0 0.0
    %868 = vmatprep.subr.mxu0 0.0
    %869 = vmatpush1.msra.mxu0 0.0
    %870 = vmatprep.subr.mxu0 0.0
    %871 = vmatpush1.msra.mxu0 0.0
    %872 = vmatprep.subr.mxu0 0.0
    %873 = vmatpush1.msra.mxu0 0.0
    %874 = vmatprep.subr.mxu0 0.0
    %875 = vmatpush1.msra.mxu0 0.0
    %876 = vmatprep.subr.mxu0 0.0
    %877 = vmatpush1.msra.mxu0 0.0
    %878 = vmatprep.subr.mxu0 0.0
    %879 = vmatpush1.msra.mxu0 0.0
    %880 = vmatprep.subr.mxu0 0.0
    %881 = vmatpush1.msra.mxu0 0.0
    %882 = vmatprep.subr.mxu0 0.0
    %883 = vmatpush1.msra.mxu0 0.0
    %884 = vmatprep.subr.mxu0 0.0
    %885 = vmatpush1.msra.mxu0 0.0
    %886 = vmatprep.subr.mxu0 0.0
    %887 = vmatpush1.msra.mxu0 0.0
    %888 = vmatprep.subr.mxu0 0.0
    %889 = vmatpush1.msra.mxu0 0.0
    %890 = vmatprep.subr.mxu0 0.0
    %891 = vmatpush1.msra.mxu0 0.0
    %892 = vmatprep.subr.mxu0 0.0
    %893 = vmatpush1.msra.mxu0 0.0
    %894 = vmatprep.subr.mxu0 0.0
    %895 = vmatpush1.msra.mxu0 0.0
    %896 = vmatprep.subr.mxu0 0.0
    %897 = vmatpush1.msra.mxu0 0.0
    %898 = vmatprep.subr.mxu0 0.0
    %899 = vmatpush1.msra.mxu0 0.0
    %900 = vmatprep.subr.mxu0 0.0
    %901 = vmatpush1.msra.mxu0 0.0
    %902 = vmatprep.subr.mxu0 0.0
    %903 = vmatpush1.msra.mxu0 0.0
    %904 = vmatprep.subr.mxu0 0.0
    %905 = vmatpush1.msra.mxu0 0.0
    %906 = vmatprep.mubr.f32.mxu0 0.0
    %907 = vmatmul.mubr.f32.gmra.mrb[0].mxu0 %v840
    %v908 = vpop.f32.mrb[0].mxu0
    %v909 = vadd.f32 %v272, %v908
    %v910 = vpop.f32.mrb[0].mxu0
    %911 = vdwg.mxu0
    %912 = vmatprep.subr.mxu0 0.0
    %913 = vmatpush1.msra.mxu0 %v255
    %914 = vmatprep.subr.mxu0 0.0
    %915 = vmatpush1.msra.mxu0 %v256
    %916 = vmatprep.subr.mxu0 0.0
    %917 = vmatpush1.msra.mxu0 %v257
    %918 = vmatprep.subr.mxu0 0.0
    %919 = vmatpush1.msra.mxu0 %v258
    %920 = vmatprep.subr.mxu0 0.0
    %921 = vmatpush1.msra.mxu0 0.0
    %922 = vmatprep.subr.mxu0 0.0
    %923 = vmatpush1.msra.mxu0 0.0
    %924 = vmatprep.subr.mxu0 0.0
    %925 = vmatpush1.msra.mxu0 0.0
    %926 = vmatprep.subr.mxu0 0.0
    %927 = vmatpush1.msra.mxu0 0.0
    %928 = vmatprep.subr.mxu0 0.0
    %929 = vmatpush1.msra.mxu0 0.0
    %930 = vmatprep.subr.mxu0 0.0
    %931 = vmatpush1.msra.mxu0 0.0
    %932 = vmatprep.subr.mxu0 0.0
    %933 = vmatpush1.msra.mxu0 0.0
    %934 = vmatprep.subr.mxu0 0.0
    %935 = vmatpush1.msra.mxu0 0.0
    %936 = vmatprep.subr.mxu0 0.0
    %937 = vmatpush1.msra.mxu0 0.0
    %938 = vmatprep.subr.mxu0 0.0
    %939 = vmatpush1.msra.mxu0 0.0
    %940 = vmatprep.subr.mxu0 0.0
    %941 = vmatpush1.msra.mxu0 0.0
    %942 = vmatprep.subr.mxu0 0.0
    %943 = vmatpush1.msra.mxu0 0.0
    %944 = vmatprep.subr.mxu0 0.0
    %945 = vmatpush1.msra.mxu0 0.0
    %946 = vmatprep.subr.mxu0 0.0
    %947 = vmatpush1.msra.mxu0 0.0
    %948 = vmatprep.subr.mxu0 0.0
    %949 = vmatpush1.msra.mxu0 0.0
    %950 = vmatprep.subr.mxu0 0.0
    %951 = vmatpush1.msra.mxu0 0.0
    %952 = vmatprep.subr.mxu0 0.0
    %953 = vmatpush1.msra.mxu0 0.0
    %954 = vmatprep.subr.mxu0 0.0
    %955 = vmatpush1.msra.mxu0 0.0
    %956 = vmatprep.subr.mxu0 0.0
    %957 = vmatpush1.msra.mxu0 0.0
    %958 = vmatprep.subr.mxu0 0.0
    %959 = vmatpush1.msra.mxu0 0.0
    %960 = vmatprep.subr.mxu0 0.0
    %961 = vmatpush1.msra.mxu0 0.0
    %962 = vmatprep.subr.mxu0 0.0
    %963 = vmatpush1.msra.mxu0 0.0
    %964 = vmatprep.subr.mxu0 0.0
    %965 = vmatpush1.msra.mxu0 0.0
    %966 = vmatprep.subr.mxu0 0.0
    %967 = vmatpush1.msra.mxu0 0.0
    %968 = vmatprep.subr.mxu0 0.0
    %969 = vmatpush1.msra.mxu0 0.0
    %970 = vmatprep.subr.mxu0 0.0
    %971 = vmatpush1.msra.mxu0 0.0
    %972 = vmatprep.subr.mxu0 0.0
    %973 = vmatpush1.msra.mxu0 0.0
    %974 = vmatprep.subr.mxu0 0.0
    %975 = vmatpush1.msra.mxu0 0.0
    %976 = vmatprep.mubr.f32.mxu0 0.0
    %977 = vmatmul.mubr.f32.gmra.mrb[0].mxu0 %v740
    %v978 = vpop.f32.mrb[0].mxu0
    %v979 = vadd.f32 0.0, %v978
    %v980 = vpop.f32.mrb[0].mxu0
    %981 = vdwg.mxu0
    %v983 = vrot.slane %v979, 4
    %v985 = vadd.f32 %v253, %v983
    %v986 = vxor.u32 %v985, 2147483648
    %v987 = vmul.f32 %v986, 1.442695
    %v988 = vpow.pop %v987
    %v989 = vadd.f32 %v988, 1.0
    %v990 = vrcp.pop %v989
    %v991 = vmul.f32 1.0, %v990
    %v992 = vtanh.pop %v985
    %v994 = vrot.slane %v729, 6
    %v996 = vmul.f32 %v991, %v994
    %998 = vrot.lane.b32.xlu0 %v992, 64
    %v999 = vpop.permute.xlu0 %998
    %v1001 = vmul.f32 %v991, %v999
    %1003 = vrot.lane.b32.xlu0 %v1001, 32
    %v1004 = vpop.permute.xlu0 %1003
    %v1006 = vadd.f32 %v996, %v1004
    %v1007 = vtanh.pop %v1006
    %1009 = vrot.lane.b32.xlu0 %v1007, 64
    %v1010 = vpop.permute.xlu0 %1009
    %v1012 = vmul.f32 %v991, %v1010
    %v1014 = vrot.slane %v1012, 4
    %1015 = vrot.lane.b32.xlu0 %v1014, 32
    %v1016 = vpop.permute.xlu0 %1015
    %v1017 = vsel %vm280, %v1016, 0
    %1019 = vmatprep.subr.mxu0 0.0
    %1020 = vmatpush1.msra.mxu0 %v259
    %1021 = vmatprep.subr.mxu0 0.0
    %1022 = vmatpush1.msra.mxu0 %v260
    %1023 = vmatprep.subr.mxu0 0.0
    %1024 = vmatpush1.msra.mxu0 %v261
    %1025 = vmatprep.subr.mxu0 0.0
    %1026 = vmatpush1.msra.mxu0 %v262
    %1027 = vmatprep.subr.mxu0 0.0
    %1028 = vmatpush1.msra.mxu0 0.0
    %1029 = vmatprep.subr.mxu0 0.0
    %1030 = vmatpush1.msra.mxu0 0.0
    %1031 = vmatprep.subr.mxu0 0.0
    %1032 = vmatpush1.msra.mxu0 0.0
    %1033 = vmatprep.subr.mxu0 0.0
    %1034 = vmatpush1.msra.mxu0 0.0
    %1035 = vmatprep.subr.mxu0 0.0
    %1036 = vmatpush1.msra.mxu0 0.0
    %1037 = vmatprep.subr.mxu0 0.0
    %1038 = vmatpush1.msra.mxu0 0.0
    %1039 = vmatprep.subr.mxu0 0.0
    %1040 = vmatpush1.msra.mxu0 0.0
    %1041 = vmatprep.subr.mxu0 0.0
    %1042 = vmatpush1.msra.mxu0 0.0
    %1043 = vmatprep.subr.mxu0 0.0
    %1044 = vmatpush1.msra.mxu0 0.0
    %1045 = vmatprep.subr.mxu0 0.0
    %1046 = vmatpush1.msra.mxu0 0.0
    %1047 = vmatprep.subr.mxu0 0.0
    %1048 = vmatpush1.msra.mxu0 0.0
    %1049 = vmatprep.subr.mxu0 0.0
    %1050 = vmatpush1.msra.mxu0 0.0
    %1051 = vmatprep.subr.mxu0 0.0
    %1052 = vmatpush1.msra.mxu0 0.0
    %1053 = vmatprep.subr.mxu0 0.0
    %1054 = vmatpush1.msra.mxu0 0.0
    %1055 = vmatprep.subr.mxu0 0.0
    %1056 = vmatpush1.msra.mxu0 0.0
    %1057 = vmatprep.subr.mxu0 0.0
    %1058 = vmatpush1.msra.mxu0 0.0
    %1059 = vmatprep.subr.mxu0 0.0
    %1060 = vmatpush1.msra.mxu0 0.0
    %1061 = vmatprep.subr.mxu0 0.0
    %1062 = vmatpush1.msra.mxu0 0.0
    %1063 = vmatprep.subr.mxu0 0.0
    %1064 = vmatpush1.msra.mxu0 0.0
    %1065 = vmatprep.subr.mxu0 0.0
    %1066 = vmatpush1.msra.mxu0 0.0
    %1067 = vmatprep.subr.mxu0 0.0
    %1068 = vmatpush1.msra.mxu0 0.0
    %1069 = vmatprep.subr.mxu0 0.0
    %1070 = vmatpush1.msra.mxu0 0.0
    %1071 = vmatprep.subr.mxu0 0.0
    %1072 = vmatpush1.msra.mxu0 0.0
    %1073 = vmatprep.subr.mxu0 0.0
    %1074 = vmatpush1.msra.mxu0 0.0
    %1075 = vmatprep.subr.mxu0 0.0
    %1076 = vmatpush1.msra.mxu0 0.0
    %1077 = vmatprep.subr.mxu0 0.0
    %1078 = vmatpush1.msra.mxu0 0.0
    %1079 = vmatprep.subr.mxu0 0.0
    %1080 = vmatpush1.msra.mxu0 0.0
    %1081 = vmatprep.subr.mxu0 0.0
    %1082 = vmatpush1.msra.mxu0 0.0
    %1083 = vmatprep.mubr.f32.mxu0 0.0
    %1084 = vmatmul.mubr.f32.gmra.mrb[0].mxu0 %v1017
    %v1085 = vpop.f32.mrb[0].mxu0
    %v1086 = vadd.f32 0.0, %v1085
    %v1087 = vpop.f32.mrb[0].mxu0
    %1088 = vdwg.mxu0
    %v1089 = vadd.f32 %v909, %v1086
    %v1090 = vxor.u32 %v1089, 2147483648
    %v1091 = vmul.f32 %v1090, 1.442695
    %v1092 = vpow.pop %v1091
    %v1093 = vadd.f32 %v1092, 1.0
    %v1094 = vrcp.pop %v1093
    %v1095 = vmul.f32 1.0, %v1094
    %v1096 = vtanh.pop %v1089
    %v1097 = vmul.f32 %v1095, %v830
    %1099 = vrot.lane.b32.xlu0 %v1096, 64
    %v1100 = vpop.permute.xlu0 %1099
    %v1102 = vmul.f32 %v1095, %v1100
    %1104 = vrot.lane.b32.xlu0 %v1102, 32
    %v1105 = vpop.permute.xlu0 %1104
    %v1107 = vadd.f32 %v1097, %v1105
    %v1108 = vtanh.pop %v1107
    %1110 = vrot.lane.b32.xlu0 %v1108, 64
    %v1111 = vpop.permute.xlu0 %1110
    %v1113 = vmul.f32 %v1095, %v1111
    %1115 = vrot.lane.b32.xlu0 %v1113, 32
    %v1116 = vpop.permute.xlu0 %1115
    %v1117 = vsel %vm280, %v1116, 0
    %1119 = vmatprep.subr.mxu0 0.0
    %1120 = vmatpush1.msra.mxu0 %v263
    %1121 = vmatprep.subr.mxu0 0.0
    %1122 = vmatpush1.msra.mxu0 %v264
    %1123 = vmatprep.subr.mxu0 0.0
    %1124 = vmatpush1.msra.mxu0 %v265
    %1125 = vmatprep.subr.mxu0 0.0
    %1126 = vmatpush1.msra.mxu0 %v266
    %1127 = vmatprep.subr.mxu0 0.0
    %1128 = vmatpush1.msra.mxu0 0.0
    %1129 = vmatprep.subr.mxu0 0.0
    %1130 = vmatpush1.msra.mxu0 0.0
    %1131 = vmatprep.subr.mxu0 0.0
    %1132 = vmatpush1.msra.mxu0 0.0
    %1133 = vmatprep.subr.mxu0 0.0
    %1134 = vmatpush1.msra.mxu0 0.0
    %1135 = vmatprep.subr.mxu0 0.0
    %1136 = vmatpush1.msra.mxu0 0.0
    %1137 = vmatprep.subr.mxu0 0.0
    %1138 = vmatpush1.msra.mxu0 0.0
    %1139 = vmatprep.subr.mxu0 0.0
    %1140 = vmatpush1.msra.mxu0 0.0
    %1141 = vmatprep.subr.mxu0 0.0
    %1142 = vmatpush1.msra.mxu0 0.0
    %1143 = vmatprep.subr.mxu0 0.0
    %1144 = vmatpush1.msra.mxu0 0.0
    %1145 = vmatprep.subr.mxu0 0.0
    %1146 = vmatpush1.msra.mxu0 0.0
    %1147 = vmatprep.subr.mxu0 0.0
    %1148 = vmatpush1.msra.mxu0 0.0
    %1149 = vmatprep.subr.mxu0 0.0
    %1150 = vmatpush1.msra.mxu0 0.0
    %1151 = vmatprep.subr.mxu0 0.0
    %1152 = vmatpush1.msra.mxu0 0.0
    %1153 = vmatprep.subr.mxu0 0.0
    %1154 = vmatpush1.msra.mxu0 0.0
    %1155 = vmatprep.subr.mxu0 0.0
    %1156 = vmatpush1.msra.mxu0 0.0
    %1157 = vmatprep.subr.mxu0 0.0
    %1158 = vmatpush1.msra.mxu0 0.0
    %1159 = vmatprep.subr.mxu0 0.0
    %1160 = vmatpush1.msra.mxu0 0.0
    %1161 = vmatprep.subr.mxu0 0.0
    %1162 = vmatpush1.msra.mxu0 0.0
    %1163 = vmatprep.subr.mxu0 0.0
    %1164 = vmatpush1.msra.mxu0 0.0
    %1165 = vmatprep.subr.mxu0 0.0
    %1166 = vmatpush1.msra.mxu0 0.0
    %1167 = vmatprep.subr.mxu0 0.0
    %1168 = vmatpush1.msra.mxu0 0.0
    %1169 = vmatprep.subr.mxu0 0.0
    %1170 = vmatpush1.msra.mxu0 0.0
    %1171 = vmatprep.subr.mxu0 0.0
    %1172 = vmatpush1.msra.mxu0 0.0
    %1173 = vmatprep.subr.mxu0 0.0
    %1174 = vmatpush1.msra.mxu0 0.0
    %1175 = vmatprep.subr.mxu0 0.0
    %1176 = vmatpush1.msra.mxu0 0.0
    %1177 = vmatprep.subr.mxu0 0.0
    %1178 = vmatpush1.msra.mxu0 0.0
    %1179 = vmatprep.subr.mxu0 0.0
    %1180 = vmatpush1.msra.mxu0 0.0
    %1181 = vmatprep.subr.mxu0 0.0
    %1182 = vmatpush1.msra.mxu0 0.0
    %1183 = vmatprep.mubr.f32.mxu0 0.0
    %1184 = vmatmul.mubr.f32.gmra.mrb[0].mxu0 %v1117
    %v1185 = vpop.f32.mrb[0].mxu0
    %v1186 = vadd.f32 %v272, %v1185
    %v1187 = vpop.f32.mrb[0].mxu0
    %1188 = vdwg.mxu0
    %1189 = vmatprep.subr.mxu0 0.0
    %1190 = vmatpush1.msra.mxu0 %v255
    %1191 = vmatprep.subr.mxu0 0.0
    %1192 = vmatpush1.msra.mxu0 %v256
    %1193 = vmatprep.subr.mxu0 0.0
    %1194 = vmatpush1.msra.mxu0 %v257
    %1195 = vmatprep.subr.mxu0 0.0
    %1196 = vmatpush1.msra.mxu0 %v258
    %1197 = vmatprep.subr.mxu0 0.0
    %1198 = vmatpush1.msra.mxu0 0.0
    %1199 = vmatprep.subr.mxu0 0.0
    %1200 = vmatpush1.msra.mxu0 0.0
    %1201 = vmatprep.subr.mxu0 0.0
    %1202 = vmatpush1.msra.mxu0 0.0
    %1203 = vmatprep.subr.mxu0 0.0
    %1204 = vmatpush1.msra.mxu0 0.0
    %1205 = vmatprep.subr.mxu0 0.0
    %1206 = vmatpush1.msra.mxu0 0.0
    %1207 = vmatprep.subr.mxu0 0.0
    %1208 = vmatpush1.msra.mxu0 0.0
    %1209 = vmatprep.subr.mxu0 0.0
    %1210 = vmatpush1.msra.mxu0 0.0
    %1211 = vmatprep.subr.mxu0 0.0
    %1212 = vmatpush1.msra.mxu0 0.0
    %1213 = vmatprep.subr.mxu0 0.0
    %1214 = vmatpush1.msra.mxu0 0.0
    %1215 = vmatprep.subr.mxu0 0.0
    %1216 = vmatpush1.msra.mxu0 0.0
    %1217 = vmatprep.subr.mxu0 0.0
    %1218 = vmatpush1.msra.mxu0 0.0
    %1219 = vmatprep.subr.mxu0 0.0
    %1220 = vmatpush1.msra.mxu0 0.0
    %1221 = vmatprep.subr.mxu0 0.0
    %1222 = vmatpush1.msra.mxu0 0.0
    %1223 = vmatprep.subr.mxu0 0.0
    %1224 = vmatpush1.msra.mxu0 0.0
    %1225 = vmatprep.subr.mxu0 0.0
    %1226 = vmatpush1.msra.mxu0 0.0
    %1227 = vmatprep.subr.mxu0 0.0
    %1228 = vmatpush1.msra.mxu0 0.0
    %1229 = vmatprep.subr.mxu0 0.0
    %1230 = vmatpush1.msra.mxu0 0.0
    %1231 = vmatprep.subr.mxu0 0.0
    %1232 = vmatpush1.msra.mxu0 0.0
    %1233 = vmatprep.subr.mxu0 0.0
    %1234 = vmatpush1.msra.mxu0 0.0
    %1235 = vmatprep.subr.mxu0 0.0
    %1236 = vmatpush1.msra.mxu0 0.0
    %1237 = vmatprep.subr.mxu0 0.0
    %1238 = vmatpush1.msra.mxu0 0.0
    %1239 = vmatprep.subr.mxu0 0.0
    %1240 = vmatpush1.msra.mxu0 0.0
    %1241 = vmatprep.subr.mxu0 0.0
    %1242 = vmatpush1.msra.mxu0 0.0
    %1243 = vmatprep.subr.mxu0 0.0
    %1244 = vmatpush1.msra.mxu0 0.0
    %1245 = vmatprep.subr.mxu0 0.0
    %1246 = vmatpush1.msra.mxu0 0.0
    %1247 = vmatprep.subr.mxu0 0.0
    %1248 = vmatpush1.msra.mxu0 0.0
    %1249 = vmatprep.subr.mxu0 0.0
    %1250 = vmatpush1.msra.mxu0 0.0
    %1251 = vmatprep.subr.mxu0 0.0
    %1252 = vmatpush1.msra.mxu0 0.0
    %1253 = vmatprep.mubr.f32.mxu0 0.0
    %1254 = vmatmul.mubr.f32.gmra.mrb[0].mxu0 %v1017
    %v1255 = vpop.f32.mrb[0].mxu0
    %v1256 = vadd.f32 0.0, %v1255
    %v1257 = vpop.f32.mrb[0].mxu0
    %1258 = vdwg.mxu0
    %v1260 = vrot.slane %v1256, 2
    %v1262 = vadd.f32 %v253, %v1260
    %v1263 = vxor.u32 %v1262, 2147483648
    %v1264 = vmul.f32 %v1263, 1.442695
    %v1265 = vpow.pop %v1264
    %v1266 = vadd.f32 %v1265, 1.0
    %v1267 = vrcp.pop %v1266
    %v1268 = vmul.f32 1.0, %v1267
    %v1269 = vtanh.pop %v1262
    %v1271 = vrot.slane %v1006, 6
    %v1273 = vmul.f32 %v1268, %v1271
    %1275 = vrot.lane.b32.xlu0 %v1269, 64
    %v1276 = vpop.permute.xlu0 %1275
    %v1278 = vmul.f32 %v1268, %v1276
    %1280 = vrot.lane.b32.xlu0 %v1278, 32
    %v1281 = vpop.permute.xlu0 %1280
    %v1283 = vadd.f32 %v1273, %v1281
    %v1284 = vtanh.pop %v1283
    %1286 = vrot.lane.b32.xlu0 %v1284, 64
    %v1287 = vpop.permute.xlu0 %1286
    %v1289 = vmul.f32 %v1268, %v1287
    %v1291 = vrot.slane %v1289, 6
    %1292 = vrot.lane.b32.xlu0 %v1291, 32
    %v1293 = vpop.permute.xlu0 %1292
    %v1294 = vsel %vm280, %v1293, 0
    %1296 = vmatprep.subr.mxu0 0.0
    %1297 = vmatpush1.msra.mxu0 %v259
    %1298 = vmatprep.subr.mxu0 0.0
    %1299 = vmatpush1.msra.mxu0 %v260
    %1300 = vmatprep.subr.mxu0 0.0
    %1301 = vmatpush1.msra.mxu0 %v261
    %1302 = vmatprep.subr.mxu0 0.0
    %1303 = vmatpush1.msra.mxu0 %v262
    %1304 = vmatprep.subr.mxu0 0.0
    %1305 = vmatpush1.msra.mxu0 0.0
    %1306 = vmatprep.subr.mxu0 0.0
    %1307 = vmatpush1.msra.mxu0 0.0
    %1308 = vmatprep.subr.mxu0 0.0
    %1309 = vmatpush1.msra.mxu0 0.0
    %1310 = vmatprep.subr.mxu0 0.0
    %1311 = vmatpush1.msra.mxu0 0.0
    %1312 = vmatprep.subr.mxu0 0.0
    %1313 = vmatpush1.msra.mxu0 0.0
    %1314 = vmatprep.subr.mxu0 0.0
    %1315 = vmatpush1.msra.mxu0 0.0
    %1316 = vmatprep.subr.mxu0 0.0
    %1317 = vmatpush1.msra.mxu0 0.0
    %1318 = vmatprep.subr.mxu0 0.0
    %1319 = vmatpush1.msra.mxu0 0.0
    %1320 = vmatprep.subr.mxu0 0.0
    %1321 = vmatpush1.msra.mxu0 0.0
    %1322 = vmatprep.subr.mxu0 0.0
    %1323 = vmatpush1.msra.mxu0 0.0
    %1324 = vmatprep.subr.mxu0 0.0
    %1325 = vmatpush1.msra.mxu0 0.0
    %1326 = vmatprep.subr.mxu0 0.0
    %1327 = vmatpush1.msra.mxu0 0.0
    %1328 = vmatprep.subr.mxu0 0.0
    %1329 = vmatpush1.msra.mxu0 0.0
    %1330 = vmatprep.subr.mxu0 0.0
    %1331 = vmatpush1.msra.mxu0 0.0
    %1332 = vmatprep.subr.mxu0 0.0
    %1333 = vmatpush1.msra.mxu0 0.0
    %1334 = vmatprep.subr.mxu0 0.0
    %1335 = vmatpush1.msra.mxu0 0.0
    %1336 = vmatprep.subr.mxu0 0.0
    %1337 = vmatpush1.msra.mxu0 0.0
    %1338 = vmatprep.subr.mxu0 0.0
    %1339 = vmatpush1.msra.mxu0 0.0
    %1340 = vmatprep.subr.mxu0 0.0
    %1341 = vmatpush1.msra.mxu0 0.0
    %1342 = vmatprep.subr.mxu0 0.0
    %1343 = vmatpush1.msra.mxu0 0.0
    %1344 = vmatprep.subr.mxu0 0.0
    %1345 = vmatpush1.msra.mxu0 0.0
    %1346 = vmatprep.subr.mxu0 0.0
    %1347 = vmatpush1.msra.mxu0 0.0
    %1348 = vmatprep.subr.mxu0 0.0
    %1349 = vmatpush1.msra.mxu0 0.0
    %1350 = vmatprep.subr.mxu0 0.0
    %1351 = vmatpush1.msra.mxu0 0.0
    %1352 = vmatprep.subr.mxu0 0.0
    %1353 = vmatpush1.msra.mxu0 0.0
    %1354 = vmatprep.subr.mxu0 0.0
    %1355 = vmatpush1.msra.mxu0 0.0
    %1356 = vmatprep.subr.mxu0 0.0
    %1357 = vmatpush1.msra.mxu0 0.0
    %1358 = vmatprep.subr.mxu0 0.0
    %1359 = vmatpush1.msra.mxu0 0.0
    %1360 = vmatprep.mubr.f32.mxu0 0.0
    %1361 = vmatmul.mubr.f32.gmra.mrb[0].mxu0 %v1294
    %v1362 = vpop.f32.mrb[0].mxu0
    %v1363 = vadd.f32 0.0, %v1362
    %v1364 = vpop.f32.mrb[0].mxu0
    %1365 = vdwg.mxu0
    %v1366 = vadd.f32 %v1186, %v1363
    %v1367 = vxor.u32 %v1366, 2147483648
    %v1368 = vmul.f32 %v1367, 1.442695
    %v1369 = vpow.pop %v1368
    %v1370 = vadd.f32 %v1369, 1.0
    %v1371 = vrcp.pop %v1370
    %v1372 = vmul.f32 1.0, %v1371
    %v1373 = vtanh.pop %v1366
    %v1374 = vmul.f32 %v1372, %v1107
    %1376 = vrot.lane.b32.xlu0 %v1373, 64
    %v1377 = vpop.permute.xlu0 %1376
    %v1379 = vmul.f32 %v1372, %v1377
    %1381 = vrot.lane.b32.xlu0 %v1379, 32
    %v1382 = vpop.permute.xlu0 %1381
    %v1384 = vadd.f32 %v1374, %v1382
    %v1385 = vtanh.pop %v1384
    %1387 = vrot.lane.b32.xlu0 %v1385, 64
    %v1388 = vpop.permute.xlu0 %1387
    %v1390 = vmul.f32 %v1372, %v1388
    %1392 = vrot.lane.b32.xlu0 %v1390, 32
    %v1393 = vpop.permute.xlu0 %1392
    %v1394 = vsel %vm280, %v1393, 0
    %1396 = vmatprep.subr.mxu0 0.0
    %1397 = vmatpush1.msra.mxu0 %v263
    %1398 = vmatprep.subr.mxu0 0.0
    %1399 = vmatpush1.msra.mxu0 %v264
    %1400 = vmatprep.subr.mxu0 0.0
    %1401 = vmatpush1.msra.mxu0 %v265
    %1402 = vmatprep.subr.mxu0 0.0
    %1403 = vmatpush1.msra.mxu0 %v266
    %1404 = vmatprep.subr.mxu0 0.0
    %1405 = vmatpush1.msra.mxu0 0.0
    %1406 = vmatprep.subr.mxu0 0.0
    %1407 = vmatpush1.msra.mxu0 0.0
    %1408 = vmatprep.subr.mxu0 0.0
    %1409 = vmatpush1.msra.mxu0 0.0
    %1410 = vmatprep.subr.mxu0 0.0
    %1411 = vmatpush1.msra.mxu0 0.0
    %1412 = vmatprep.subr.mxu0 0.0
    %1413 = vmatpush1.msra.mxu0 0.0
    %1414 = vmatprep.subr.mxu0 0.0
    %1415 = vmatpush1.msra.mxu0 0.0
    %1416 = vmatprep.subr.mxu0 0.0
    %1417 = vmatpush1.msra.mxu0 0.0
    %1418 = vmatprep.subr.mxu0 0.0
    %1419 = vmatpush1.msra.mxu0 0.0
    %1420 = vmatprep.subr.mxu0 0.0
    %1421 = vmatpush1.msra.mxu0 0.0
    %1422 = vmatprep.subr.mxu0 0.0
    %1423 = vmatpush1.msra.mxu0 0.0
    %1424 = vmatprep.subr.mxu0 0.0
    %1425 = vmatpush1.msra.mxu0 0.0
    %1426 = vmatprep.subr.mxu0 0.0
    %1427 = vmatpush1.msra.mxu0 0.0
    %1428 = vmatprep.subr.mxu0 0.0
    %1429 = vmatpush1.msra.mxu0 0.0
    %1430 = vmatprep.subr.mxu0 0.0
    %1431 = vmatpush1.msra.mxu0 0.0
    %1432 = vmatprep.subr.mxu0 0.0
    %1433 = vmatpush1.msra.mxu0 0.0
    %1434 = vmatprep.subr.mxu0 0.0
    %1435 = vmatpush1.msra.mxu0 0.0
    %1436 = vmatprep.subr.mxu0 0.0
    %1437 = vmatpush1.msra.mxu0 0.0
    %1438 = vmatprep.subr.mxu0 0.0
    %1439 = vmatpush1.msra.mxu0 0.0
    %1440 = vmatprep.subr.mxu0 0.0
    %1441 = vmatpush1.msra.mxu0 0.0
    %1442 = vmatprep.subr.mxu0 0.0
    %1443 = vmatpush1.msra.mxu0 0.0
    %1444 = vmatprep.subr.mxu0 0.0
    %1445 = vmatpush1.msra.mxu0 0.0
    %1446 = vmatprep.subr.mxu0 0.0
    %1447 = vmatpush1.msra.mxu0 0.0
    %1448 = vmatprep.subr.mxu0 0.0
    %1449 = vmatpush1.msra.mxu0 0.0
    %1450 = vmatprep.subr.mxu0 0.0
    %1451 = vmatpush1.msra.mxu0 0.0
    %1452 = vmatprep.subr.mxu0 0.0
    %1453 = vmatpush1.msra.mxu0 0.0
    %1454 = vmatprep.subr.mxu0 0.0
    %1455 = vmatpush1.msra.mxu0 0.0
    %1456 = vmatprep.subr.mxu0 0.0
    %1457 = vmatpush1.msra.mxu0 0.0
    %1458 = vmatprep.subr.mxu0 0.0
    %1459 = vmatpush1.msra.mxu0 0.0
    %1460 = vmatprep.mubr.f32.mxu0 0.0
    %1461 = vmatmul.mubr.f32.gmra.mrb[0].mxu0 %v1394
    %v1462 = vpop.f32.mrb[0].mxu0
    %v1463 = vadd.f32 %v272, %v1462
    %v1464 = vpop.f32.mrb[0].mxu0
    %1465 = vdwg.mxu0
    %1466 = vmatprep.subr.mxu0 0.0
    %1467 = vmatpush1.msra.mxu0 %v255
    %1468 = vmatprep.subr.mxu0 0.0
    %1469 = vmatpush1.msra.mxu0 %v256
    %1470 = vmatprep.subr.mxu0 0.0
    %1471 = vmatpush1.msra.mxu0 %v257
    %1472 = vmatprep.subr.mxu0 0.0
    %1473 = vmatpush1.msra.mxu0 %v258
    %1474 = vmatprep.subr.mxu0 0.0
    %1475 = vmatpush1.msra.mxu0 0.0
    %1476 = vmatprep.subr.mxu0 0.0
    %1477 = vmatpush1.msra.mxu0 0.0
    %1478 = vmatprep.subr.mxu0 0.0
    %1479 = vmatpush1.msra.mxu0 0.0
    %1480 = vmatprep.subr.mxu0 0.0
    %1481 = vmatpush1.msra.mxu0 0.0
    %1482 = vmatprep.subr.mxu0 0.0
    %1483 = vmatpush1.msra.mxu0 0.0
    %1484 = vmatprep.subr.mxu0 0.0
    %1485 = vmatpush1.msra.mxu0 0.0
    %1486 = vmatprep.subr.mxu0 0.0
    %1487 = vmatpush1.msra.mxu0 0.0
    %1488 = vmatprep.subr.mxu0 0.0
    %1489 = vmatpush1.msra.mxu0 0.0
    %1490 = vmatprep.subr.mxu0 0.0
    %1491 = vmatpush1.msra.mxu0 0.0
    %1492 = vmatprep.subr.mxu0 0.0
    %1493 = vmatpush1.msra.mxu0 0.0
    %1494 = vmatprep.subr.mxu0 0.0
    %1495 = vmatpush1.msra.mxu0 0.0
    %1496 = vmatprep.subr.mxu0 0.0
    %1497 = vmatpush1.msra.mxu0 0.0
    %1498 = vmatprep.subr.mxu0 0.0
    %1499 = vmatpush1.msra.mxu0 0.0
    %1500 = vmatprep.subr.mxu0 0.0
    %1501 = vmatpush1.msra.mxu0 0.0
    %1502 = vmatprep.subr.mxu0 0.0
    %1503 = vmatpush1.msra.mxu0 0.0
    %1504 = vmatprep.subr.mxu0 0.0
    %1505 = vmatpush1.msra.mxu0 0.0
    %1506 = vmatprep.subr.mxu0 0.0
    %1507 = vmatpush1.msra.mxu0 0.0
    %1508 = vmatprep.subr.mxu0 0.0
    %1509 = vmatpush1.msra.mxu0 0.0
    %1510 = vmatprep.subr.mxu0 0.0
    %1511 = vmatpush1.msra.mxu0 0.0
    %1512 = vmatprep.subr.mxu0 0.0
    %1513 = vmatpush1.msra.mxu0 0.0
    %1514 = vmatprep.subr.mxu0 0.0
    %1515 = vmatpush1.msra.mxu0 0.0
    %1516 = vmatprep.subr.mxu0 0.0
    %1517 = vmatpush1.msra.mxu0 0.0
    %1518 = vmatprep.subr.mxu0 0.0
    %1519 = vmatpush1.msra.mxu0 0.0
    %1520 = vmatprep.subr.mxu0 0.0
    %1521 = vmatpush1.msra.mxu0 0.0
    %1522 = vmatprep.subr.mxu0 0.0
    %1523 = vmatpush1.msra.mxu0 0.0
    %1524 = vmatprep.subr.mxu0 0.0
    %1525 = vmatpush1.msra.mxu0 0.0
    %1526 = vmatprep.subr.mxu0 0.0
    %1527 = vmatpush1.msra.mxu0 0.0
    %1528 = vmatprep.subr.mxu0 0.0
    %1529 = vmatpush1.msra.mxu0 0.0
    %1530 = vmatprep.mubr.f32.mxu0 0.0
    %1531 = vmatmul.mubr.f32.gmra.mrb[0].mxu0 %v1294
    %v1532 = vpop.f32.mrb[0].mxu0
    %v1533 = vadd.f32 0.0, %v1532
    %v1534 = vpop.f32.mrb[0].mxu0
    %1535 = vdwg.mxu0
    %v1536 = vadd.f32 %v254, %v1533
    %v1537 = vxor.u32 %v1536, 2147483648
    %v1538 = vmul.f32 %v1537, 1.442695
    %v1539 = vpow.pop %v1538
    %v1540 = vadd.f32 %v1539, 1.0
    %v1541 = vrcp.pop %v1540
    %v1542 = vmul.f32 1.0, %v1541
    %v1543 = vtanh.pop %v1536
    %v1545 = vrot.slane %v1283, 6
    %v1547 = vmul.f32 %v1542, %v1545
    %1549 = vrot.lane.b32.xlu0 %v1543, 64
    %v1550 = vpop.permute.xlu0 %1549
    %v1552 = vmul.f32 %v1542, %v1550
    %1554 = vrot.lane.b32.xlu0 %v1552, 32
    %v1555 = vpop.permute.xlu0 %1554
    %v1557 = vadd.f32 %v1547, %v1555
    %v1558 = vtanh.pop %v1557
    %1560 = vrot.lane.b32.xlu0 %v1558, 64
    %v1561 = vpop.permute.xlu0 %1560
    %v1563 = vmul.f32 %v1542, %v1561
    %1565 = vrot.lane.b32.xlu0 %v1563, 32
    %v1566 = vpop.permute.xlu0 %1565
    %v1567 = vsel %vm280, %v1566, 0
    %1569 = vmatprep.subr.mxu0 0.0
    %1570 = vmatpush1.msra.mxu0 %v259
    %1571 = vmatprep.subr.mxu0 0.0
    %1572 = vmatpush1.msra.mxu0 %v260
    %1573 = vmatprep.subr.mxu0 0.0
    %1574 = vmatpush1.msra.mxu0 %v261
    %1575 = vmatprep.subr.mxu0 0.0
    %1576 = vmatpush1.msra.mxu0 %v262
    %1577 = vmatprep.subr.mxu0 0.0
    %1578 = vmatpush1.msra.mxu0 0.0
    %1579 = vmatprep.subr.mxu0 0.0
    %1580 = vmatpush1.msra.mxu0 0.0
    %1581 = vmatprep.subr.mxu0 0.0
    %1582 = vmatpush1.msra.mxu0 0.0
    %1583 = vmatprep.subr.mxu0 0.0
    %1584 = vmatpush1.msra.mxu0 0.0
    %1585 = vmatprep.subr.mxu0 0.0
    %1586 = vmatpush1.msra.mxu0 0.0
    %1587 = vmatprep.subr.mxu0 0.0
    %1588 = vmatpush1.msra.mxu0 0.0
    %1589 = vmatprep.subr.mxu0 0.0
    %1590 = vmatpush1.msra.mxu0 0.0
    %1591 = vmatprep.subr.mxu0 0.0
    %1592 = vmatpush1.msra.mxu0 0.0
    %1593 = vmatprep.subr.mxu0 0.0
    %1594 = vmatpush1.msra.mxu0 0.0
    %1595 = vmatprep.subr.mxu0 0.0
    %1596 = vmatpush1.msra.mxu0 0.0
    %1597 = vmatprep.subr.mxu0 0.0
    %1598 = vmatpush1.msra.mxu0 0.0
    %1599 = vmatprep.subr.mxu0 0.0
    %1600 = vmatpush1.msra.mxu0 0.0
    %1601 = vmatprep.subr.mxu0 0.0
    %1602 = vmatpush1.msra.mxu0 0.0
    %1603 = vmatprep.subr.mxu0 0.0
    %1604 = vmatpush1.msra.mxu0 0.0
    %1605 = vmatprep.subr.mxu0 0.0
    %1606 = vmatpush1.msra.mxu0 0.0
    %1607 = vmatprep.subr.mxu0 0.0
    %1608 = vmatpush1.msra.mxu0 0.0
    %1609 = vmatprep.subr.mxu0 0.0
    %1610 = vmatpush1.msra.mxu0 0.0
    %1611 = vmatprep.subr.mxu0 0.0
    %1612 = vmatpush1.msra.mxu0 0.0
    %1613 = vmatprep.subr.mxu0 0.0
    %1614 = vmatpush1.msra.mxu0 0.0
    %1615 = vmatprep.subr.mxu0 0.0
    %1616 = vmatpush1.msra.mxu0 0.0
    %1617 = vmatprep.subr.mxu0 0.0
    %1618 = vmatpush1.msra.mxu0 0.0
    %1619 = vmatprep.subr.mxu0 0.0
    %1620 = vmatpush1.msra.mxu0 0.0
    %1621 = vmatprep.subr.mxu0 0.0
    %1622 = vmatpush1.msra.mxu0 0.0
    %1623 = vmatprep.subr.mxu0 0.0
    %1624 = vmatpush1.msra.mxu0 0.0
    %1625 = vmatprep.subr.mxu0 0.0
    %1626 = vmatpush1.msra.mxu0 0.0
    %1627 = vmatprep.subr.mxu0 0.0
    %1628 = vmatpush1.msra.mxu0 0.0
    %1629 = vmatprep.subr.mxu0 0.0
    %1630 = vmatpush1.msra.mxu0 0.0
    %1631 = vmatprep.subr.mxu0 0.0
    %1632 = vmatpush1.msra.mxu0 0.0
    %1633 = vmatprep.mubr.f32.mxu0 0.0
    %1634 = vmatmul.mubr.f32.gmra.mrb[0].mxu0 %v1567
    %v1635 = vpop.f32.mrb[0].mxu0
    %v1636 = vadd.f32 0.0, %v1635
    %v1637 = vpop.f32.mrb[0].mxu0
    %1638 = vdwg.mxu0
    %v1639 = vadd.f32 %v1463, %v1636
    %v1640 = vxor.u32 %v1639, 2147483648
    %v1641 = vmul.f32 %v1640, 1.442695
    %v1642 = vpow.pop %v1641
    %v1643 = vadd.f32 %v1642, 1.0
    %v1644 = vrcp.pop %v1643
    %v1645 = vmul.f32 1.0, %v1644
    %v1646 = vtanh.pop %v1639
    %v1647 = vmul.f32 %v1645, %v1384
    %1649 = vrot.lane.b32.xlu0 %v1646, 64
    %v1650 = vpop.permute.xlu0 %1649
    %v1652 = vmul.f32 %v1645, %v1650
    %1654 = vrot.lane.b32.xlu0 %v1652, 32
    %v1655 = vpop.permute.xlu0 %1654
    %v1657 = vadd.f32 %v1647, %v1655
    %v1658 = vtanh.pop %v1657
    %1660 = vrot.lane.b32.xlu0 %v1658, 64
    %v1661 = vpop.permute.xlu0 %1660
    %v1663 = vmul.f32 %v1645, %v1661
    %1665 = vrot.lane.b32.xlu0 %v1663, 32
    %v1666 = vpop.permute.xlu0 %1665
    %v1667 = vsel %vm280, %v1666, 0
    %1669 = vmatprep.subr.mxu0 0.0
    %1670 = vmatpush1.msra.mxu0 %v263
    %1671 = vmatprep.subr.mxu0 0.0
    %1672 = vmatpush1.msra.mxu0 %v264
    %1673 = vmatprep.subr.mxu0 0.0
    %1674 = vmatpush1.msra.mxu0 %v265
    %1675 = vmatprep.subr.mxu0 0.0
    %1676 = vmatpush1.msra.mxu0 %v266
    %1677 = vmatprep.subr.mxu0 0.0
    %1678 = vmatpush1.msra.mxu0 0.0
    %1679 = vmatprep.subr.mxu0 0.0
    %1680 = vmatpush1.msra.mxu0 0.0
    %1681 = vmatprep.subr.mxu0 0.0
    %1682 = vmatpush1.msra.mxu0 0.0
    %1683 = vmatprep.subr.mxu0 0.0
    %1684 = vmatpush1.msra.mxu0 0.0
    %1685 = vmatprep.subr.mxu0 0.0
    %1686 = vmatpush1.msra.mxu0 0.0
    %1687 = vmatprep.subr.mxu0 0.0
    %1688 = vmatpush1.msra.mxu0 0.0
    %1689 = vmatprep.subr.mxu0 0.0
    %1690 = vmatpush1.msra.mxu0 0.0
    %1691 = vmatprep.subr.mxu0 0.0
    %1692 = vmatpush1.msra.mxu0 0.0
    %1693 = vmatprep.subr.mxu0 0.0
    %1694 = vmatpush1.msra.mxu0 0.0
    %1695 = vmatprep.subr.mxu0 0.0
    %1696 = vmatpush1.msra.mxu0 0.0
    %1697 = vmatprep.subr.mxu0 0.0
    %1698 = vmatpush1.msra.mxu0 0.0
    %1699 = vmatprep.subr.mxu0 0.0
    %1700 = vmatpush1.msra.mxu0 0.0
    %1701 = vmatprep.subr.mxu0 0.0
    %1702 = vmatpush1.msra.mxu0 0.0
    %1703 = vmatprep.subr.mxu0 0.0
    %1704 = vmatpush1.msra.mxu0 0.0
    %1705 = vmatprep.subr.mxu0 0.0
    %1706 = vmatpush1.msra.mxu0 0.0
    %1707 = vmatprep.subr.mxu0 0.0
    %1708 = vmatpush1.msra.mxu0 0.0
    %1709 = vmatprep.subr.mxu0 0.0
    %1710 = vmatpush1.msra.mxu0 0.0
    %1711 = vmatprep.subr.mxu0 0.0
    %1712 = vmatpush1.msra.mxu0 0.0
    %1713 = vmatprep.subr.mxu0 0.0
    %1714 = vmatpush1.msra.mxu0 0.0
    %1715 = vmatprep.subr.mxu0 0.0
    %1716 = vmatpush1.msra.mxu0 0.0
    %1717 = vmatprep.subr.mxu0 0.0
    %1718 = vmatpush1.msra.mxu0 0.0
    %1719 = vmatprep.subr.mxu0 0.0
    %1720 = vmatpush1.msra.mxu0 0.0
    %1721 = vmatprep.subr.mxu0 0.0
    %1722 = vmatpush1.msra.mxu0 0.0
    %1723 = vmatprep.subr.mxu0 0.0
    %1724 = vmatpush1.msra.mxu0 0.0
    %1725 = vmatprep.subr.mxu0 0.0
    %1726 = vmatpush1.msra.mxu0 0.0
    %1727 = vmatprep.subr.mxu0 0.0
    %1728 = vmatpush1.msra.mxu0 0.0
    %1729 = vmatprep.subr.mxu0 0.0
    %1730 = vmatpush1.msra.mxu0 0.0
    %1731 = vmatprep.subr.mxu0 0.0
    %1732 = vmatpush1.msra.mxu0 0.0
    %1733 = vmatprep.mubr.f32.mxu0 0.0
    %1734 = vmatmul.mubr.f32.gmra.mrb[0].mxu0 %v1667
    %v1735 = vpop.f32.mrb[0].mxu0
    %v1736 = vadd.f32 %v272, %v1735
    %v1737 = vpop.f32.mrb[0].mxu0
    %1738 = vdwg.mxu0
    %1739 = vmatprep.subr.mxu0 0.0
    %1740 = vmatpush1.msra.mxu0 %v255
    %1741 = vmatprep.subr.mxu0 0.0
    %1742 = vmatpush1.msra.mxu0 %v256
    %1743 = vmatprep.subr.mxu0 0.0
    %1744 = vmatpush1.msra.mxu0 %v257
    %1745 = vmatprep.subr.mxu0 0.0
    %1746 = vmatpush1.msra.mxu0 %v258
    %1747 = vmatprep.subr.mxu0 0.0
    %1748 = vmatpush1.msra.mxu0 0.0
    %1749 = vmatprep.subr.mxu0 0.0
    %1750 = vmatpush1.msra.mxu0 0.0
    %1751 = vmatprep.subr.mxu0 0.0
    %1752 = vmatpush1.msra.mxu0 0.0
    %1753 = vmatprep.subr.mxu0 0.0
    %1754 = vmatpush1.msra.mxu0 0.0
    %1755 = vmatprep.subr.mxu0 0.0
    %1756 = vmatpush1.msra.mxu0 0.0
    %1757 = vmatprep.subr.mxu0 0.0
    %1758 = vmatpush1.msra.mxu0 0.0
    %1759 = vmatprep.subr.mxu0 0.0
    %1760 = vmatpush1.msra.mxu0 0.0
    %1761 = vmatprep.subr.mxu0 0.0
    %1762 = vmatpush1.msra.mxu0 0.0
    %1763 = vmatprep.subr.mxu0 0.0
    %1764 = vmatpush1.msra.mxu0 0.0
    %1765 = vmatprep.subr.mxu0 0.0
    %1766 = vmatpush1.msra.mxu0 0.0
    %1767 = vmatprep.subr.mxu0 0.0
    %1768 = vmatpush1.msra.mxu0 0.0
    %1769 = vmatprep.subr.mxu0 0.0
    %1770 = vmatpush1.msra.mxu0 0.0
    %1771 = vmatprep.subr.mxu0 0.0
    %1772 = vmatpush1.msra.mxu0 0.0
    %1773 = vmatprep.subr.mxu0 0.0
    %1774 = vmatpush1.msra.mxu0 0.0
    %1775 = vmatprep.subr.mxu0 0.0
    %1776 = vmatpush1.msra.mxu0 0.0
    %1777 = vmatprep.subr.mxu0 0.0
    %1778 = vmatpush1.msra.mxu0 0.0
    %1779 = vmatprep.subr.mxu0 0.0
    %1780 = vmatpush1.msra.mxu0 0.0
    %1781 = vmatprep.subr.mxu0 0.0
    %1782 = vmatpush1.msra.mxu0 0.0
    %1783 = vmatprep.subr.mxu0 0.0
    %1784 = vmatpush1.msra.mxu0 0.0
    %1785 = vmatprep.subr.mxu0 0.0
    %1786 = vmatpush1.msra.mxu0 0.0
    %1787 = vmatprep.subr.mxu0 0.0
    %1788 = vmatpush1.msra.mxu0 0.0
    %1789 = vmatprep.subr.mxu0 0.0
    %1790 = vmatpush1.msra.mxu0 0.0
    %1791 = vmatprep.subr.mxu0 0.0
    %1792 = vmatpush1.msra.mxu0 0.0
    %1793 = vmatprep.subr.mxu0 0.0
    %1794 = vmatpush1.msra.mxu0 0.0
    %1795 = vmatprep.subr.mxu0 0.0
    %1796 = vmatpush1.msra.mxu0 0.0
    %1797 = vmatprep.subr.mxu0 0.0
    %1798 = vmatpush1.msra.mxu0 0.0
    %1799 = vmatprep.subr.mxu0 0.0
    %1800 = vmatpush1.msra.mxu0 0.0
    %1801 = vmatprep.subr.mxu0 0.0
    %1802 = vmatpush1.msra.mxu0 0.0
    %1803 = vmatprep.mubr.f32.mxu0 0.0
    %1804 = vmatmul.mubr.f32.gmra.mrb[0].mxu0 %v1567
    %v1805 = vpop.f32.mrb[0].mxu0
    %v1806 = vadd.f32 0.0, %v1805
    %v1807 = vpop.f32.mrb[0].mxu0
    %1808 = vdwg.mxu0
    %v1810 = vrot.slane %v1806, 6
    %v1812 = vadd.f32 %v254, %v1810
    %v1813 = vxor.u32 %v1812, 2147483648
    %v1814 = vmul.f32 %v1813, 1.442695
    %v1815 = vpow.pop %v1814
    %v1816 = vadd.f32 %v1815, 1.0
    %v1817 = vrcp.pop %v1816
    %v1818 = vmul.f32 1.0, %v1817
    %v1819 = vtanh.pop %v1812
    %v1821 = vrot.slane %v1557, 6
    %v1823 = vmul.f32 %v1818, %v1821
    %1825 = vrot.lane.b32.xlu0 %v1819, 64
    %v1826 = vpop.permute.xlu0 %1825
    %v1828 = vmul.f32 %v1818, %v1826
    %1830 = vrot.lane.b32.xlu0 %v1828, 32
    %v1831 = vpop.permute.xlu0 %1830
    %v1833 = vadd.f32 %v1823, %v1831
    %v1834 = vtanh.pop %v1833
    %1836 = vrot.lane.b32.xlu0 %v1834, 64
    %v1837 = vpop.permute.xlu0 %1836
    %v1839 = vmul.f32 %v1818, %v1837
    %v1841 = vrot.slane %v1839, 2
    %1842 = vrot.lane.b32.xlu0 %v1841, 32
    %v1843 = vpop.permute.xlu0 %1842
    %v1844 = vsel %vm280, %v1843, 0
    %1846 = vmatprep.subr.mxu0 0.0
    %1847 = vmatpush1.msra.mxu0 %v259
    %1848 = vmatprep.subr.mxu0 0.0
    %1849 = vmatpush1.msra.mxu0 %v260
    %1850 = vmatprep.subr.mxu0 0.0
    %1851 = vmatpush1.msra.mxu0 %v261
    %1852 = vmatprep.subr.mxu0 0.0
    %1853 = vmatpush1.msra.mxu0 %v262
    %1854 = vmatprep.subr.mxu0 0.0
    %1855 = vmatpush1.msra.mxu0 0.0
    %1856 = vmatprep.subr.mxu0 0.0
    %1857 = vmatpush1.msra.mxu0 0.0
    %1858 = vmatprep.subr.mxu0 0.0
    %1859 = vmatpush1.msra.mxu0 0.0
    %1860 = vmatprep.subr.mxu0 0.0
    %1861 = vmatpush1.msra.mxu0 0.0
    %1862 = vmatprep.subr.mxu0 0.0
    %1863 = vmatpush1.msra.mxu0 0.0
    %1864 = vmatprep.subr.mxu0 0.0
    %1865 = vmatpush1.msra.mxu0 0.0
    %1866 = vmatprep.subr.mxu0 0.0
    %1867 = vmatpush1.msra.mxu0 0.0
    %1868 = vmatprep.subr.mxu0 0.0
    %1869 = vmatpush1.msra.mxu0 0.0
    %1870 = vmatprep.subr.mxu0 0.0
    %1871 = vmatpush1.msra.mxu0 0.0
    %1872 = vmatprep.subr.mxu0 0.0
    %1873 = vmatpush1.msra.mxu0 0.0
    %1874 = vmatprep.subr.mxu0 0.0
    %1875 = vmatpush1.msra.mxu0 0.0
    %1876 = vmatprep.subr.mxu0 0.0
    %1877 = vmatpush1.msra.mxu0 0.0
    %1878 = vmatprep.subr.mxu0 0.0
    %1879 = vmatpush1.msra.mxu0 0.0
    %1880 = vmatprep.subr.mxu0 0.0
    %1881 = vmatpush1.msra.mxu0 0.0
    %1882 = vmatprep.subr.mxu0 0.0
    %1883 = vmatpush1.msra.mxu0 0.0
    %1884 = vmatprep.subr.mxu0 0.0
    %1885 = vmatpush1.msra.mxu0 0.0
    %1886 = vmatprep.subr.mxu0 0.0
    %1887 = vmatpush1.msra.mxu0 0.0
    %1888 = vmatprep.subr.mxu0 0.0
    %1889 = vmatpush1.msra.mxu0 0.0
    %1890 = vmatprep.subr.mxu0 0.0
    %1891 = vmatpush1.msra.mxu0 0.0
    %1892 = vmatprep.subr.mxu0 0.0
    %1893 = vmatpush1.msra.mxu0 0.0
    %1894 = vmatprep.subr.mxu0 0.0
    %1895 = vmatpush1.msra.mxu0 0.0
    %1896 = vmatprep.subr.mxu0 0.0
    %1897 = vmatpush1.msra.mxu0 0.0
    %1898 = vmatprep.subr.mxu0 0.0
    %1899 = vmatpush1.msra.mxu0 0.0
    %1900 = vmatprep.subr.mxu0 0.0
    %1901 = vmatpush1.msra.mxu0 0.0
    %1902 = vmatprep.subr.mxu0 0.0
    %1903 = vmatpush1.msra.mxu0 0.0
    %1904 = vmatprep.subr.mxu0 0.0
    %1905 = vmatpush1.msra.mxu0 0.0
    %1906 = vmatprep.subr.mxu0 0.0
    %1907 = vmatpush1.msra.mxu0 0.0
    %1908 = vmatprep.subr.mxu0 0.0
    %1909 = vmatpush1.msra.mxu0 0.0
    %1910 = vmatprep.mubr.f32.mxu0 0.0
    %1911 = vmatmul.mubr.f32.gmra.mrb[0].mxu0 %v1844
    %v1912 = vpop.f32.mrb[0].mxu0
    %v1913 = vadd.f32 0.0, %v1912
    %v1914 = vpop.f32.mrb[0].mxu0
    %1915 = vdwg.mxu0
    %v1916 = vadd.f32 %v1736, %v1913
    %v1917 = vxor.u32 %v1916, 2147483648
    %v1918 = vmul.f32 %v1917, 1.442695
    %v1919 = vpow.pop %v1918
    %v1920 = vadd.f32 %v1919, 1.0
    %v1921 = vrcp.pop %v1920
    %v1922 = vmul.f32 1.0, %v1921
    %v1923 = vtanh.pop %v1916
    %v1924 = vmul.f32 %v1922, %v1657
    %1926 = vrot.lane.b32.xlu0 %v1923, 64
    %v1927 = vpop.permute.xlu0 %1926
    %v1929 = vmul.f32 %v1922, %v1927
    %1931 = vrot.lane.b32.xlu0 %v1929, 32
    %v1932 = vpop.permute.xlu0 %1931
    %v1934 = vadd.f32 %v1924, %v1932
    %v1935 = vtanh.pop %v1934
    %1937 = vrot.lane.b32.xlu0 %v1935, 64
    %v1938 = vpop.permute.xlu0 %1937
    %v1940 = vmul.f32 %v1922, %v1938
    %1942 = vrot.lane.b32.xlu0 %v1940, 32
    %v1943 = vpop.permute.xlu0 %1942
    %v1944 = vsel %vm280, %v1943, 0
    %1946 = vmatprep.subr.mxu0 0.0
    %1947 = vmatpush1.msra.mxu0 %v263
    %1948 = vmatprep.subr.mxu0 0.0
    %1949 = vmatpush1.msra.mxu0 %v264
    %1950 = vmatprep.subr.mxu0 0.0
    %1951 = vmatpush1.msra.mxu0 %v265
    %1952 = vmatprep.subr.mxu0 0.0
    %1953 = vmatpush1.msra.mxu0 %v266
    %1954 = vmatprep.subr.mxu0 0.0
    %1955 = vmatpush1.msra.mxu0 0.0
    %1956 = vmatprep.subr.mxu0 0.0
    %1957 = vmatpush1.msra.mxu0 0.0
    %1958 = vmatprep.subr.mxu0 0.0
    %1959 = vmatpush1.msra.mxu0 0.0
    %1960 = vmatprep.subr.mxu0 0.0
    %1961 = vmatpush1.msra.mxu0 0.0
    %1962 = vmatprep.subr.mxu0 0.0
    %1963 = vmatpush1.msra.mxu0 0.0
    %1964 = vmatprep.subr.mxu0 0.0
    %1965 = vmatpush1.msra.mxu0 0.0
    %1966 = vmatprep.subr.mxu0 0.0
    %1967 = vmatpush1.msra.mxu0 0.0
    %1968 = vmatprep.subr.mxu0 0.0
    %1969 = vmatpush1.msra.mxu0 0.0
    %1970 = vmatprep.subr.mxu0 0.0
    %1971 = vmatpush1.msra.mxu0 0.0
    %1972 = vmatprep.subr.mxu0 0.0
    %1973 = vmatpush1.msra.mxu0 0.0
    %1974 = vmatprep.subr.mxu0 0.0
    %1975 = vmatpush1.msra.mxu0 0.0
    %1976 = vmatprep.subr.mxu0 0.0
    %1977 = vmatpush1.msra.mxu0 0.0
    %1978 = vmatprep.subr.mxu0 0.0
    %1979 = vmatpush1.msra.mxu0 0.0
    %1980 = vmatprep.subr.mxu0 0.0
    %1981 = vmatpush1.msra.mxu0 0.0
    %1982 = vmatprep.subr.mxu0 0.0
    %1983 = vmatpush1.msra.mxu0 0.0
    %1984 = vmatprep.subr.mxu0 0.0
    %1985 = vmatpush1.msra.mxu0 0.0
    %1986 = vmatprep.subr.mxu0 0.0
    %1987 = vmatpush1.msra.mxu0 0.0
    %1988 = vmatprep.subr.mxu0 0.0
    %1989 = vmatpush1.msra.mxu0 0.0
    %1990 = vmatprep.subr.mxu0 0.0
    %1991 = vmatpush1.msra.mxu0 0.0
    %1992 = vmatprep.subr.mxu0 0.0
    %1993 = vmatpush1.msra.mxu0 0.0
    %1994 = vmatprep.subr.mxu0 0.0
    %1995 = vmatpush1.msra.mxu0 0.0
    %1996 = vmatprep.subr.mxu0 0.0
    %1997 = vmatpush1.msra.mxu0 0.0
    %1998 = vmatprep.subr.mxu0 0.0
    %1999 = vmatpush1.msra.mxu0 0.0
    %2000 = vmatprep.subr.mxu0 0.0
    %2001 = vmatpush1.msra.mxu0 0.0
    %2002 = vmatprep.subr.mxu0 0.0
    %2003 = vmatpush1.msra.mxu0 0.0
    %2004 = vmatprep.subr.mxu0 0.0
    %2005 = vmatpush1.msra.mxu0 0.0
    %2006 = vmatprep.subr.mxu0 0.0
    %2007 = vmatpush1.msra.mxu0 0.0
    %2008 = vmatprep.subr.mxu0 0.0
    %2009 = vmatpush1.msra.mxu0 0.0
    %2010 = vmatprep.mubr.f32.mxu0 0.0
    %2011 = vmatmul.mubr.f32.gmra.mrb[0].mxu0 %v1944
    %v2012 = vpop.f32.mrb[0].mxu0
    %v2013 = vadd.f32 %v272, %v2012
    %v2014 = vpop.f32.mrb[0].mxu0
    %2015 = vdwg.mxu0
    %2016 = vmatprep.subr.mxu0 0.0
    %2017 = vmatpush1.msra.mxu0 %v255
    %2018 = vmatprep.subr.mxu0 0.0
    %2019 = vmatpush1.msra.mxu0 %v256
    %2020 = vmatprep.subr.mxu0 0.0
    %2021 = vmatpush1.msra.mxu0 %v257
    %2022 = vmatprep.subr.mxu0 0.0
    %2023 = vmatpush1.msra.mxu0 %v258
    %2024 = vmatprep.subr.mxu0 0.0
    %2025 = vmatpush1.msra.mxu0 0.0
    %2026 = vmatprep.subr.mxu0 0.0
    %2027 = vmatpush1.msra.mxu0 0.0
    %2028 = vmatprep.subr.mxu0 0.0
    %2029 = vmatpush1.msra.mxu0 0.0
    %2030 = vmatprep.subr.mxu0 0.0
    %2031 = vmatpush1.msra.mxu0 0.0
    %2032 = vmatprep.subr.mxu0 0.0
    %2033 = vmatpush1.msra.mxu0 0.0
    %2034 = vmatprep.subr.mxu0 0.0
    %2035 = vmatpush1.msra.mxu0 0.0
    %2036 = vmatprep.subr.mxu0 0.0
    %2037 = vmatpush1.msra.mxu0 0.0
    %2038 = vmatprep.subr.mxu0 0.0
    %2039 = vmatpush1.msra.mxu0 0.0
    %2040 = vmatprep.subr.mxu0 0.0
    %2041 = vmatpush1.msra.mxu0 0.0
    %2042 = vmatprep.subr.mxu0 0.0
    %2043 = vmatpush1.msra.mxu0 0.0
    %2044 = vmatprep.subr.mxu0 0.0
    %2045 = vmatpush1.msra.mxu0 0.0
    %2046 = vmatprep.subr.mxu0 0.0
    %2047 = vmatpush1.msra.mxu0 0.0
    %2048 = vmatprep.subr.mxu0 0.0
    %2049 = vmatpush1.msra.mxu0 0.0
    %2050 = vmatprep.subr.mxu0 0.0
    %2051 = vmatpush1.msra.mxu0 0.0
    %2052 = vmatprep.subr.mxu0 0.0
    %2053 = vmatpush1.msra.mxu0 0.0
    %2054 = vmatprep.subr.mxu0 0.0
    %2055 = vmatpush1.msra.mxu0 0.0
    %2056 = vmatprep.subr.mxu0 0.0
    %2057 = vmatpush1.msra.mxu0 0.0
    %2058 = vmatprep.subr.mxu0 0.0
    %2059 = vmatpush1.msra.mxu0 0.0
    %2060 = vmatprep.subr.mxu0 0.0
    %2061 = vmatpush1.msra.mxu0 0.0
    %2062 = vmatprep.subr.mxu0 0.0
    %2063 = vmatpush1.msra.mxu0 0.0
    %2064 = vmatprep.subr.mxu0 0.0
    %2065 = vmatpush1.msra.mxu0 0.0
    %2066 = vmatprep.subr.mxu0 0.0
    %2067 = vmatpush1.msra.mxu0 0.0
    %2068 = vmatprep.subr.mxu0 0.0
    %2069 = vmatpush1.msra.mxu0 0.0
    %2070 = vmatprep.subr.mxu0 0.0
    %2071 = vmatpush1.msra.mxu0 0.0
    %2072 = vmatprep.subr.mxu0 0.0
    %2073 = vmatpush1.msra.mxu0 0.0
    %2074 = vmatprep.subr.mxu0 0.0
    %2075 = vmatpush1.msra.mxu0 0.0
    %2076 = vmatprep.subr.mxu0 0.0
    %2077 = vmatpush1.msra.mxu0 0.0
    %2078 = vmatprep.subr.mxu0 0.0
    %2079 = vmatpush1.msra.mxu0 0.0
    %2080 = vmatprep.mubr.f32.mxu0 0.0
    %2081 = vmatmul.mubr.f32.gmra.mrb[0].mxu0 %v1844
    %v2082 = vpop.f32.mrb[0].mxu0
    %v2083 = vadd.f32 0.0, %v2082
    %v2084 = vpop.f32.mrb[0].mxu0
    %2085 = vdwg.mxu0
    %v2087 = vrot.slane %v2083, 4
    %v2089 = vadd.f32 %v254, %v2087
    %v2090 = vxor.u32 %v2089, 2147483648
    %v2091 = vmul.f32 %v2090, 1.442695
    %v2092 = vpow.pop %v2091
    %v2093 = vadd.f32 %v2092, 1.0
    %v2094 = vrcp.pop %v2093
    %v2095 = vmul.f32 1.0, %v2094
    %v2096 = vtanh.pop %v2089
    %v2098 = vrot.slane %v1833, 6
    %v2100 = vmul.f32 %v2095, %v2098
    %2102 = vrot.lane.b32.xlu0 %v2096, 64
    %v2103 = vpop.permute.xlu0 %2102
    %v2105 = vmul.f32 %v2095, %v2103
    %2107 = vrot.lane.b32.xlu0 %v2105, 32
    %v2108 = vpop.permute.xlu0 %2107
    %v2110 = vadd.f32 %v2100, %v2108
    %v2111 = vtanh.pop %v2110
    %2113 = vrot.lane.b32.xlu0 %v2111, 64
    %v2114 = vpop.permute.xlu0 %2113
    %v2116 = vmul.f32 %v2095, %v2114
    %v2118 = vrot.slane %v2116, 4
    %2119 = vrot.lane.b32.xlu0 %v2118, 32
    %v2120 = vpop.permute.xlu0 %2119
    %v2121 = vsel %vm280, %v2120, 0
    %2123 = vmatprep.subr.mxu0 0.0
    %2124 = vmatpush1.msra.mxu0 %v259
    %2125 = vmatprep.subr.mxu0 0.0
    %2126 = vmatpush1.msra.mxu0 %v260
    %2127 = vmatprep.subr.mxu0 0.0
    %2128 = vmatpush1.msra.mxu0 %v261
    %2129 = vmatprep.subr.mxu0 0.0
    %2130 = vmatpush1.msra.mxu0 %v262
    %2131 = vmatprep.subr.mxu0 0.0
    %2132 = vmatpush1.msra.mxu0 0.0
    %2133 = vmatprep.subr.mxu0 0.0
    %2134 = vmatpush1.msra.mxu0 0.0
    %2135 = vmatprep.subr.mxu0 0.0
    %2136 = vmatpush1.msra.mxu0 0.0
    %2137 = vmatprep.subr.mxu0 0.0
    %2138 = vmatpush1.msra.mxu0 0.0
    %2139 = vmatprep.subr.mxu0 0.0
    %2140 = vmatpush1.msra.mxu0 0.0
    %2141 = vmatprep.subr.mxu0 0.0
    %2142 = vmatpush1.msra.mxu0 0.0
    %2143 = vmatprep.subr.mxu0 0.0
    %2144 = vmatpush1.msra.mxu0 0.0
    %2145 = vmatprep.subr.mxu0 0.0
    %2146 = vmatpush1.msra.mxu0 0.0
    %2147 = vmatprep.subr.mxu0 0.0
    %2148 = vmatpush1.msra.mxu0 0.0
    %2149 = vmatprep.subr.mxu0 0.0
    %2150 = vmatpush1.msra.mxu0 0.0
    %2151 = vmatprep.subr.mxu0 0.0
    %2152 = vmatpush1.msra.mxu0 0.0
    %2153 = vmatprep.subr.mxu0 0.0
    %2154 = vmatpush1.msra.mxu0 0.0
    %2155 = vmatprep.subr.mxu0 0.0
    %2156 = vmatpush1.msra.mxu0 0.0
    %2157 = vmatprep.subr.mxu0 0.0
    %2158 = vmatpush1.msra.mxu0 0.0
    %2159 = vmatprep.subr.mxu0 0.0
    %2160 = vmatpush1.msra.mxu0 0.0
    %2161 = vmatprep.subr.mxu0 0.0
    %2162 = vmatpush1.msra.mxu0 0.0
    %2163 = vmatprep.subr.mxu0 0.0
    %2164 = vmatpush1.msra.mxu0 0.0
    %2165 = vmatprep.subr.mxu0 0.0
    %2166 = vmatpush1.msra.mxu0 0.0
    %2167 = vmatprep.subr.mxu0 0.0
    %2168 = vmatpush1.msra.mxu0 0.0
    %2169 = vmatprep.subr.mxu0 0.0
    %2170 = vmatpush1.msra.mxu0 0.0
    %2171 = vmatprep.subr.mxu0 0.0
    %2172 = vmatpush1.msra.mxu0 0.0
    %2173 = vmatprep.subr.mxu0 0.0
    %2174 = vmatpush1.msra.mxu0 0.0
    %2175 = vmatprep.subr.mxu0 0.0
    %2176 = vmatpush1.msra.mxu0 0.0
    %2177 = vmatprep.subr.mxu0 0.0
    %2178 = vmatpush1.msra.mxu0 0.0
    %2179 = vmatprep.subr.mxu0 0.0
    %2180 = vmatpush1.msra.mxu0 0.0
    %2181 = vmatprep.subr.mxu0 0.0
    %2182 = vmatpush1.msra.mxu0 0.0
    %2183 = vmatprep.subr.mxu0 0.0
    %2184 = vmatpush1.msra.mxu0 0.0
    %2185 = vmatprep.subr.mxu0 0.0
    %2186 = vmatpush1.msra.mxu0 0.0
    %2187 = vmatprep.mubr.f32.mxu0 0.0
    %2188 = vmatmul.mubr.f32.gmra.mrb[0].mxu0 %v2121
    %v2189 = vpop.f32.mrb[0].mxu0
    %v2190 = vadd.f32 0.0, %v2189
    %v2191 = vpop.f32.mrb[0].mxu0
    %2192 = vdwg.mxu0
    %v2193 = vadd.f32 %v2013, %v2190
    %v2194 = vxor.u32 %v2193, 2147483648
    %v2195 = vmul.f32 %v2194, 1.442695
    %v2196 = vpow.pop %v2195
    %v2197 = vadd.f32 %v2196, 1.0
    %v2198 = vrcp.pop %v2197
    %v2199 = vmul.f32 1.0, %v2198
    %v2200 = vtanh.pop %v2193
    %v2201 = vmul.f32 %v2199, %v1934
    %2203 = vrot.lane.b32.xlu0 %v2200, 64
    %v2204 = vpop.permute.xlu0 %2203
    %v2206 = vmul.f32 %v2199, %v2204
    %2208 = vrot.lane.b32.xlu0 %v2206, 32
    %v2209 = vpop.permute.xlu0 %2208
    %v2211 = vadd.f32 %v2201, %v2209
    %v2212 = vtanh.pop %v2211
    %2214 = vrot.lane.b32.xlu0 %v2212, 64
    %v2215 = vpop.permute.xlu0 %2214
    %v2217 = vmul.f32 %v2199, %v2215
    %2219 = vrot.lane.b32.xlu0 %v2217, 32
    %v2220 = vpop.permute.xlu0 %2219
    %v2221 = vsel %vm280, %v2220, 0
    %2223 = vmatprep.subr.mxu0 0.0
    %2224 = vmatpush1.msra.mxu0 %v263
    %2225 = vmatprep.subr.mxu0 0.0
    %2226 = vmatpush1.msra.mxu0 %v264
    %2227 = vmatprep.subr.mxu0 0.0
    %2228 = vmatpush1.msra.mxu0 %v265
    %2229 = vmatprep.subr.mxu0 0.0
    %2230 = vmatpush1.msra.mxu0 %v266
    %2231 = vmatprep.subr.mxu0 0.0
    %2232 = vmatpush1.msra.mxu0 0.0
    %2233 = vmatprep.subr.mxu0 0.0
    %2234 = vmatpush1.msra.mxu0 0.0
    %2235 = vmatprep.subr.mxu0 0.0
    %2236 = vmatpush1.msra.mxu0 0.0
    %2237 = vmatprep.subr.mxu0 0.0
    %2238 = vmatpush1.msra.mxu0 0.0
    %2239 = vmatprep.subr.mxu0 0.0
    %2240 = vmatpush1.msra.mxu0 0.0
    %2241 = vmatprep.subr.mxu0 0.0
    %2242 = vmatpush1.msra.mxu0 0.0
    %2243 = vmatprep.subr.mxu0 0.0
    %2244 = vmatpush1.msra.mxu0 0.0
    %2245 = vmatprep.subr.mxu0 0.0
    %2246 = vmatpush1.msra.mxu0 0.0
    %2247 = vmatprep.subr.mxu0 0.0
    %2248 = vmatpush1.msra.mxu0 0.0
    %2249 = vmatprep.subr.mxu0 0.0
    %2250 = vmatpush1.msra.mxu0 0.0
    %2251 = vmatprep.subr.mxu0 0.0
    %2252 = vmatpush1.msra.mxu0 0.0
    %2253 = vmatprep.subr.mxu0 0.0
    %2254 = vmatpush1.msra.mxu0 0.0
    %2255 = vmatprep.subr.mxu0 0.0
    %2256 = vmatpush1.msra.mxu0 0.0
    %2257 = vmatprep.subr.mxu0 0.0
    %2258 = vmatpush1.msra.mxu0 0.0
    %2259 = vmatprep.subr.mxu0 0.0
    %2260 = vmatpush1.msra.mxu0 0.0
    %2261 = vmatprep.subr.mxu0 0.0
    %2262 = vmatpush1.msra.mxu0 0.0
    %2263 = vmatprep.subr.mxu0 0.0
    %2264 = vmatpush1.msra.mxu0 0.0
    %2265 = vmatprep.subr.mxu0 0.0
    %2266 = vmatpush1.msra.mxu0 0.0
    %2267 = vmatprep.subr.mxu0 0.0
    %2268 = vmatpush1.msra.mxu0 0.0
    %2269 = vmatprep.subr.mxu0 0.0
    %2270 = vmatpush1.msra.mxu0 0.0
    %2271 = vmatprep.subr.mxu0 0.0
    %2272 = vmatpush1.msra.mxu0 0.0
    %2273 = vmatprep.subr.mxu0 0.0
    %2274 = vmatpush1.msra.mxu0 0.0
    %2275 = vmatprep.subr.mxu0 0.0
    %2276 = vmatpush1.msra.mxu0 0.0
    %2277 = vmatprep.subr.mxu0 0.0
    %2278 = vmatpush1.msra.mxu0 0.0
    %2279 = vmatprep.subr.mxu0 0.0
    %2280 = vmatpush1.msra.mxu0 0.0
    %2281 = vmatprep.subr.mxu0 0.0
    %2282 = vmatpush1.msra.mxu0 0.0
    %2283 = vmatprep.subr.mxu0 0.0
    %2284 = vmatpush1.msra.mxu0 0.0
    %2285 = vmatprep.subr.mxu0 0.0
    %2286 = vmatpush1.msra.mxu0 0.0
    %2287 = vmatprep.mubr.f32.mxu0 0.0
    %2288 = vmatmul.mubr.f32.gmra.mrb[0].mxu0 %v2221
    %v2289 = vpop.f32.mrb[0].mxu0
    %v2290 = vadd.f32 %v272, %v2289
    %v2291 = vpop.f32.mrb[0].mxu0
    %2292 = vdwg.mxu0
    %2293 = vmatprep.subr.mxu0 0.0
    %2294 = vmatpush1.msra.mxu0 %v255
    %2295 = vmatprep.subr.mxu0 0.0
    %2296 = vmatpush1.msra.mxu0 %v256
    %2297 = vmatprep.subr.mxu0 0.0
    %2298 = vmatpush1.msra.mxu0 %v257
    %2299 = vmatprep.subr.mxu0 0.0
    %2300 = vmatpush1.msra.mxu0 %v258
    %2301 = vmatprep.subr.mxu0 0.0
    %2302 = vmatpush1.msra.mxu0 0.0
    %2303 = vmatprep.subr.mxu0 0.0
    %2304 = vmatpush1.msra.mxu0 0.0
    %2305 = vmatprep.subr.mxu0 0.0
    %2306 = vmatpush1.msra.mxu0 0.0
    %2307 = vmatprep.subr.mxu0 0.0
    %2308 = vmatpush1.msra.mxu0 0.0
    %2309 = vmatprep.subr.mxu0 0.0
    %2310 = vmatpush1.msra.mxu0 0.0
    %2311 = vmatprep.subr.mxu0 0.0
    %2312 = vmatpush1.msra.mxu0 0.0
    %2313 = vmatprep.subr.mxu0 0.0
    %2314 = vmatpush1.msra.mxu0 0.0
    %2315 = vmatprep.subr.mxu0 0.0
    %2316 = vmatpush1.msra.mxu0 0.0
    %2317 = vmatprep.subr.mxu0 0.0
    %2318 = vmatpush1.msra.mxu0 0.0
    %2319 = vmatprep.subr.mxu0 0.0
    %2320 = vmatpush1.msra.mxu0 0.0
    %2321 = vmatprep.subr.mxu0 0.0
    %2322 = vmatpush1.msra.mxu0 0.0
    %2323 = vmatprep.subr.mxu0 0.0
    %2324 = vmatpush1.msra.mxu0 0.0
    %2325 = vmatprep.subr.mxu0 0.0
    %2326 = vmatpush1.msra.mxu0 0.0
    %2327 = vmatprep.subr.mxu0 0.0
    %2328 = vmatpush1.msra.mxu0 0.0
    %2329 = vmatprep.subr.mxu0 0.0
    %2330 = vmatpush1.msra.mxu0 0.0
    %2331 = vmatprep.subr.mxu0 0.0
    %2332 = vmatpush1.msra.mxu0 0.0
    %2333 = vmatprep.subr.mxu0 0.0
    %2334 = vmatpush1.msra.mxu0 0.0
    %2335 = vmatprep.subr.mxu0 0.0
    %2336 = vmatpush1.msra.mxu0 0.0
    %2337 = vmatprep.subr.mxu0 0.0
    %2338 = vmatpush1.msra.mxu0 0.0
    %2339 = vmatprep.subr.mxu0 0.0
    %2340 = vmatpush1.msra.mxu0 0.0
    %2341 = vmatprep.subr.mxu0 0.0
    %2342 = vmatpush1.msra.mxu0 0.0
    %2343 = vmatprep.subr.mxu0 0.0
    %2344 = vmatpush1.msra.mxu0 0.0
    %2345 = vmatprep.subr.mxu0 0.0
    %2346 = vmatpush1.msra.mxu0 0.0
    %2347 = vmatprep.subr.mxu0 0.0
    %2348 = vmatpush1.msra.mxu0 0.0
    %2349 = vmatprep.subr.mxu0 0.0
    %2350 = vmatpush1.msra.mxu0 0.0
    %2351 = vmatprep.subr.mxu0 0.0
    %2352 = vmatpush1.msra.mxu0 0.0
    %2353 = vmatprep.subr.mxu0 0.0
    %2354 = vmatpush1.msra.mxu0 0.0
    %2355 = vmatprep.subr.mxu0 0.0
    %2356 = vmatpush1.msra.mxu0 0.0
    %2357 = vmatprep.mubr.f32.mxu0 0.0
    %2358 = vmatmul.mubr.f32.gmra.mrb[0].mxu0 %v2121
    %v2359 = vpop.f32.mrb[0].mxu0
    %v2360 = vadd.f32 0.0, %v2359
    %v2361 = vpop.f32.mrb[0].mxu0
    %2362 = vdwg.mxu0
    %v2364 = vrot.slane %v2360, 2
    %v2366 = vadd.f32 %v254, %v2364
    %v2367 = vxor.u32 %v2366, 2147483648
    %v2368 = vmul.f32 %v2367, 1.442695
    %v2369 = vpow.pop %v2368
    %v2370 = vadd.f32 %v2369, 1.0
    %v2371 = vrcp.pop %v2370
    %v2372 = vmul.f32 1.0, %v2371
    %v2373 = vtanh.pop %v2366
    %v2375 = vrot.slane %v2110, 6
    %v2377 = vmul.f32 %v2372, %v2375
    %2379 = vrot.lane.b32.xlu0 %v2373, 64
    %v2380 = vpop.permute.xlu0 %2379
    %v2382 = vmul.f32 %v2372, %v2380
    %2384 = vrot.lane.b32.xlu0 %v2382, 32
    %v2385 = vpop.permute.xlu0 %2384
    %v2387 = vadd.f32 %v2377, %v2385
    %v2388 = vtanh.pop %v2387
    %2390 = vrot.lane.b32.xlu0 %v2388, 64
    %v2391 = vpop.permute.xlu0 %2390
    %v2393 = vmul.f32 %v2372, %v2391
    %v2395 = vrot.slane %v2393, 6
    %2396 = vrot.lane.b32.xlu0 %v2395, 32
    %v2397 = vpop.permute.xlu0 %2396
    %v2398 = vsel %vm280, %v2397, 0
    %2400 = vmatprep.subr.mxu0 0.0
    %2401 = vmatpush1.msra.mxu0 %v259
    %2402 = vmatprep.subr.mxu0 0.0
    %2403 = vmatpush1.msra.mxu0 %v260
    %2404 = vmatprep.subr.mxu0 0.0
    %2405 = vmatpush1.msra.mxu0 %v261
    %2406 = vmatprep.subr.mxu0 0.0
    %2407 = vmatpush1.msra.mxu0 %v262
    %2408 = vmatprep.subr.mxu0 0.0
    %2409 = vmatpush1.msra.mxu0 0.0
    %2410 = vmatprep.subr.mxu0 0.0
    %2411 = vmatpush1.msra.mxu0 0.0
    %2412 = vmatprep.subr.mxu0 0.0
    %2413 = vmatpush1.msra.mxu0 0.0
    %2414 = vmatprep.subr.mxu0 0.0
    %2415 = vmatpush1.msra.mxu0 0.0
    %2416 = vmatprep.subr.mxu0 0.0
    %2417 = vmatpush1.msra.mxu0 0.0
    %2418 = vmatprep.subr.mxu0 0.0
    %2419 = vmatpush1.msra.mxu0 0.0
    %2420 = vmatprep.subr.mxu0 0.0
    %2421 = vmatpush1.msra.mxu0 0.0
    %2422 = vmatprep.subr.mxu0 0.0
    %2423 = vmatpush1.msra.mxu0 0.0
    %2424 = vmatprep.subr.mxu0 0.0
    %2425 = vmatpush1.msra.mxu0 0.0
    %2426 = vmatprep.subr.mxu0 0.0
    %2427 = vmatpush1.msra.mxu0 0.0
    %2428 = vmatprep.subr.mxu0 0.0
    %2429 = vmatpush1.msra.mxu0 0.0
    %2430 = vmatprep.subr.mxu0 0.0
    %2431 = vmatpush1.msra.mxu0 0.0
    %2432 = vmatprep.subr.mxu0 0.0
    %2433 = vmatpush1.msra.mxu0 0.0
    %2434 = vmatprep.subr.mxu0 0.0
    %2435 = vmatpush1.msra.mxu0 0.0
    %2436 = vmatprep.subr.mxu0 0.0
    %2437 = vmatpush1.msra.mxu0 0.0
    %2438 = vmatprep.subr.mxu0 0.0
    %2439 = vmatpush1.msra.mxu0 0.0
    %2440 = vmatprep.subr.mxu0 0.0
    %2441 = vmatpush1.msra.mxu0 0.0
    %2442 = vmatprep.subr.mxu0 0.0
    %2443 = vmatpush1.msra.mxu0 0.0
    %2444 = vmatprep.subr.mxu0 0.0
    %2445 = vmatpush1.msra.mxu0 0.0
    %2446 = vmatprep.subr.mxu0 0.0
    %2447 = vmatpush1.msra.mxu0 0.0
    %2448 = vmatprep.subr.mxu0 0.0
    %2449 = vmatpush1.msra.mxu0 0.0
    %2450 = vmatprep.subr.mxu0 0.0
    %2451 = vmatpush1.msra.mxu0 0.0
    %2452 = vmatprep.subr.mxu0 0.0
    %2453 = vmatpush1.msra.mxu0 0.0
    %2454 = vmatprep.subr.mxu0 0.0
    %2455 = vmatpush1.msra.mxu0 0.0
    %2456 = vmatprep.subr.mxu0 0.0
    %2457 = vmatpush1.msra.mxu0 0.0
    %2458 = vmatprep.subr.mxu0 0.0
    %2459 = vmatpush1.msra.mxu0 0.0
    %2460 = vmatprep.subr.mxu0 0.0
    %2461 = vmatpush1.msra.mxu0 0.0
    %2462 = vmatprep.subr.mxu0 0.0
    %2463 = vmatpush1.msra.mxu0 0.0
    %2464 = vmatprep.mubr.f32.mxu0 0.0
    %2465 = vmatmul.mubr.f32.gmra.mrb[0].mxu0 %v2398
    %v2466 = vpop.f32.mrb[0].mxu0
    %v2467 = vadd.f32 0.0, %v2466
    %v2468 = vpop.f32.mrb[0].mxu0
    %2469 = vdwg.mxu0
    %v2470 = vadd.f32 %v2290, %v2467
    %v2471 = vxor.u32 %v2470, 2147483648
    %v2472 = vmul.f32 %v2471, 1.442695
    %v2473 = vpow.pop %v2472
    %v2474 = vadd.f32 %v2473, 1.0
    %v2475 = vrcp.pop %v2474
    %v2476 = vmul.f32 1.0, %v2475
    %v2477 = vtanh.pop %v2470
    %v2478 = vmul.f32 %v2476, %v2211
    %2480 = vrot.lane.b32.xlu0 %v2477, 64
    %v2481 = vpop.permute.xlu0 %2480
    %v2483 = vmul.f32 %v2476, %v2481
    %2485 = vrot.lane.b32.xlu0 %v2483, 32
    %v2486 = vpop.permute.xlu0 %2485
    %v2488 = vadd.f32 %v2478, %v2486
    %v2489 = vtanh.pop %v2488
    %2491 = vrot.lane.b32.xlu0 %v2489, 64
    %v2492 = vpop.permute.xlu0 %2491
    %v2494 = vmul.f32 %v2476, %v2492
    %v2495 = vrot.slane %v836, 6
    %v2497 = vrot.slane %v1113, 4
    %v2499 = vrot.slane %v1390, 2
    %v2501 = vrot.slane %v1940, 6
    %v2503 = vrot.slane %v2217, 4
    %v2506 = vrot.slane %v2494, 2
    %vm2508 = vcmask 1041408
    %v2509 = vsel %vm2508, %v559, %v2495
    %vm2510 = vcmask 1043456
    %v2511 = vsel %vm2510, %v2509, %v2497
    %vm2512 = vcmask 1045504
    %v2513 = vsel %vm2512, %v2511, %v2499
    %v2514 = vsel %vm2508, %v1663, %v2501
    %v2515 = vsel %vm2510, %v2514, %v2503
    %v2516 = vsel %vm2512, %v2515, %v2506
    %v2517 = vld [vmem:[%s11] sm:$0xff]
    %v2518 = vld [vmem:[%s11 + $0x8] sm:$0xff]
    %v2519 = vld [vmem:[%s11 + $0x10] sm:$0xff]
    %v2520 = vld [vmem:[%s11 + $0x18] sm:$0xff]
    %v2521 = vld [vmem:[%s12] sm:$0x1]
    %v2523 = vlaneseq
    %v2524 = vshrl.u32 %v2523, 7
    %v2525 = vsub.s32 0, %v2524
    %v2526 = vrot.slane %v2521, %v2525
    %2530 = vrot.lane.b32.xlu0 %v2513, 32
    %v2531 = vpop.permute.xlu0 %2530
    %2532 = vrot.lane.b32.xlu0 %v2516, 32
    %v2533 = vpop.permute.xlu0 %2532
    %v2534 = vsel %vm280, %v2531, 0
    %v2536 = vsel %vm280, %v2533, 0
    %2538 = vmatprep.subr.mxu0 0.0
    %2539 = vmatpush1.msra.mxu0 %v2517
    %2540 = vmatprep.subr.mxu0 0.0
    %2541 = vmatpush1.msra.mxu0 %v2518
    %2542 = vmatprep.subr.mxu0 0.0
    %2543 = vmatpush1.msra.mxu0 %v2519
    %2544 = vmatprep.subr.mxu0 0.0
    %2545 = vmatpush1.msra.mxu0 %v2520
    %2546 = vmatprep.subr.mxu0 0.0
    %2547 = vmatpush1.msra.mxu0 0.0
    %2548 = vmatprep.subr.mxu0 0.0
    %2549 = vmatpush1.msra.mxu0 0.0
    %2550 = vmatprep.subr.mxu0 0.0
    %2551 = vmatpush1.msra.mxu0 0.0
    %2552 = vmatprep.subr.mxu0 0.0
    %2553 = vmatpush1.msra.mxu0 0.0
    %2554 = vmatprep.subr.mxu0 0.0
    %2555 = vmatpush1.msra.mxu0 0.0
    %2556 = vmatprep.subr.mxu0 0.0
    %2557 = vmatpush1.msra.mxu0 0.0
    %2558 = vmatprep.subr.mxu0 0.0
    %2559 = vmatpush1.msra.mxu0 0.0
    %2560 = vmatprep.subr.mxu0 0.0
    %2561 = vmatpush1.msra.mxu0 0.0
    %2562 = vmatprep.subr.mxu0 0.0
    %2563 = vmatpush1.msra.mxu0 0.0
    %2564 = vmatprep.subr.mxu0 0.0
    %2565 = vmatpush1.msra.mxu0 0.0
    %2566 = vmatprep.subr.mxu0 0.0
    %2567 = vmatpush1.msra.mxu0 0.0
    %2568 = vmatprep.subr.mxu0 0.0
    %2569 = vmatpush1.msra.mxu0 0.0
    %2570 = vmatprep.subr.mxu0 0.0
    %2571 = vmatpush1.msra.mxu0 0.0
    %2572 = vmatprep.subr.mxu0 0.0
    %2573 = vmatpush1.msra.mxu0 0.0
    %2574 = vmatprep.subr.mxu0 0.0
    %2575 = vmatpush1.msra.mxu0 0.0
    %2576 = vmatprep.subr.mxu0 0.0
    %2577 = vmatpush1.msra.mxu0 0.0
    %2578 = vmatprep.subr.mxu0 0.0
    %2579 = vmatpush1.msra.mxu0 0.0
    %2580 = vmatprep.subr.mxu0 0.0
    %2581 = vmatpush1.msra.mxu0 0.0
    %2582 = vmatprep.subr.mxu0 0.0
    %2583 = vmatpush1.msra.mxu0 0.0
    %2584 = vmatprep.subr.mxu0 0.0
    %2585 = vmatpush1.msra.mxu0 0.0
    %2586 = vmatprep.subr.mxu0 0.0
    %2587 = vmatpush1.msra.mxu0 0.0
    %2588 = vmatprep.subr.mxu0 0.0
    %2589 = vmatpush1.msra.mxu0 0.0
    %2590 = vmatprep.subr.mxu0 0.0
    %2591 = vmatpush1.msra.mxu0 0.0
    %2592 = vmatprep.subr.mxu0 0.0
    %2593 = vmatpush1.msra.mxu0 0.0
    %2594 = vmatprep.subr.mxu0 0.0
    %2595 = vmatpush1.msra.mxu0 0.0
    %2596 = vmatprep.subr.mxu0 0.0
    %2597 = vmatpush1.msra.mxu0 0.0
    %2598 = vmatprep.subr.mxu0 0.0
    %2599 = vmatpush1.msra.mxu0 0.0
    %2600 = vmatprep.subr.mxu0 0.0
    %2601 = vmatpush1.msra.mxu0 0.0
    %2602 = vmatprep.mubr.f32.mxu0 0.0
    %2603 = vmatmul.mubr.f32.gmra.mrb[0].mxu0 %v2534
    %v2604 = vpop.f32.mrb[0].mxu0
    %v2605 = vadd.f32 %v2526, %v2604
    %v2606 = vpop.f32.mrb[0].mxu0
    %2607 = vmatprep.mubr.f32.mxu0 0.0
    %2608 = vmatmul.mubr.f32.gmra.mrb[0].mxu0 %v2536
    %v2609 = vpop.f32.mrb[0].mxu0
    %v2610 = vadd.f32 %v2526, %v2609
    %v2611 = vpop.f32.mrb[0].mxu0
    %2612 = vdwg.mxu0
    %2613 = vst.msk [vmem:[%s13] sm:$0xff] %vm83, %v2605
    %2614 = vst.msk [vmem:[%s13 + $0x8] sm:$0xff] %vm83, %v2610
    %2615 = vrot.lane.b32.xlu0 %v2393, 32
    %v2616 = vpop.permute.xlu0 %2615
    %vm2618 = vcmask 261126
    %2619 = vst.msk [vmem:[#allocation7 - $0x6] sm:$0xc0] %vm2618, %v2616
    %2620 = vrot.lane.b32.xlu0 %v2494, 32
    %v2621 = vpop.permute.xlu0 %2620
    %s2623 = scalar_lea.vmem [#allocation7], 2
    %vm2624 = vcmask 254976
    %2625 = vst.msk [vmem:[%s2623] sm:$0x3] %vm2624, %v2621
    %2627 = vrot.lane.b32.xlu0 %v2387, 96
    %v2628 = vpop.permute.xlu0 %2627
    %2630 = vst.msk [vmem:[#allocation8 - $0x6] sm:$0xc0] %vm2618, %v2628
    %2632 = vrot.lane.b32.xlu0 %v2488, 96
    %v2633 = vpop.permute.xlu0 %2632
    %s2635 = scalar_lea.vmem [#allocation8], 2
    %2636 = vst.msk [vmem:[%s2635] sm:$0x3] %vm2624, %v2633
    // Predicated region
    $region62: #{decoder_forward.1} parent=1 // pred_check
      _
    $region63: #{decoder_forward.1} parent=1 // pred_check_branch
      %2638 = sbr.rel (0) target = $region65
    $region64: #{decoder_forward.1} parent=1 // pred_region
      _
    $region65: #{decoder_forward.1} parent=1 // pred_fallthru
      _
    // Predicated region
    $region66: #{decoder_forward.1} parent=1 // pred_check
      _
    $region67: #{decoder_forward.1} parent=1 // pred_check_branch
      %2640 = sbr.rel (0) target = $region69
    $region68: #{decoder_forward.1} parent=1 // pred_region
      %s2642 = ssub.s32 64, 64
      %2643 = vsyncadd [#allocation4], %s2642
      %s2644 = sshll.u32 [#allocation7], 4
      %s2645 = int_to_ptr.vmem [resolvable:$true] %s2644
      %2650 = dma.vmem_to_hbm [thread:$0]  %s2645, 64, %s14, [#allocation4], 32, 32, 2
    $region69: #{decoder_forward.1} parent=1 // pred_fallthru
      _
    // Predicated region
    $region70: #{decoder_forward.1} parent=1 // pred_check
      _
    $region71: #{decoder_forward.1} parent=1 // pred_check_branch
      %2652 = sbr.rel (0) target = $region73
    $region72: #{decoder_forward.1} parent=1 // pred_region
      %s2654 = ssub.s32 64, 64
      %2655 = vsyncadd [#allocation9], %s2654
      %s2656 = sshll.u32 [#allocation8], 4
      %s2657 = int_to_ptr.vmem [resolvable:$true] %s2656
      %2662 = dma.vmem_to_hbm [thread:$0]  %s2657, 64, %s15, [#allocation9], 32, 32, 2
    $region73: #{decoder_forward.1} parent=1 // pred_fallthru
      _
    // Predicated region
    $region74: #{decoder_forward.1} parent=1 // pred_check
      _
    $region75: #{decoder_forward.1} parent=1 // pred_check_branch
      %2664 = sbr.rel (0) target = $region77
    $region76: #{decoder_forward.1} parent=1 // pred_region
      _
    $region77: #{decoder_forward.1} parent=1 // pred_fallthru
      _
    // Predicated region
    $region78: #{decoder_forward.1} parent=1 // pred_check
      _
    $region79: #{decoder_forward.1} parent=1 // pred_check_branch
      %2666 = sbr.rel (0) target = $region81
    $region80: #{decoder_forward.1} parent=1 // pred_region
      %2667 = dma.done [#allocation4], 64
    $region81: #{decoder_forward.1} parent=1 // pred_fallthru
      _
    // Predicated region
    $region82: #{decoder_forward.1} parent=1 // pred_check
      _
    $region83: #{decoder_forward.1} parent=1 // pred_check_branch
      %2669 = sbr.rel (0) target = $region85
    $region84: #{decoder_forward.1} parent=1 // pred_region
      %2670 = dma.done [#allocation9], 64
    $region85: #{decoder_forward.1} parent=1 // pred_fallthru
      _
    %2671 = vsyncpa [#allocation3], 1
    %2672 = vsyncpa [#allocation6], 1
    %2673 = vsyncpa [#allocation4], 1
    %2674 = vsyncpa [#allocation9], 1

</llo_original>
